<compile_context>
chip_gen: v6e
topology: v6e:2x2x1
jax: 0.10.0
libtpu: 0.0.40
codegen_flags: <defaults>
</compile_context>

<pallas_src>
import numpy as np

import jax
import jax.numpy as jnp
from jax.experimental import pallas as pl
from jax.experimental.pallas import tpu as pltpu


# --------------------------- gather-matrix builder -------------------------- #

def _gather_mats(h, w):
    """(9, Ho*Wo, H*W) 0/1 matrices implementing the 3x3 / stride-2 / pad-1 tap
    gather on a raster-flattened (H*W, C) activation.  Rows whose tap falls in
    the zero-padding region are all-zero (reproduces padding exactly).  The
    values are exactly representable in bfloat16."""
    ho, wo = h // 2, w // 2
    g = np.zeros((9, ho * wo, h * w), np.float32)
    for dh in range(3):
        for dw in range(3):
            t = dh * 3 + dw
            for i in range(ho):
                for j in range(wo):
                    r, c = 2 * i + dh - 1, 2 * j + dw - 1
                    if 0 <= r < h and 0 <= c < w:
                        g[t, i * wo + j, r * w + c] = 1.0
    return g


# ------------------------------ fused kernel -------------------------------- #

def _make_kernel(blk_meta, nb):
    """blk_meta: static list of (fused: bool, howo: int) per conv block."""
    n_blocks = len(blk_meta)

    def kernel(x_ref, *refs):
        # refs = [G, W_blockdiag, bias, scale, shift] * n_blocks + [fcw, fcb, sel] + [out]
        *rest, fcw_ref, fcb_ref, sel_ref, out_ref = refs
        blk_refs = [rest[5 * i: 5 * i + 5] for i in range(n_blocks)]

        # Input group arrives in native (NB*Cin, H*W) layout; do the tiny
        # transpose in-kernel (XLU) -> channel-last (H*W, NB*Cin), then bf16.
        a_bf = jnp.transpose(x_ref[0]).astype(jnp.bfloat16)
        a_f32 = None

        for (g_ref, w_ref, b_ref, sc_ref, sh_ref), (fused, howo) in zip(blk_refs, blk_meta):
            if fused:
                # One big gather matmul for all 9 taps (G rows are exact 0/1,
                # so the f32 accumulate + bf16 cast is exact), then 9 aligned
                # HoWo-row slabs through their per-tap block-diagonal weights.
                x_all = jnp.dot(g_ref[...], a_bf,
                                preferred_element_type=jnp.float32).astype(jnp.bfloat16)
                acc = None
                for t in range(9):
                    slab = x_all[t * howo:(t + 1) * howo, :]
                    term = jnp.dot(slab, w_ref[t], preferred_element_type=jnp.float32)
                    acc = term if acc is None else acc + term
            else:
                acc = None
                for t in range(9):
                    xt = jnp.dot(g_ref[t], a_bf,
                                 preferred_element_type=jnp.float32).astype(jnp.bfloat16)
                    term = jnp.dot(xt, w_ref[t], preferred_element_type=jnp.float32)
                    acc = term if acc is None else acc + term

            acc = acc + b_ref[...]                      # conv bias (f32)
            acc = jnp.where(acc > 0, acc, 0.2 * acc)    # LeakyReLU(0.2)
            # Dropout2d(0.25): identity in eval mode.
            # TODO(synk): training-mode channel dropout not implemented.
            a_f32 = acc * sc_ref[...] + sh_ref[...]     # eval BatchNorm affine (identity blk 1)
            a_bf = a_f32.astype(jnp.bfloat16)

        # FC head + sigmoid, batched across the group on the lane dim.
        prod = a_f32 * fcw_ref[...]                     # (ds*ds, NB*128) f32
        col = jnp.sum(prod, axis=0, keepdims=True)      # (1, NB*128)
        z = jnp.dot(col, sel_ref[...], preferred_element_type=jnp.float32)  # (1, NB)
        z = z + fcb_ref[...]
        out_ref[...] = jax.nn.sigmoid(z).reshape(1, 1, nb)

    return kernel


# ------------------------------ forward pass -------------------------------- #

@jax.jit
def discriminator_forward(img_nchw, params):
    n, c, h, w = img_nchw.shape

    # Group size folded onto the lane dim (batch beyond the group goes on the grid).
    if n <= 8:
        nb = n
    else:
        nb = next(d for d in (8, 4, 2, 1) if n % d == 0)
    num_groups = n // nb

    # Native layout: pure (free) reshape — no NCHW->NHWC transpose launch.
    x = img_nchw.reshape(num_groups, nb * c, h * w)

    inputs = [x]
    blk_meta = []
    hh, ww = h, w
    eye = jnp.eye(nb, dtype=jnp.float32)
    for blk in params["blocks"]:
        cin, cout = blk["w"].shape[2], blk["w"].shape[3]
        ho, wo = hh // 2, ww // 2
        howo = ho * wo
        fused = (howo % 8) == 0

        g_np = _gather_mats(hh, ww)                      # trace-time constant
        g_arr = g_np.reshape(9 * howo, hh * ww) if fused else g_np
        g_in = jnp.asarray(g_arr, jnp.bfloat16)          # exact in bf16

        w_tap = blk["w"].reshape(9, cin, cout)           # HWIO -> (tap, Cin, Cout)
        # Block-diagonal weights over the group -> whole group in one matmul.
        w_bd = jnp.einsum("tio,nm->tnimo", w_tap, eye).reshape(9, nb * cin, nb * cout)
        w_bd = w_bd.astype(jnp.bfloat16)

        b_t = jnp.tile(blk["b"].reshape(1, cout), (1, nb)).astype(jnp.float32)
        sc_t = jnp.tile(blk["scale"].reshape(1, cout), (1, nb)).astype(jnp.float32)
        sh_t = jnp.tile(blk["shift"].reshape(1, cout), (1, nb)).astype(jnp.float32)

        inputs += [g_in, w_bd, b_t, sc_t, sh_t]
        blk_meta.append((fused, howo))
        hh, ww = ho, wo

    ds = hh                                              # ds_size = img_size // 16
    c_last = params["blocks"][-1]["w"].shape[-1]
    # PyTorch flattens NCHW (c-major); our per-sample feature is (h*w, c): permute fc_w.
    fcw = jnp.transpose(params["fc_w"].reshape(c_last, ds, ds), (1, 2, 0)).reshape(ds * ds, c_last)
    fcw_t = jnp.tile(fcw, (1, nb)).astype(jnp.float32)
    fcb = params["fc_b"].reshape(1, 1).astype(jnp.float32)
    # Per-sample segment-sum selector for the FC reduction: (NB*c_last, NB).
    sel = jnp.repeat(jnp.eye(nb, dtype=jnp.float32), c_last, axis=0)
    inputs += [fcw_t, fcb, sel]

    def _const_spec(a):  # whole array, broadcast across the batch grid
        return pl.BlockSpec(a.shape, lambda g, _r=a.ndim: (0,) * _r)

    in_specs = [pl.BlockSpec((1, nb * c, h * w), lambda g: (g, 0, 0))]
    in_specs += [_const_spec(a) for a in inputs[1:]]
    out_spec = pl.BlockSpec((1, 1, nb), lambda g: (g, 0, 0))

    out = pl.pallas_call(
        _make_kernel(blk_meta, nb),
        out_shape=jax.ShapeDtypeStruct((num_groups, 1, nb), jnp.float32),
        grid=(num_groups,),
        in_specs=in_specs,
        out_specs=out_spec,
        compiler_params=pltpu.CompilerParams(dimension_semantics=("parallel",)),
    )(*inputs)
    return out.reshape(n, 1)


# ------------------------------ parameters ---------------------------------- #

def init_params(key, channels=4, img_size=16):
    """Deterministic synthetic parameters mirroring the PyTorch module's shapes."""
    ds_size = img_size // 2 ** 4
    chans = [channels, 16, 32, 64, 128]
    params = {"blocks": []}
    for i in range(4):
        cin, cout = chans[i], chans[i + 1]
        key, kw, kb, kg, kbe, km, kv = jax.random.split(key, 7)
        wgt = 0.02 * jax.random.normal(kw, (3, 3, cin, cout), jnp.float32)   # HWIO
        b = 0.02 * jax.random.normal(kb, (cout,), jnp.float32)
        if i == 0:                                     # block 1: bn=False -> identity affine
            scale = jnp.ones((cout,), jnp.float32)
            shift = jnp.zeros((cout,), jnp.float32)
        else:                                          # BatchNorm2d(cout, eps=0.8), eval mode
            gamma = 1.0 + 0.1 * jax.random.normal(kg, (cout,), jnp.float32)
            beta = 0.05 * jax.random.normal(kbe, (cout,), jnp.float32)
            r_mean = 0.05 * jax.random.normal(km, (cout,), jnp.float32)
            r_var = 1.0 + 0.1 * jax.random.uniform(kv, (cout,), jnp.float32)
            eps = 0.8
            scale = gamma / jnp.sqrt(r_var + eps)
            shift = beta - r_mean * scale
        params["blocks"].append(dict(w=wgt, b=b, scale=scale, shift=shift))
    key, kw, kb = jax.random.split(key, 3)
    in_feat = 128 * ds_size ** 2
    params["fc_w"] = 0.02 * jax.random.normal(kw, (in_feat, 1), jnp.float32)  # (in, out)
    params["fc_b"] = 0.02 * jax.random.normal(kb, (1,), jnp.float32)
    return params


# -------------------------- pure-JAX reference ------------------------------- #

def discriminator_reference(img_nchw, params):
    x = jnp.transpose(img_nchw, (0, 2, 3, 1))
    for blk in params["blocks"]:
        y = jax.lax.conv_general_dilated(
            x, blk["w"], window_strides=(2, 2), padding=((1, 1), (1, 1)),
            dimension_numbers=("NHWC", "HWIO", "NHWC"))
        y = y + blk["b"]
        y = jnp.where(y > 0, y, 0.2 * y)
        x = y * blk["scale"] + blk["shift"]
    x_nchw = jnp.transpose(x, (0, 3, 1, 2))
    flat = x_nchw.reshape(x_nchw.shape[0], -1)
    z = flat @ params["fc_w"] + params["fc_b"]
    return jax.nn.sigmoid(z)


if __name__ == "__main__":
    CHANNELS, IMG_SIZE, BATCH = 4, 16, 2

    key = jax.random.PRNGKey(0)
    k_params, k_img = jax.random.split(key)
    params = init_params(k_params, channels=CHANNELS, img_size=IMG_SIZE)
    img = jax.random.normal(k_img, (BATCH, CHANNELS, IMG_SIZE, IMG_SIZE), jnp.float32)

    validity = discriminator_forward(img, params)
    validity = jax.block_until_ready(validity)

    ref = discriminator_reference(img, params)
    assert validity.shape == (BATCH, 1), validity.shape
    # bf16 MXU operands (f32 accumulate): tolerance loosened vs the fp32 reference.
    assert jnp.allclose(validity, ref, rtol=5e-2, atol=1e-2), (validity, ref)

    print("KERNEL_OK")
</pallas_src>

<mosaic_0001>
module attributes {stable_mosaic.version = 11 : i64} {
  func.func @kernel(%arg0: i32, %arg1: memref<1x8x256xf32, #tpu.memory_space<vmem>>, %arg2: memref<576x256xbf16, #tpu.memory_space<vmem>>, %arg3: memref<9x8x32xbf16, #tpu.memory_space<vmem>>, %arg4: memref<1x32xf32, #tpu.memory_space<vmem>>, %arg5: memref<1x32xf32, #tpu.memory_space<vmem>>, %arg6: memref<1x32xf32, #tpu.memory_space<vmem>>, %arg7: memref<144x64xbf16, #tpu.memory_space<vmem>>, %arg8: memref<9x32x64xbf16, #tpu.memory_space<vmem>>, %arg9: memref<1x64xf32, #tpu.memory_space<vmem>>, %arg10: memref<1x64xf32, #tpu.memory_space<vmem>>, %arg11: memref<1x64xf32, #tpu.memory_space<vmem>>, %arg12: memref<9x4x16xbf16, #tpu.memory_space<vmem>>, %arg13: memref<9x64x128xbf16, #tpu.memory_space<vmem>>, %arg14: memref<1x128xf32, #tpu.memory_space<vmem>>, %arg15: memref<1x128xf32, #tpu.memory_space<vmem>>, %arg16: memref<1x128xf32, #tpu.memory_space<vmem>>, %arg17: memref<9x1x4xbf16, #tpu.memory_space<vmem>>, %arg18: memref<9x128x256xbf16, #tpu.memory_space<vmem>>, %arg19: memref<1x256xf32, #tpu.memory_space<vmem>>, %arg20: memref<1x256xf32, #tpu.memory_space<vmem>>, %arg21: memref<1x256xf32, #tpu.memory_space<vmem>>, %arg22: memref<1x256xf32, #tpu.memory_space<vmem>>, %arg23: memref<1x1xf32, #tpu.memory_space<vmem>>, %arg24: memref<256x2xf32, #tpu.memory_space<vmem>>, %arg25: memref<1x1x2xf32, #tpu.memory_space<vmem>>) attributes {dimension_semantics = [#tpu.dimension_semantics<parallel>], iteration_bounds = array<i64: 1>, scalar_prefetch = 0 : i64, scratch_operands = 0 : i64, tpu.core_type = #tpu.core_type<tc>, window_params = [{transform_indices = @transform_0, window_bounds = array<i64: 1, 8, 256>}, {pipeline_mode = #tpu.pipeline_mode<synchronous>, transform_indices = @transform_1, window_bounds = array<i64: 576, 256>}, {pipeline_mode = #tpu.pipeline_mode<synchronous>, transform_indices = @transform_2, window_bounds = array<i64: 9, 8, 32>}, {pipeline_mode = #tpu.pipeline_mode<synchronous>, transform_indices = @transform_3, window_bounds = array<i64: 1, 32>}, {pipeline_mode = #tpu.pipeline_mode<synchronous>, transform_indices = @transform_4, window_bounds = array<i64: 1, 32>}, {pipeline_mode = #tpu.pipeline_mode<synchronous>, transform_indices = @transform_5, window_bounds = array<i64: 1, 32>}, {pipeline_mode = #tpu.pipeline_mode<synchronous>, transform_indices = @transform_6, window_bounds = array<i64: 144, 64>}, {pipeline_mode = #tpu.pipeline_mode<synchronous>, transform_indices = @transform_7, window_bounds = array<i64: 9, 32, 64>}, {pipeline_mode = #tpu.pipeline_mode<synchronous>, transform_indices = @transform_8, window_bounds = array<i64: 1, 64>}, {pipeline_mode = #tpu.pipeline_mode<synchronous>, transform_indices = @transform_9, window_bounds = array<i64: 1, 64>}, {pipeline_mode = #tpu.pipeline_mode<synchronous>, transform_indices = @transform_10, window_bounds = array<i64: 1, 64>}, {pipeline_mode = #tpu.pipeline_mode<synchronous>, transform_indices = @transform_11, window_bounds = array<i64: 9, 4, 16>}, {pipeline_mode = #tpu.pipeline_mode<synchronous>, transform_indices = @transform_12, window_bounds = array<i64: 9, 64, 128>}, {pipeline_mode = #tpu.pipeline_mode<synchronous>, transform_indices = @transform_13, window_bounds = array<i64: 1, 128>}, {pipeline_mode = #tpu.pipeline_mode<synchronous>, transform_indices = @transform_14, window_bounds = array<i64: 1, 128>}, {pipeline_mode = #tpu.pipeline_mode<synchronous>, transform_indices = @transform_15, window_bounds = array<i64: 1, 128>}, {pipeline_mode = #tpu.pipeline_mode<synchronous>, transform_indices = @transform_16, window_bounds = array<i64: 9, 1, 4>}, {pipeline_mode = #tpu.pipeline_mode<synchronous>, transform_indices = @transform_17, window_bounds = array<i64: 9, 128, 256>}, {pipeline_mode = #tpu.pipeline_mode<synchronous>, transform_indices = @transform_18, window_bounds = array<i64: 1, 256>}, {pipeline_mode = #tpu.pipeline_mode<synchronous>, transform_indices = @transform_19, window_bounds = array<i64: 1, 256>}, {pipeline_mode = #tpu.pipeline_mode<synchronous>, transform_indices = @transform_20, window_bounds = array<i64: 1, 256>}, {pipeline_mode = #tpu.pipeline_mode<synchronous>, transform_indices = @transform_21, window_bounds = array<i64: 1, 256>}, {pipeline_mode = #tpu.pipeline_mode<synchronous>, transform_indices = @transform_22, window_bounds = array<i64: 1, 1>}, {pipeline_mode = #tpu.pipeline_mode<synchronous>, transform_indices = @transform_23, window_bounds = array<i64: 256, 2>}, {transform_indices = @transform_24, window_bounds = array<i64: 1, 1, 2>}]} {
    %c0 = arith.constant 0 : index
    %c0_0 = arith.constant 0 : index
    %c0_1 = arith.constant 0 : index
    %0 = vector.load %arg1[%c0, %c0_0, %c0_1] : memref<1x8x256xf32, #tpu.memory_space<vmem>>, vector<1x8x256xf32>
    %1 = vector.shape_cast %0 : vector<1x8x256xf32> to vector<8x256xf32>
    %2 = tpu.transpose %1, [1, 0] : vector<8x256xf32> -> vector<256x8xf32>
    %3 = arith.truncf %2 : vector<256x8xf32> to vector<256x8xbf16>
    %c0_2 = arith.constant 0 : index
    %c0_3 = arith.constant 0 : index
    %4 = vector.load %arg2[%c0_2, %c0_3] : memref<576x256xbf16, #tpu.memory_space<vmem>>, vector<576x256xbf16>
    %cst = arith.constant dense<0.000000e+00> : vector<576x8xf32>
    %5 = tpu.matmul %4, %3, %cst {dimension_numbers = #tpu.dot_dimension_numbers<[1], [0], [0], [1], [0, 0, 1, 1], [], []>} : vector<576x256xbf16>, vector<256x8xbf16>, vector<576x8xf32> -> vector<576x8xf32>
    %6 = arith.truncf %5 : vector<576x8xf32> to vector<576x8xbf16>
    %7 = vector.extract_strided_slice %6 {offsets = [0, 0], sizes = [64, 8], strides = [1, 1]} : vector<576x8xbf16> to vector<64x8xbf16>
    %c0_4 = arith.constant 0 : index
    %c0_5 = arith.constant 0 : index
    %c0_6 = arith.constant 0 : index
    %8 = vector.load %arg3[%c0_4, %c0_5, %c0_6] : memref<9x8x32xbf16, #tpu.memory_space<vmem>>, vector<1x8x32xbf16>
    %9 = vector.shape_cast %8 : vector<1x8x32xbf16> to vector<8x32xbf16>
    %cst_7 = arith.constant dense<0.000000e+00> : vector<64x32xf32>
    %10 = tpu.matmul %7, %9, %cst_7 {dimension_numbers = #tpu.dot_dimension_numbers<[1], [0], [0], [1], [0, 0, 1, 1], [], []>} : vector<64x8xbf16>, vector<8x32xbf16>, vector<64x32xf32> -> vector<64x32xf32>
    %11 = vector.extract_strided_slice %6 {offsets = [64, 0], sizes = [64, 8], strides = [1, 1]} : vector<576x8xbf16> to vector<64x8xbf16>
    %c1 = arith.constant 1 : index
    %c0_8 = arith.constant 0 : index
    %c0_9 = arith.constant 0 : index
    %12 = vector.load %arg3[%c1, %c0_8, %c0_9] : memref<9x8x32xbf16, #tpu.memory_space<vmem>>, vector<1x8x32xbf16>
    %13 = vector.shape_cast %12 : vector<1x8x32xbf16> to vector<8x32xbf16>
    %cst_10 = arith.constant dense<0.000000e+00> : vector<64x32xf32>
    %14 = tpu.matmul %11, %13, %cst_10 {dimension_numbers = #tpu.dot_dimension_numbers<[1], [0], [0], [1], [0, 0, 1, 1], [], []>} : vector<64x8xbf16>, vector<8x32xbf16>, vector<64x32xf32> -> vector<64x32xf32>
    %15 = arith.addf %10, %14 : vector<64x32xf32>
    %16 = vector.extract_strided_slice %6 {offsets = [128, 0], sizes = [64, 8], strides = [1, 1]} : vector<576x8xbf16> to vector<64x8xbf16>
    %c2 = arith.constant 2 : index
    %c0_11 = arith.constant 0 : index
    %c0_12 = arith.constant 0 : index
    %17 = vector.load %arg3[%c2, %c0_11, %c0_12] : memref<9x8x32xbf16, #tpu.memory_space<vmem>>, vector<1x8x32xbf16>
    %18 = vector.shape_cast %17 : vector<1x8x32xbf16> to vector<8x32xbf16>
    %cst_13 = arith.constant dense<0.000000e+00> : vector<64x32xf32>
    %19 = tpu.matmul %16, %18, %cst_13 {dimension_numbers = #tpu.dot_dimension_numbers<[1], [0], [0], [1], [0, 0, 1, 1], [], []>} : vector<64x8xbf16>, vector<8x32xbf16>, vector<64x32xf32> -> vector<64x32xf32>
    %20 = arith.addf %15, %19 : vector<64x32xf32>
    %21 = vector.extract_strided_slice %6 {offsets = [192, 0], sizes = [64, 8], strides = [1, 1]} : vector<576x8xbf16> to vector<64x8xbf16>
    %c3 = arith.constant 3 : index
    %c0_14 = arith.constant 0 : index
    %c0_15 = arith.constant 0 : index
    %22 = vector.load %arg3[%c3, %c0_14, %c0_15] : memref<9x8x32xbf16, #tpu.memory_space<vmem>>, vector<1x8x32xbf16>
    %23 = vector.shape_cast %22 : vector<1x8x32xbf16> to vector<8x32xbf16>
    %cst_16 = arith.constant dense<0.000000e+00> : vector<64x32xf32>
    %24 = tpu.matmul %21, %23, %cst_16 {dimension_numbers = #tpu.dot_dimension_numbers<[1], [0], [0], [1], [0, 0, 1, 1], [], []>} : vector<64x8xbf16>, vector<8x32xbf16>, vector<64x32xf32> -> vector<64x32xf32>
    %25 = arith.addf %20, %24 : vector<64x32xf32>
    %26 = vector.extract_strided_slice %6 {offsets = [256, 0], sizes = [64, 8], strides = [1, 1]} : vector<576x8xbf16> to vector<64x8xbf16>
    %c4 = arith.constant 4 : index
    %c0_17 = arith.constant 0 : index
    %c0_18 = arith.constant 0 : index
    %27 = vector.load %arg3[%c4, %c0_17, %c0_18] : memref<9x8x32xbf16, #tpu.memory_space<vmem>>, vector<1x8x32xbf16>
    %28 = vector.shape_cast %27 : vector<1x8x32xbf16> to vector<8x32xbf16>
    %cst_19 = arith.constant dense<0.000000e+00> : vector<64x32xf32>
    %29 = tpu.matmul %26, %28, %cst_19 {dimension_numbers = #tpu.dot_dimension_numbers<[1], [0], [0], [1], [0, 0, 1, 1], [], []>} : vector<64x8xbf16>, vector<8x32xbf16>, vector<64x32xf32> -> vector<64x32xf32>
    %30 = arith.addf %25, %29 : vector<64x32xf32>
    %31 = vector.extract_strided_slice %6 {offsets = [320, 0], sizes = [64, 8], strides = [1, 1]} : vector<576x8xbf16> to vector<64x8xbf16>
    %c5 = arith.constant 5 : index
    %c0_20 = arith.constant 0 : index
    %c0_21 = arith.constant 0 : index
    %32 = vector.load %arg3[%c5, %c0_20, %c0_21] : memref<9x8x32xbf16, #tpu.memory_space<vmem>>, vector<1x8x32xbf16>
    %33 = vector.shape_cast %32 : vector<1x8x32xbf16> to vector<8x32xbf16>
    %cst_22 = arith.constant dense<0.000000e+00> : vector<64x32xf32>
    %34 = tpu.matmul %31, %33, %cst_22 {dimension_numbers = #tpu.dot_dimension_numbers<[1], [0], [0], [1], [0, 0, 1, 1], [], []>} : vector<64x8xbf16>, vector<8x32xbf16>, vector<64x32xf32> -> vector<64x32xf32>
    %35 = arith.addf %30, %34 : vector<64x32xf32>
    %36 = vector.extract_strided_slice %6 {offsets = [384, 0], sizes = [64, 8], strides = [1, 1]} : vector<576x8xbf16> to vector<64x8xbf16>
    %c6 = arith.constant 6 : index
    %c0_23 = arith.constant 0 : index
    %c0_24 = arith.constant 0 : index
    %37 = vector.load %arg3[%c6, %c0_23, %c0_24] : memref<9x8x32xbf16, #tpu.memory_space<vmem>>, vector<1x8x32xbf16>
    %38 = vector.shape_cast %37 : vector<1x8x32xbf16> to vector<8x32xbf16>
    %cst_25 = arith.constant dense<0.000000e+00> : vector<64x32xf32>
    %39 = tpu.matmul %36, %38, %cst_25 {dimension_numbers = #tpu.dot_dimension_numbers<[1], [0], [0], [1], [0, 0, 1, 1], [], []>} : vector<64x8xbf16>, vector<8x32xbf16>, vector<64x32xf32> -> vector<64x32xf32>
    %40 = arith.addf %35, %39 : vector<64x32xf32>
    %41 = vector.extract_strided_slice %6 {offsets = [448, 0], sizes = [64, 8], strides = [1, 1]} : vector<576x8xbf16> to vector<64x8xbf16>
    %c7 = arith.constant 7 : index
    %c0_26 = arith.constant 0 : index
    %c0_27 = arith.constant 0 : index
    %42 = vector.load %arg3[%c7, %c0_26, %c0_27] : memref<9x8x32xbf16, #tpu.memory_space<vmem>>, vector<1x8x32xbf16>
    %43 = vector.shape_cast %42 : vector<1x8x32xbf16> to vector<8x32xbf16>
    %cst_28 = arith.constant dense<0.000000e+00> : vector<64x32xf32>
    %44 = tpu.matmul %41, %43, %cst_28 {dimension_numbers = #tpu.dot_dimension_numbers<[1], [0], [0], [1], [0, 0, 1, 1], [], []>} : vector<64x8xbf16>, vector<8x32xbf16>, vector<64x32xf32> -> vector<64x32xf32>
    %45 = arith.addf %40, %44 : vector<64x32xf32>
    %46 = vector.extract_strided_slice %6 {offsets = [512, 0], sizes = [64, 8], strides = [1, 1]} : vector<576x8xbf16> to vector<64x8xbf16>
    %c8 = arith.constant 8 : index
    %c0_29 = arith.constant 0 : index
    %c0_30 = arith.constant 0 : index
    %47 = vector.load %arg3[%c8, %c0_29, %c0_30] : memref<9x8x32xbf16, #tpu.memory_space<vmem>>, vector<1x8x32xbf16>
    %48 = vector.shape_cast %47 : vector<1x8x32xbf16> to vector<8x32xbf16>
    %cst_31 = arith.constant dense<0.000000e+00> : vector<64x32xf32>
    %49 = tpu.matmul %46, %48, %cst_31 {dimension_numbers = #tpu.dot_dimension_numbers<[1], [0], [0], [1], [0, 0, 1, 1], [], []>} : vector<64x8xbf16>, vector<8x32xbf16>, vector<64x32xf32> -> vector<64x32xf32>
    %50 = arith.addf %45, %49 : vector<64x32xf32>
    %c0_32 = arith.constant 0 : index
    %c0_33 = arith.constant 0 : index
    %51 = vector.load %arg4[%c0_32, %c0_33] : memref<1x32xf32, #tpu.memory_space<vmem>>, vector<1x32xf32>
    %52 = vector.broadcast %51 : vector<1x32xf32> to vector<64x32xf32>
    %53 = arith.addf %50, %52 : vector<64x32xf32>
    %cst_34 = arith.constant 0.000000e+00 : f32
    %54 = vector.broadcast %cst_34 : f32 to vector<64x32xf32>
    %55 = arith.cmpf ogt, %53, %54 : vector<64x32xf32>
    %cst_35 = arith.constant 2.000000e-01 : f32
    %56 = vector.broadcast %cst_35 : f32 to vector<64x32xf32>
    %57 = arith.mulf %56, %53 : vector<64x32xf32>
    %58 = arith.select %55, %53, %57 : vector<64x32xi1>, vector<64x32xf32>
    %c0_36 = arith.constant 0 : index
    %c0_37 = arith.constant 0 : index
    %59 = vector.load %arg5[%c0_36, %c0_37] : memref<1x32xf32, #tpu.memory_space<vmem>>, vector<1x32xf32>
    %60 = vector.broadcast %59 : vector<1x32xf32> to vector<64x32xf32>
    %61 = arith.mulf %58, %60 : vector<64x32xf32>
    %c0_38 = arith.constant 0 : index
    %c0_39 = arith.constant 0 : index
    %62 = vector.load %arg6[%c0_38, %c0_39] : memref<1x32xf32, #tpu.memory_space<vmem>>, vector<1x32xf32>
    %63 = vector.broadcast %62 : vector<1x32xf32> to vector<64x32xf32>
    %64 = arith.addf %61, %63 : vector<64x32xf32>
    %65 = arith.truncf %64 : vector<64x32xf32> to vector<64x32xbf16>
    %c0_40 = arith.constant 0 : index
    %c0_41 = arith.constant 0 : index
    %66 = vector.load %arg7[%c0_40, %c0_41] : memref<144x64xbf16, #tpu.memory_space<vmem>>, vector<144x64xbf16>
    %cst_42 = arith.constant dense<0.000000e+00> : vector<144x32xf32>
    %67 = tpu.matmul %66, %65, %cst_42 {dimension_numbers = #tpu.dot_dimension_numbers<[1], [0], [0], [1], [0, 0, 1, 1], [], []>} : vector<144x64xbf16>, vector<64x32xbf16>, vector<144x32xf32> -> vector<144x32xf32>
    %68 = arith.truncf %67 : vector<144x32xf32> to vector<144x32xbf16>
    %69 = vector.extract_strided_slice %68 {offsets = [0, 0], sizes = [16, 32], strides = [1, 1]} : vector<144x32xbf16> to vector<16x32xbf16>
    %c0_43 = arith.constant 0 : index
    %c0_44 = arith.constant 0 : index
    %c0_45 = arith.constant 0 : index
    %70 = vector.load %arg8[%c0_43, %c0_44, %c0_45] : memref<9x32x64xbf16, #tpu.memory_space<vmem>>, vector<1x32x64xbf16>
    %71 = vector.shape_cast %70 : vector<1x32x64xbf16> to vector<32x64xbf16>
    %cst_46 = arith.constant dense<0.000000e+00> : vector<16x64xf32>
    %72 = tpu.matmul %69, %71, %cst_46 {dimension_numbers = #tpu.dot_dimension_numbers<[1], [0], [0], [1], [0, 0, 1, 1], [], []>} : vector<16x32xbf16>, vector<32x64xbf16>, vector<16x64xf32> -> vector<16x64xf32>
    %73 = vector.extract_strided_slice %68 {offsets = [16, 0], sizes = [16, 32], strides = [1, 1]} : vector<144x32xbf16> to vector<16x32xbf16>
    %c1_47 = arith.constant 1 : index
    %c0_48 = arith.constant 0 : index
    %c0_49 = arith.constant 0 : index
    %74 = vector.load %arg8[%c1_47, %c0_48, %c0_49] : memref<9x32x64xbf16, #tpu.memory_space<vmem>>, vector<1x32x64xbf16>
    %75 = vector.shape_cast %74 : vector<1x32x64xbf16> to vector<32x64xbf16>
    %cst_50 = arith.constant dense<0.000000e+00> : vector<16x64xf32>
    %76 = tpu.matmul %73, %75, %cst_50 {dimension_numbers = #tpu.dot_dimension_numbers<[1], [0], [0], [1], [0, 0, 1, 1], [], []>} : vector<16x32xbf16>, vector<32x64xbf16>, vector<16x64xf32> -> vector<16x64xf32>
    %77 = arith.addf %72, %76 : vector<16x64xf32>
    %78 = vector.extract_strided_slice %68 {offsets = [32, 0], sizes = [16, 32], strides = [1, 1]} : vector<144x32xbf16> to vector<16x32xbf16>
    %c2_51 = arith.constant 2 : index
    %c0_52 = arith.constant 0 : index
    %c0_53 = arith.constant 0 : index
    %79 = vector.load %arg8[%c2_51, %c0_52, %c0_53] : memref<9x32x64xbf16, #tpu.memory_space<vmem>>, vector<1x32x64xbf16>
    %80 = vector.shape_cast %79 : vector<1x32x64xbf16> to vector<32x64xbf16>
    %cst_54 = arith.constant dense<0.000000e+00> : vector<16x64xf32>
    %81 = tpu.matmul %78, %80, %cst_54 {dimension_numbers = #tpu.dot_dimension_numbers<[1], [0], [0], [1], [0, 0, 1, 1], [], []>} : vector<16x32xbf16>, vector<32x64xbf16>, vector<16x64xf32> -> vector<16x64xf32>
    %82 = arith.addf %77, %81 : vector<16x64xf32>
    %83 = vector.extract_strided_slice %68 {offsets = [48, 0], sizes = [16, 32], strides = [1, 1]} : vector<144x32xbf16> to vector<16x32xbf16>
    %c3_55 = arith.constant 3 : index
    %c0_56 = arith.constant 0 : index
    %c0_57 = arith.constant 0 : index
    %84 = vector.load %arg8[%c3_55, %c0_56, %c0_57] : memref<9x32x64xbf16, #tpu.memory_space<vmem>>, vector<1x32x64xbf16>
    %85 = vector.shape_cast %84 : vector<1x32x64xbf16> to vector<32x64xbf16>
    %cst_58 = arith.constant dense<0.000000e+00> : vector<16x64xf32>
    %86 = tpu.matmul %83, %85, %cst_58 {dimension_numbers = #tpu.dot_dimension_numbers<[1], [0], [0], [1], [0, 0, 1, 1], [], []>} : vector<16x32xbf16>, vector<32x64xbf16>, vector<16x64xf32> -> vector<16x64xf32>
    %87 = arith.addf %82, %86 : vector<16x64xf32>
    %88 = vector.extract_strided_slice %68 {offsets = [64, 0], sizes = [16, 32], strides = [1, 1]} : vector<144x32xbf16> to vector<16x32xbf16>
    %c4_59 = arith.constant 4 : index
    %c0_60 = arith.constant 0 : index
    %c0_61 = arith.constant 0 : index
    %89 = vector.load %arg8[%c4_59, %c0_60, %c0_61] : memref<9x32x64xbf16, #tpu.memory_space<vmem>>, vector<1x32x64xbf16>
    %90 = vector.shape_cast %89 : vector<1x32x64xbf16> to vector<32x64xbf16>
    %cst_62 = arith.constant dense<0.000000e+00> : vector<16x64xf32>
    %91 = tpu.matmul %88, %90, %cst_62 {dimension_numbers = #tpu.dot_dimension_numbers<[1], [0], [0], [1], [0, 0, 1, 1], [], []>} : vector<16x32xbf16>, vector<32x64xbf16>, vector<16x64xf32> -> vector<16x64xf32>
    %92 = arith.addf %87, %91 : vector<16x64xf32>
    %93 = vector.extract_strided_slice %68 {offsets = [80, 0], sizes = [16, 32], strides = [1, 1]} : vector<144x32xbf16> to vector<16x32xbf16>
    %c5_63 = arith.constant 5 : index
    %c0_64 = arith.constant 0 : index
    %c0_65 = arith.constant 0 : index
    %94 = vector.load %arg8[%c5_63, %c0_64, %c0_65] : memref<9x32x64xbf16, #tpu.memory_space<vmem>>, vector<1x32x64xbf16>
    %95 = vector.shape_cast %94 : vector<1x32x64xbf16> to vector<32x64xbf16>
    %cst_66 = arith.constant dense<0.000000e+00> : vector<16x64xf32>
    %96 = tpu.matmul %93, %95, %cst_66 {dimension_numbers = #tpu.dot_dimension_numbers<[1], [0], [0], [1], [0, 0, 1, 1], [], []>} : vector<16x32xbf16>, vector<32x64xbf16>, vector<16x64xf32> -> vector<16x64xf32>
    %97 = arith.addf %92, %96 : vector<16x64xf32>
    %98 = vector.extract_strided_slice %68 {offsets = [96, 0], sizes = [16, 32], strides = [1, 1]} : vector<144x32xbf16> to vector<16x32xbf16>
    %c6_67 = arith.constant 6 : index
    %c0_68 = arith.constant 0 : index
    %c0_69 = arith.constant 0 : index
    %99 = vector.load %arg8[%c6_67, %c0_68, %c0_69] : memref<9x32x64xbf16, #tpu.memory_space<vmem>>, vector<1x32x64xbf16>
    %100 = vector.shape_cast %99 : vector<1x32x64xbf16> to vector<32x64xbf16>
    %cst_70 = arith.constant dense<0.000000e+00> : vector<16x64xf32>
    %101 = tpu.matmul %98, %100, %cst_70 {dimension_numbers = #tpu.dot_dimension_numbers<[1], [0], [0], [1], [0, 0, 1, 1], [], []>} : vector<16x32xbf16>, vector<32x64xbf16>, vector<16x64xf32> -> vector<16x64xf32>
    %102 = arith.addf %97, %101 : vector<16x64xf32>
    %103 = vector.extract_strided_slice %68 {offsets = [112, 0], sizes = [16, 32], strides = [1, 1]} : vector<144x32xbf16> to vector<16x32xbf16>
    %c7_71 = arith.constant 7 : index
    %c0_72 = arith.constant 0 : index
    %c0_73 = arith.constant 0 : index
    %104 = vector.load %arg8[%c7_71, %c0_72, %c0_73] : memref<9x32x64xbf16, #tpu.memory_space<vmem>>, vector<1x32x64xbf16>
    %105 = vector.shape_cast %104 : vector<1x32x64xbf16> to vector<32x64xbf16>
    %cst_74 = arith.constant dense<0.000000e+00> : vector<16x64xf32>
    %106 = tpu.matmul %103, %105, %cst_74 {dimension_numbers = #tpu.dot_dimension_numbers<[1], [0], [0], [1], [0, 0, 1, 1], [], []>} : vector<16x32xbf16>, vector<32x64xbf16>, vector<16x64xf32> -> vector<16x64xf32>
    %107 = arith.addf %102, %106 : vector<16x64xf32>
    %108 = vector.extract_strided_slice %68 {offsets = [128, 0], sizes = [16, 32], strides = [1, 1]} : vector<144x32xbf16> to vector<16x32xbf16>
    %c8_75 = arith.constant 8 : index
    %c0_76 = arith.constant 0 : index
    %c0_77 = arith.constant 0 : index
    %109 = vector.load %arg8[%c8_75, %c0_76, %c0_77] : memref<9x32x64xbf16, #tpu.memory_space<vmem>>, vector<1x32x64xbf16>
    %110 = vector.shape_cast %109 : vector<1x32x64xbf16> to vector<32x64xbf16>
    %cst_78 = arith.constant dense<0.000000e+00> : vector<16x64xf32>
    %111 = tpu.matmul %108, %110, %cst_78 {dimension_numbers = #tpu.dot_dimension_numbers<[1], [0], [0], [1], [0, 0, 1, 1], [], []>} : vector<16x32xbf16>, vector<32x64xbf16>, vector<16x64xf32> -> vector<16x64xf32>
    %112 = arith.addf %107, %111 : vector<16x64xf32>
    %c0_79 = arith.constant 0 : index
    %c0_80 = arith.constant 0 : index
    %113 = vector.load %arg9[%c0_79, %c0_80] : memref<1x64xf32, #tpu.memory_space<vmem>>, vector<1x64xf32>
    %114 = vector.broadcast %113 : vector<1x64xf32> to vector<16x64xf32>
    %115 = arith.addf %112, %114 : vector<16x64xf32>
    %cst_81 = arith.constant 0.000000e+00 : f32
    %116 = vector.broadcast %cst_81 : f32 to vector<16x64xf32>
    %117 = arith.cmpf ogt, %115, %116 : vector<16x64xf32>
    %cst_82 = arith.constant 2.000000e-01 : f32
    %118 = vector.broadcast %cst_82 : f32 to vector<16x64xf32>
    %119 = arith.mulf %118, %115 : vector<16x64xf32>
    %120 = arith.select %117, %115, %119 : vector<16x64xi1>, vector<16x64xf32>
    %c0_83 = arith.constant 0 : index
    %c0_84 = arith.constant 0 : index
    %121 = vector.load %arg10[%c0_83, %c0_84] : memref<1x64xf32, #tpu.memory_space<vmem>>, vector<1x64xf32>
    %122 = vector.broadcast %121 : vector<1x64xf32> to vector<16x64xf32>
    %123 = arith.mulf %120, %122 : vector<16x64xf32>
    %c0_85 = arith.constant 0 : index
    %c0_86 = arith.constant 0 : index
    %124 = vector.load %arg11[%c0_85, %c0_86] : memref<1x64xf32, #tpu.memory_space<vmem>>, vector<1x64xf32>
    %125 = vector.broadcast %124 : vector<1x64xf32> to vector<16x64xf32>
    %126 = arith.addf %123, %125 : vector<16x64xf32>
    %127 = arith.truncf %126 : vector<16x64xf32> to vector<16x64xbf16>
    %c0_87 = arith.constant 0 : index
    %c0_88 = arith.constant 0 : index
    %c0_89 = arith.constant 0 : index
    %128 = vector.load %arg12[%c0_87, %c0_88, %c0_89] : memref<9x4x16xbf16, #tpu.memory_space<vmem>>, vector<1x4x16xbf16>
    %129 = vector.shape_cast %128 : vector<1x4x16xbf16> to vector<4x16xbf16>
    %cst_90 = arith.constant dense<0.000000e+00> : vector<4x64xf32>
    %130 = tpu.matmul %129, %127, %cst_90 {dimension_numbers = #tpu.dot_dimension_numbers<[1], [0], [0], [1], [0, 0, 1, 1], [], []>} : vector<4x16xbf16>, vector<16x64xbf16>, vector<4x64xf32> -> vector<4x64xf32>
    %131 = arith.truncf %130 : vector<4x64xf32> to vector<4x64xbf16>
    %c0_91 = arith.constant 0 : index
    %c0_92 = arith.constant 0 : index
    %c0_93 = arith.constant 0 : index
    %132 = vector.load %arg13[%c0_91, %c0_92, %c0_93] : memref<9x64x128xbf16, #tpu.memory_space<vmem>>, vector<1x64x128xbf16>
    %133 = vector.shape_cast %132 : vector<1x64x128xbf16> to vector<64x128xbf16>
    %cst_94 = arith.constant dense<0.000000e+00> : vector<4x128xf32>
    %134 = tpu.matmul %131, %133, %cst_94 {dimension_numbers = #tpu.dot_dimension_numbers<[1], [0], [0], [1], [0, 0, 1, 1], [], []>} : vector<4x64xbf16>, vector<64x128xbf16>, vector<4x128xf32> -> vector<4x128xf32>
    %c1_95 = arith.constant 1 : index
    %c0_96 = arith.constant 0 : index
    %c0_97 = arith.constant 0 : index
    %135 = vector.load %arg12[%c1_95, %c0_96, %c0_97] : memref<9x4x16xbf16, #tpu.memory_space<vmem>>, vector<1x4x16xbf16>
    %136 = vector.shape_cast %135 : vector<1x4x16xbf16> to vector<4x16xbf16>
    %cst_98 = arith.constant dense<0.000000e+00> : vector<4x64xf32>
    %137 = tpu.matmul %136, %127, %cst_98 {dimension_numbers = #tpu.dot_dimension_numbers<[1], [0], [0], [1], [0, 0, 1, 1], [], []>} : vector<4x16xbf16>, vector<16x64xbf16>, vector<4x64xf32> -> vector<4x64xf32>
    %138 = arith.truncf %137 : vector<4x64xf32> to vector<4x64xbf16>
    %c1_99 = arith.constant 1 : index
    %c0_100 = arith.constant 0 : index
    %c0_101 = arith.constant 0 : index
    %139 = vector.load %arg13[%c1_99, %c0_100, %c0_101] : memref<9x64x128xbf16, #tpu.memory_space<vmem>>, vector<1x64x128xbf16>
    %140 = vector.shape_cast %139 : vector<1x64x128xbf16> to vector<64x128xbf16>
    %cst_102 = arith.constant dense<0.000000e+00> : vector<4x128xf32>
    %141 = tpu.matmul %138, %140, %cst_102 {dimension_numbers = #tpu.dot_dimension_numbers<[1], [0], [0], [1], [0, 0, 1, 1], [], []>} : vector<4x64xbf16>, vector<64x128xbf16>, vector<4x128xf32> -> vector<4x128xf32>
    %142 = arith.addf %134, %141 : vector<4x128xf32>
    %c2_103 = arith.constant 2 : index
    %c0_104 = arith.constant 0 : index
    %c0_105 = arith.constant 0 : index
    %143 = vector.load %arg12[%c2_103, %c0_104, %c0_105] : memref<9x4x16xbf16, #tpu.memory_space<vmem>>, vector<1x4x16xbf16>
    %144 = vector.shape_cast %143 : vector<1x4x16xbf16> to vector<4x16xbf16>
    %cst_106 = arith.constant dense<0.000000e+00> : vector<4x64xf32>
    %145 = tpu.matmul %144, %127, %cst_106 {dimension_numbers = #tpu.dot_dimension_numbers<[1], [0], [0], [1], [0, 0, 1, 1], [], []>} : vector<4x16xbf16>, vector<16x64xbf16>, vector<4x64xf32> -> vector<4x64xf32>
    %146 = arith.truncf %145 : vector<4x64xf32> to vector<4x64xbf16>
    %c2_107 = arith.constant 2 : index
    %c0_108 = arith.constant 0 : index
    %c0_109 = arith.constant 0 : index
    %147 = vector.load %arg13[%c2_107, %c0_108, %c0_109] : memref<9x64x128xbf16, #tpu.memory_space<vmem>>, vector<1x64x128xbf16>
    %148 = vector.shape_cast %147 : vector<1x64x128xbf16> to vector<64x128xbf16>
    %cst_110 = arith.constant dense<0.000000e+00> : vector<4x128xf32>
    %149 = tpu.matmul %146, %148, %cst_110 {dimension_numbers = #tpu.dot_dimension_numbers<[1], [0], [0], [1], [0, 0, 1, 1], [], []>} : vector<4x64xbf16>, vector<64x128xbf16>, vector<4x128xf32> -> vector<4x128xf32>
    %150 = arith.addf %142, %149 : vector<4x128xf32>
    %c3_111 = arith.constant 3 : index
    %c0_112 = arith.constant 0 : index
    %c0_113 = arith.constant 0 : index
    %151 = vector.load %arg12[%c3_111, %c0_112, %c0_113] : memref<9x4x16xbf16, #tpu.memory_space<vmem>>, vector<1x4x16xbf16>
    %152 = vector.shape_cast %151 : vector<1x4x16xbf16> to vector<4x16xbf16>
    %cst_114 = arith.constant dense<0.000000e+00> : vector<4x64xf32>
    %153 = tpu.matmul %152, %127, %cst_114 {dimension_numbers = #tpu.dot_dimension_numbers<[1], [0], [0], [1], [0, 0, 1, 1], [], []>} : vector<4x16xbf16>, vector<16x64xbf16>, vector<4x64xf32> -> vector<4x64xf32>
    %154 = arith.truncf %153 : vector<4x64xf32> to vector<4x64xbf16>
    %c3_115 = arith.constant 3 : index
    %c0_116 = arith.constant 0 : index
    %c0_117 = arith.constant 0 : index
    %155 = vector.load %arg13[%c3_115, %c0_116, %c0_117] : memref<9x64x128xbf16, #tpu.memory_space<vmem>>, vector<1x64x128xbf16>
    %156 = vector.shape_cast %155 : vector<1x64x128xbf16> to vector<64x128xbf16>
    %cst_118 = arith.constant dense<0.000000e+00> : vector<4x128xf32>
    %157 = tpu.matmul %154, %156, %cst_118 {dimension_numbers = #tpu.dot_dimension_numbers<[1], [0], [0], [1], [0, 0, 1, 1], [], []>} : vector<4x64xbf16>, vector<64x128xbf16>, vector<4x128xf32> -> vector<4x128xf32>
    %158 = arith.addf %150, %157 : vector<4x128xf32>
    %c4_119 = arith.constant 4 : index
    %c0_120 = arith.constant 0 : index
    %c0_121 = arith.constant 0 : index
    %159 = vector.load %arg12[%c4_119, %c0_120, %c0_121] : memref<9x4x16xbf16, #tpu.memory_space<vmem>>, vector<1x4x16xbf16>
    %160 = vector.shape_cast %159 : vector<1x4x16xbf16> to vector<4x16xbf16>
    %cst_122 = arith.constant dense<0.000000e+00> : vector<4x64xf32>
    %161 = tpu.matmul %160, %127, %cst_122 {dimension_numbers = #tpu.dot_dimension_numbers<[1], [0], [0], [1], [0, 0, 1, 1], [], []>} : vector<4x16xbf16>, vector<16x64xbf16>, vector<4x64xf32> -> vector<4x64xf32>
    %162 = arith.truncf %161 : vector<4x64xf32> to vector<4x64xbf16>
    %c4_123 = arith.constant 4 : index
    %c0_124 = arith.constant 0 : index
    %c0_125 = arith.constant 0 : index
    %163 = vector.load %arg13[%c4_123, %c0_124, %c0_125] : memref<9x64x128xbf16, #tpu.memory_space<vmem>>, vector<1x64x128xbf16>
    %164 = vector.shape_cast %163 : vector<1x64x128xbf16> to vector<64x128xbf16>
    %cst_126 = arith.constant dense<0.000000e+00> : vector<4x128xf32>
    %165 = tpu.matmul %162, %164, %cst_126 {dimension_numbers = #tpu.dot_dimension_numbers<[1], [0], [0], [1], [0, 0, 1, 1], [], []>} : vector<4x64xbf16>, vector<64x128xbf16>, vector<4x128xf32> -> vector<4x128xf32>
    %166 = arith.addf %158, %165 : vector<4x128xf32>
    %c5_127 = arith.constant 5 : index
    %c0_128 = arith.constant 0 : index
    %c0_129 = arith.constant 0 : index
    %167 = vector.load %arg12[%c5_127, %c0_128, %c0_129] : memref<9x4x16xbf16, #tpu.memory_space<vmem>>, vector<1x4x16xbf16>
    %168 = vector.shape_cast %167 : vector<1x4x16xbf16> to vector<4x16xbf16>
    %cst_130 = arith.constant dense<0.000000e+00> : vector<4x64xf32>
    %169 = tpu.matmul %168, %127, %cst_130 {dimension_numbers = #tpu.dot_dimension_numbers<[1], [0], [0], [1], [0, 0, 1, 1], [], []>} : vector<4x16xbf16>, vector<16x64xbf16>, vector<4x64xf32> -> vector<4x64xf32>
    %170 = arith.truncf %169 : vector<4x64xf32> to vector<4x64xbf16>
    %c5_131 = arith.constant 5 : index
    %c0_132 = arith.constant 0 : index
    %c0_133 = arith.constant 0 : index
    %171 = vector.load %arg13[%c5_131, %c0_132, %c0_133] : memref<9x64x128xbf16, #tpu.memory_space<vmem>>, vector<1x64x128xbf16>
    %172 = vector.shape_cast %171 : vector<1x64x128xbf16> to vector<64x128xbf16>
    %cst_134 = arith.constant dense<0.000000e+00> : vector<4x128xf32>
    %173 = tpu.matmul %170, %172, %cst_134 {dimension_numbers = #tpu.dot_dimension_numbers<[1], [0], [0], [1], [0, 0, 1, 1], [], []>} : vector<4x64xbf16>, vector<64x128xbf16>, vector<4x128xf32> -> vector<4x128xf32>
    %174 = arith.addf %166, %173 : vector<4x128xf32>
    %c6_135 = arith.constant 6 : index
    %c0_136 = arith.constant 0 : index
    %c0_137 = arith.constant 0 : index
    %175 = vector.load %arg12[%c6_135, %c0_136, %c0_137] : memref<9x4x16xbf16, #tpu.memory_space<vmem>>, vector<1x4x16xbf16>
    %176 = vector.shape_cast %175 : vector<1x4x16xbf16> to vector<4x16xbf16>
    %cst_138 = arith.constant dense<0.000000e+00> : vector<4x64xf32>
    %177 = tpu.matmul %176, %127, %cst_138 {dimension_numbers = #tpu.dot_dimension_numbers<[1], [0], [0], [1], [0, 0, 1, 1], [], []>} : vector<4x16xbf16>, vector<16x64xbf16>, vector<4x64xf32> -> vector<4x64xf32>
    %178 = arith.truncf %177 : vector<4x64xf32> to vector<4x64xbf16>
    %c6_139 = arith.constant 6 : index
    %c0_140 = arith.constant 0 : index
    %c0_141 = arith.constant 0 : index
    %179 = vector.load %arg13[%c6_139, %c0_140, %c0_141] : memref<9x64x128xbf16, #tpu.memory_space<vmem>>, vector<1x64x128xbf16>
    %180 = vector.shape_cast %179 : vector<1x64x128xbf16> to vector<64x128xbf16>
    %cst_142 = arith.constant dense<0.000000e+00> : vector<4x128xf32>
    %181 = tpu.matmul %178, %180, %cst_142 {dimension_numbers = #tpu.dot_dimension_numbers<[1], [0], [0], [1], [0, 0, 1, 1], [], []>} : vector<4x64xbf16>, vector<64x128xbf16>, vector<4x128xf32> -> vector<4x128xf32>
    %182 = arith.addf %174, %181 : vector<4x128xf32>
    %c7_143 = arith.constant 7 : index
    %c0_144 = arith.constant 0 : index
    %c0_145 = arith.constant 0 : index
    %183 = vector.load %arg12[%c7_143, %c0_144, %c0_145] : memref<9x4x16xbf16, #tpu.memory_space<vmem>>, vector<1x4x16xbf16>
    %184 = vector.shape_cast %183 : vector<1x4x16xbf16> to vector<4x16xbf16>
    %cst_146 = arith.constant dense<0.000000e+00> : vector<4x64xf32>
    %185 = tpu.matmul %184, %127, %cst_146 {dimension_numbers = #tpu.dot_dimension_numbers<[1], [0], [0], [1], [0, 0, 1, 1], [], []>} : vector<4x16xbf16>, vector<16x64xbf16>, vector<4x64xf32> -> vector<4x64xf32>
    %186 = arith.truncf %185 : vector<4x64xf32> to vector<4x64xbf16>
    %c7_147 = arith.constant 7 : index
    %c0_148 = arith.constant 0 : index
    %c0_149 = arith.constant 0 : index
    %187 = vector.load %arg13[%c7_147, %c0_148, %c0_149] : memref<9x64x128xbf16, #tpu.memory_space<vmem>>, vector<1x64x128xbf16>
    %188 = vector.shape_cast %187 : vector<1x64x128xbf16> to vector<64x128xbf16>
    %cst_150 = arith.constant dense<0.000000e+00> : vector<4x128xf32>
    %189 = tpu.matmul %186, %188, %cst_150 {dimension_numbers = #tpu.dot_dimension_numbers<[1], [0], [0], [1], [0, 0, 1, 1], [], []>} : vector<4x64xbf16>, vector<64x128xbf16>, vector<4x128xf32> -> vector<4x128xf32>
    %190 = arith.addf %182, %189 : vector<4x128xf32>
    %c8_151 = arith.constant 8 : index
    %c0_152 = arith.constant 0 : index
    %c0_153 = arith.constant 0 : index
    %191 = vector.load %arg12[%c8_151, %c0_152, %c0_153] : memref<9x4x16xbf16, #tpu.memory_space<vmem>>, vector<1x4x16xbf16>
    %192 = vector.shape_cast %191 : vector<1x4x16xbf16> to vector<4x16xbf16>
    %cst_154 = arith.constant dense<0.000000e+00> : vector<4x64xf32>
    %193 = tpu.matmul %192, %127, %cst_154 {dimension_numbers = #tpu.dot_dimension_numbers<[1], [0], [0], [1], [0, 0, 1, 1], [], []>} : vector<4x16xbf16>, vector<16x64xbf16>, vector<4x64xf32> -> vector<4x64xf32>
    %194 = arith.truncf %193 : vector<4x64xf32> to vector<4x64xbf16>
    %c8_155 = arith.constant 8 : index
    %c0_156 = arith.constant 0 : index
    %c0_157 = arith.constant 0 : index
    %195 = vector.load %arg13[%c8_155, %c0_156, %c0_157] : memref<9x64x128xbf16, #tpu.memory_space<vmem>>, vector<1x64x128xbf16>
    %196 = vector.shape_cast %195 : vector<1x64x128xbf16> to vector<64x128xbf16>
    %cst_158 = arith.constant dense<0.000000e+00> : vector<4x128xf32>
    %197 = tpu.matmul %194, %196, %cst_158 {dimension_numbers = #tpu.dot_dimension_numbers<[1], [0], [0], [1], [0, 0, 1, 1], [], []>} : vector<4x64xbf16>, vector<64x128xbf16>, vector<4x128xf32> -> vector<4x128xf32>
    %198 = arith.addf %190, %197 : vector<4x128xf32>
    %c0_159 = arith.constant 0 : index
    %c0_160 = arith.constant 0 : index
    %199 = vector.load %arg14[%c0_159, %c0_160] : memref<1x128xf32, #tpu.memory_space<vmem>>, vector<1x128xf32>
    %200 = vector.broadcast %199 : vector<1x128xf32> to vector<4x128xf32>
    %201 = arith.addf %198, %200 : vector<4x128xf32>
    %cst_161 = arith.constant 0.000000e+00 : f32
    %202 = vector.broadcast %cst_161 : f32 to vector<4x128xf32>
    %203 = arith.cmpf ogt, %201, %202 : vector<4x128xf32>
    %cst_162 = arith.constant 2.000000e-01 : f32
    %204 = vector.broadcast %cst_162 : f32 to vector<4x128xf32>
    %205 = arith.mulf %204, %201 : vector<4x128xf32>
    %206 = arith.select %203, %201, %205 : vector<4x128xi1>, vector<4x128xf32>
    %c0_163 = arith.constant 0 : index
    %c0_164 = arith.constant 0 : index
    %207 = vector.load %arg15[%c0_163, %c0_164] : memref<1x128xf32, #tpu.memory_space<vmem>>, vector<1x128xf32>
    %208 = vector.broadcast %207 : vector<1x128xf32> to vector<4x128xf32>
    %209 = arith.mulf %206, %208 : vector<4x128xf32>
    %c0_165 = arith.constant 0 : index
    %c0_166 = arith.constant 0 : index
    %210 = vector.load %arg16[%c0_165, %c0_166] : memref<1x128xf32, #tpu.memory_space<vmem>>, vector<1x128xf32>
    %211 = vector.broadcast %210 : vector<1x128xf32> to vector<4x128xf32>
    %212 = arith.addf %209, %211 : vector<4x128xf32>
    %213 = arith.truncf %212 : vector<4x128xf32> to vector<4x128xbf16>
    %c0_167 = arith.constant 0 : index
    %c0_168 = arith.constant 0 : index
    %c0_169 = arith.constant 0 : index
    %214 = vector.load %arg17[%c0_167, %c0_168, %c0_169] : memref<9x1x4xbf16, #tpu.memory_space<vmem>>, vector<1x1x4xbf16>
    %215 = vector.shape_cast %214 : vector<1x1x4xbf16> to vector<1x4xbf16>
    %cst_170 = arith.constant dense<0.000000e+00> : vector<1x128xf32>
    %216 = tpu.matmul %215, %213, %cst_170 {dimension_numbers = #tpu.dot_dimension_numbers<[1], [0], [0], [1], [0, 0, 1, 1], [], []>} : vector<1x4xbf16>, vector<4x128xbf16>, vector<1x128xf32> -> vector<1x128xf32>
    %217 = arith.truncf %216 : vector<1x128xf32> to vector<1x128xbf16>
    %c0_171 = arith.constant 0 : index
    %c0_172 = arith.constant 0 : index
    %c0_173 = arith.constant 0 : index
    %218 = vector.load %arg18[%c0_171, %c0_172, %c0_173] : memref<9x128x256xbf16, #tpu.memory_space<vmem>>, vector<1x128x256xbf16>
    %219 = vector.shape_cast %218 : vector<1x128x256xbf16> to vector<128x256xbf16>
    %cst_174 = arith.constant dense<0.000000e+00> : vector<1x256xf32>
    %220 = tpu.matmul %217, %219, %cst_174 {dimension_numbers = #tpu.dot_dimension_numbers<[1], [0], [0], [1], [0, 0, 1, 1], [], []>} : vector<1x128xbf16>, vector<128x256xbf16>, vector<1x256xf32> -> vector<1x256xf32>
    %c1_175 = arith.constant 1 : index
    %c0_176 = arith.constant 0 : index
    %c0_177 = arith.constant 0 : index
    %221 = vector.load %arg17[%c1_175, %c0_176, %c0_177] : memref<9x1x4xbf16, #tpu.memory_space<vmem>>, vector<1x1x4xbf16>
    %222 = vector.shape_cast %221 : vector<1x1x4xbf16> to vector<1x4xbf16>
    %cst_178 = arith.constant dense<0.000000e+00> : vector<1x128xf32>
    %223 = tpu.matmul %222, %213, %cst_178 {dimension_numbers = #tpu.dot_dimension_numbers<[1], [0], [0], [1], [0, 0, 1, 1], [], []>} : vector<1x4xbf16>, vector<4x128xbf16>, vector<1x128xf32> -> vector<1x128xf32>
    %224 = arith.truncf %223 : vector<1x128xf32> to vector<1x128xbf16>
    %c1_179 = arith.constant 1 : index
    %c0_180 = arith.constant 0 : index
    %c0_181 = arith.constant 0 : index
    %225 = vector.load %arg18[%c1_179, %c0_180, %c0_181] : memref<9x128x256xbf16, #tpu.memory_space<vmem>>, vector<1x128x256xbf16>
    %226 = vector.shape_cast %225 : vector<1x128x256xbf16> to vector<128x256xbf16>
    %cst_182 = arith.constant dense<0.000000e+00> : vector<1x256xf32>
    %227 = tpu.matmul %224, %226, %cst_182 {dimension_numbers = #tpu.dot_dimension_numbers<[1], [0], [0], [1], [0, 0, 1, 1], [], []>} : vector<1x128xbf16>, vector<128x256xbf16>, vector<1x256xf32> -> vector<1x256xf32>
    %228 = arith.addf %220, %227 : vector<1x256xf32>
    %c2_183 = arith.constant 2 : index
    %c0_184 = arith.constant 0 : index
    %c0_185 = arith.constant 0 : index
    %229 = vector.load %arg17[%c2_183, %c0_184, %c0_185] : memref<9x1x4xbf16, #tpu.memory_space<vmem>>, vector<1x1x4xbf16>
    %230 = vector.shape_cast %229 : vector<1x1x4xbf16> to vector<1x4xbf16>
    %cst_186 = arith.constant dense<0.000000e+00> : vector<1x128xf32>
    %231 = tpu.matmul %230, %213, %cst_186 {dimension_numbers = #tpu.dot_dimension_numbers<[1], [0], [0], [1], [0, 0, 1, 1], [], []>} : vector<1x4xbf16>, vector<4x128xbf16>, vector<1x128xf32> -> vector<1x128xf32>
    %232 = arith.truncf %231 : vector<1x128xf32> to vector<1x128xbf16>
    %c2_187 = arith.constant 2 : index
    %c0_188 = arith.constant 0 : index
    %c0_189 = arith.constant 0 : index
    %233 = vector.load %arg18[%c2_187, %c0_188, %c0_189] : memref<9x128x256xbf16, #tpu.memory_space<vmem>>, vector<1x128x256xbf16>
    %234 = vector.shape_cast %233 : vector<1x128x256xbf16> to vector<128x256xbf16>
    %cst_190 = arith.constant dense<0.000000e+00> : vector<1x256xf32>
    %235 = tpu.matmul %232, %234, %cst_190 {dimension_numbers = #tpu.dot_dimension_numbers<[1], [0], [0], [1], [0, 0, 1, 1], [], []>} : vector<1x128xbf16>, vector<128x256xbf16>, vector<1x256xf32> -> vector<1x256xf32>
    %236 = arith.addf %228, %235 : vector<1x256xf32>
    %c3_191 = arith.constant 3 : index
    %c0_192 = arith.constant 0 : index
    %c0_193 = arith.constant 0 : index
    %237 = vector.load %arg17[%c3_191, %c0_192, %c0_193] : memref<9x1x4xbf16, #tpu.memory_space<vmem>>, vector<1x1x4xbf16>
    %238 = vector.shape_cast %237 : vector<1x1x4xbf16> to vector<1x4xbf16>
    %cst_194 = arith.constant dense<0.000000e+00> : vector<1x128xf32>
    %239 = tpu.matmul %238, %213, %cst_194 {dimension_numbers = #tpu.dot_dimension_numbers<[1], [0], [0], [1], [0, 0, 1, 1], [], []>} : vector<1x4xbf16>, vector<4x128xbf16>, vector<1x128xf32> -> vector<1x128xf32>
    %240 = arith.truncf %239 : vector<1x128xf32> to vector<1x128xbf16>
    %c3_195 = arith.constant 3 : index
    %c0_196 = arith.constant 0 : index
    %c0_197 = arith.constant 0 : index
    %241 = vector.load %arg18[%c3_195, %c0_196, %c0_197] : memref<9x128x256xbf16, #tpu.memory_space<vmem>>, vector<1x128x256xbf16>
    %242 = vector.shape_cast %241 : vector<1x128x256xbf16> to vector<128x256xbf16>
    %cst_198 = arith.constant dense<0.000000e+00> : vector<1x256xf32>
    %243 = tpu.matmul %240, %242, %cst_198 {dimension_numbers = #tpu.dot_dimension_numbers<[1], [0], [0], [1], [0, 0, 1, 1], [], []>} : vector<1x128xbf16>, vector<128x256xbf16>, vector<1x256xf32> -> vector<1x256xf32>
    %244 = arith.addf %236, %243 : vector<1x256xf32>
    %c4_199 = arith.constant 4 : index
    %c0_200 = arith.constant 0 : index
    %c0_201 = arith.constant 0 : index
    %245 = vector.load %arg17[%c4_199, %c0_200, %c0_201] : memref<9x1x4xbf16, #tpu.memory_space<vmem>>, vector<1x1x4xbf16>
    %246 = vector.shape_cast %245 : vector<1x1x4xbf16> to vector<1x4xbf16>
    %cst_202 = arith.constant dense<0.000000e+00> : vector<1x128xf32>
    %247 = tpu.matmul %246, %213, %cst_202 {dimension_numbers = #tpu.dot_dimension_numbers<[1], [0], [0], [1], [0, 0, 1, 1], [], []>} : vector<1x4xbf16>, vector<4x128xbf16>, vector<1x128xf32> -> vector<1x128xf32>
    %248 = arith.truncf %247 : vector<1x128xf32> to vector<1x128xbf16>
    %c4_203 = arith.constant 4 : index
    %c0_204 = arith.constant 0 : index
    %c0_205 = arith.constant 0 : index
    %249 = vector.load %arg18[%c4_203, %c0_204, %c0_205] : memref<9x128x256xbf16, #tpu.memory_space<vmem>>, vector<1x128x256xbf16>
    %250 = vector.shape_cast %249 : vector<1x128x256xbf16> to vector<128x256xbf16>
    %cst_206 = arith.constant dense<0.000000e+00> : vector<1x256xf32>
    %251 = tpu.matmul %248, %250, %cst_206 {dimension_numbers = #tpu.dot_dimension_numbers<[1], [0], [0], [1], [0, 0, 1, 1], [], []>} : vector<1x128xbf16>, vector<128x256xbf16>, vector<1x256xf32> -> vector<1x256xf32>
    %252 = arith.addf %244, %251 : vector<1x256xf32>
    %c5_207 = arith.constant 5 : index
    %c0_208 = arith.constant 0 : index
    %c0_209 = arith.constant 0 : index
    %253 = vector.load %arg17[%c5_207, %c0_208, %c0_209] : memref<9x1x4xbf16, #tpu.memory_space<vmem>>, vector<1x1x4xbf16>
    %254 = vector.shape_cast %253 : vector<1x1x4xbf16> to vector<1x4xbf16>
    %cst_210 = arith.constant dense<0.000000e+00> : vector<1x128xf32>
    %255 = tpu.matmul %254, %213, %cst_210 {dimension_numbers = #tpu.dot_dimension_numbers<[1], [0], [0], [1], [0, 0, 1, 1], [], []>} : vector<1x4xbf16>, vector<4x128xbf16>, vector<1x128xf32> -> vector<1x128xf32>
    %256 = arith.truncf %255 : vector<1x128xf32> to vector<1x128xbf16>
    %c5_211 = arith.constant 5 : index
    %c0_212 = arith.constant 0 : index
    %c0_213 = arith.constant 0 : index
    %257 = vector.load %arg18[%c5_211, %c0_212, %c0_213] : memref<9x128x256xbf16, #tpu.memory_space<vmem>>, vector<1x128x256xbf16>
    %258 = vector.shape_cast %257 : vector<1x128x256xbf16> to vector<128x256xbf16>
    %cst_214 = arith.constant dense<0.000000e+00> : vector<1x256xf32>
    %259 = tpu.matmul %256, %258, %cst_214 {dimension_numbers = #tpu.dot_dimension_numbers<[1], [0], [0], [1], [0, 0, 1, 1], [], []>} : vector<1x128xbf16>, vector<128x256xbf16>, vector<1x256xf32> -> vector<1x256xf32>
    %260 = arith.addf %252, %259 : vector<1x256xf32>
    %c6_215 = arith.constant 6 : index
    %c0_216 = arith.constant 0 : index
    %c0_217 = arith.constant 0 : index
    %261 = vector.load %arg17[%c6_215, %c0_216, %c0_217] : memref<9x1x4xbf16, #tpu.memory_space<vmem>>, vector<1x1x4xbf16>
    %262 = vector.shape_cast %261 : vector<1x1x4xbf16> to vector<1x4xbf16>
    %cst_218 = arith.constant dense<0.000000e+00> : vector<1x128xf32>
    %263 = tpu.matmul %262, %213, %cst_218 {dimension_numbers = #tpu.dot_dimension_numbers<[1], [0], [0], [1], [0, 0, 1, 1], [], []>} : vector<1x4xbf16>, vector<4x128xbf16>, vector<1x128xf32> -> vector<1x128xf32>
    %264 = arith.truncf %263 : vector<1x128xf32> to vector<1x128xbf16>
    %c6_219 = arith.constant 6 : index
    %c0_220 = arith.constant 0 : index
    %c0_221 = arith.constant 0 : index
    %265 = vector.load %arg18[%c6_219, %c0_220, %c0_221] : memref<9x128x256xbf16, #tpu.memory_space<vmem>>, vector<1x128x256xbf16>
    %266 = vector.shape_cast %265 : vector<1x128x256xbf16> to vector<128x256xbf16>
    %cst_222 = arith.constant dense<0.000000e+00> : vector<1x256xf32>
    %267 = tpu.matmul %264, %266, %cst_222 {dimension_numbers = #tpu.dot_dimension_numbers<[1], [0], [0], [1], [0, 0, 1, 1], [], []>} : vector<1x128xbf16>, vector<128x256xbf16>, vector<1x256xf32> -> vector<1x256xf32>
    %268 = arith.addf %260, %267 : vector<1x256xf32>
    %c7_223 = arith.constant 7 : index
    %c0_224 = arith.constant 0 : index
    %c0_225 = arith.constant 0 : index
    %269 = vector.load %arg17[%c7_223, %c0_224, %c0_225] : memref<9x1x4xbf16, #tpu.memory_space<vmem>>, vector<1x1x4xbf16>
    %270 = vector.shape_cast %269 : vector<1x1x4xbf16> to vector<1x4xbf16>
    %cst_226 = arith.constant dense<0.000000e+00> : vector<1x128xf32>
    %271 = tpu.matmul %270, %213, %cst_226 {dimension_numbers = #tpu.dot_dimension_numbers<[1], [0], [0], [1], [0, 0, 1, 1], [], []>} : vector<1x4xbf16>, vector<4x128xbf16>, vector<1x128xf32> -> vector<1x128xf32>
    %272 = arith.truncf %271 : vector<1x128xf32> to vector<1x128xbf16>
    %c7_227 = arith.constant 7 : index
    %c0_228 = arith.constant 0 : index
    %c0_229 = arith.constant 0 : index
    %273 = vector.load %arg18[%c7_227, %c0_228, %c0_229] : memref<9x128x256xbf16, #tpu.memory_space<vmem>>, vector<1x128x256xbf16>
    %274 = vector.shape_cast %273 : vector<1x128x256xbf16> to vector<128x256xbf16>
    %cst_230 = arith.constant dense<0.000000e+00> : vector<1x256xf32>
    %275 = tpu.matmul %272, %274, %cst_230 {dimension_numbers = #tpu.dot_dimension_numbers<[1], [0], [0], [1], [0, 0, 1, 1], [], []>} : vector<1x128xbf16>, vector<128x256xbf16>, vector<1x256xf32> -> vector<1x256xf32>
    %276 = arith.addf %268, %275 : vector<1x256xf32>
    %c8_231 = arith.constant 8 : index
    %c0_232 = arith.constant 0 : index
    %c0_233 = arith.constant 0 : index
    %277 = vector.load %arg17[%c8_231, %c0_232, %c0_233] : memref<9x1x4xbf16, #tpu.memory_space<vmem>>, vector<1x1x4xbf16>
    %278 = vector.shape_cast %277 : vector<1x1x4xbf16> to vector<1x4xbf16>
    %cst_234 = arith.constant dense<0.000000e+00> : vector<1x128xf32>
    %279 = tpu.matmul %278, %213, %cst_234 {dimension_numbers = #tpu.dot_dimension_numbers<[1], [0], [0], [1], [0, 0, 1, 1], [], []>} : vector<1x4xbf16>, vector<4x128xbf16>, vector<1x128xf32> -> vector<1x128xf32>
    %280 = arith.truncf %279 : vector<1x128xf32> to vector<1x128xbf16>
    %c8_235 = arith.constant 8 : index
    %c0_236 = arith.constant 0 : index
    %c0_237 = arith.constant 0 : index
    %281 = vector.load %arg18[%c8_235, %c0_236, %c0_237] : memref<9x128x256xbf16, #tpu.memory_space<vmem>>, vector<1x128x256xbf16>
    %282 = vector.shape_cast %281 : vector<1x128x256xbf16> to vector<128x256xbf16>
    %cst_238 = arith.constant dense<0.000000e+00> : vector<1x256xf32>
    %283 = tpu.matmul %280, %282, %cst_238 {dimension_numbers = #tpu.dot_dimension_numbers<[1], [0], [0], [1], [0, 0, 1, 1], [], []>} : vector<1x128xbf16>, vector<128x256xbf16>, vector<1x256xf32> -> vector<1x256xf32>
    %284 = arith.addf %276, %283 : vector<1x256xf32>
    %c0_239 = arith.constant 0 : index
    %c0_240 = arith.constant 0 : index
    %285 = vector.load %arg19[%c0_239, %c0_240] : memref<1x256xf32, #tpu.memory_space<vmem>>, vector<1x256xf32>
    %286 = arith.addf %284, %285 : vector<1x256xf32>
    %cst_241 = arith.constant 0.000000e+00 : f32
    %287 = vector.broadcast %cst_241 : f32 to vector<1x256xf32>
    %288 = arith.cmpf ogt, %286, %287 : vector<1x256xf32>
    %cst_242 = arith.constant 2.000000e-01 : f32
    %289 = vector.broadcast %cst_242 : f32 to vector<1x256xf32>
    %290 = arith.mulf %289, %286 : vector<1x256xf32>
    %291 = arith.select %288, %286, %290 : vector<1x256xi1>, vector<1x256xf32>
    %c0_243 = arith.constant 0 : index
    %c0_244 = arith.constant 0 : index
    %292 = vector.load %arg20[%c0_243, %c0_244] : memref<1x256xf32, #tpu.memory_space<vmem>>, vector<1x256xf32>
    %293 = arith.mulf %291, %292 : vector<1x256xf32>
    %c0_245 = arith.constant 0 : index
    %c0_246 = arith.constant 0 : index
    %294 = vector.load %arg21[%c0_245, %c0_246] : memref<1x256xf32, #tpu.memory_space<vmem>>, vector<1x256xf32>
    %295 = arith.addf %293, %294 : vector<1x256xf32>
    %c0_247 = arith.constant 0 : index
    %c0_248 = arith.constant 0 : index
    %296 = vector.load %arg22[%c0_247, %c0_248] : memref<1x256xf32, #tpu.memory_space<vmem>>, vector<1x256xf32>
    %297 = arith.mulf %295, %296 : vector<1x256xf32>
    %cst_249 = arith.constant dense<0.000000e+00> : vector<256xf32>
    %298 = vector.multi_reduction <add>, %297, %cst_249 [0] : vector<1x256xf32> to vector<256xf32>
    %299 = vector.shape_cast %298 : vector<256xf32> to vector<1x256xf32>
    %c0_250 = arith.constant 0 : index
    %c0_251 = arith.constant 0 : index
    %300 = vector.load %arg24[%c0_250, %c0_251] : memref<256x2xf32, #tpu.memory_space<vmem>>, vector<256x2xf32>
    %cst_252 = arith.constant dense<0.000000e+00> : vector<1x2xf32>
    %301 = tpu.matmul %299, %300, %cst_252 {dimension_numbers = #tpu.dot_dimension_numbers<[1], [0], [0], [1], [0, 0, 1, 1], [], []>} : vector<1x256xf32>, vector<256x2xf32>, vector<1x2xf32> -> vector<1x2xf32>
    %c0_253 = arith.constant 0 : index
    %c0_254 = arith.constant 0 : index
    %302 = vector.load %arg23[%c0_253, %c0_254] : memref<1x1xf32, #tpu.memory_space<vmem>>, vector<1x1xf32>
    %303 = vector.broadcast %302 : vector<1x1xf32> to vector<1x2xf32>
    %304 = arith.addf %301, %303 : vector<1x2xf32>
    %305 = arith.negf %304 : vector<1x2xf32>
    %306 = math.exp %305 : vector<1x2xf32>
    %cst_255 = arith.constant 1.000000e+00 : f32
    %307 = vector.broadcast %cst_255 : f32 to vector<1x2xf32>
    %308 = arith.addf %307, %306 : vector<1x2xf32>
    %309 = arith.divf %307, %308 : vector<1x2xf32>
    %310 = vector.shape_cast %309 : vector<1x2xf32> to vector<1x1x2xf32>
    %c0_256 = arith.constant 0 : index
    %c0_257 = arith.constant 0 : index
    %c0_258 = arith.constant 0 : index
    %311 = vector.load %arg25[%c0_256, %c0_257, %c0_258] : memref<1x1x2xf32, #tpu.memory_space<vmem>>, vector<1x1x2xf32>
    tpu.vector_store %arg25[%c0_256, %c0_257, %c0_258], %310 {strides = array<i32>} : memref<1x1x2xf32, #tpu.memory_space<vmem>>, vector<1x1x2xf32>,
    return
  }
  func.func @transform_0(%arg0: i32) -> (i32, i32, i32) {
    %c0_i32 = arith.constant 0 : i32
    %c0_i32_0 = arith.constant 0 : i32
    %c0_i32_1 = arith.constant 0 : i32
    return %arg0, %c0_i32, %c0_i32_0 : i32, i32, i32
  }
  func.func @transform_1(%arg0: i32) -> (i32, i32) {
    %c0_i32 = arith.constant 0 : i32
    %c0_i32_0 = arith.constant 0 : i32
    %c0_i32_1 = arith.constant 0 : i32
    return %c0_i32, %c0_i32_0 : i32, i32
  }
  func.func @transform_2(%arg0: i32) -> (i32, i32, i32) {
    %c0_i32 = arith.constant 0 : i32
    %c0_i32_0 = arith.constant 0 : i32
    %c0_i32_1 = arith.constant 0 : i32
    %c0_i32_2 = arith.constant 0 : i32
    return %c0_i32, %c0_i32_0, %c0_i32_1 : i32, i32, i32
  }
  func.func @transform_3(%arg0: i32) -> (i32, i32) {
    %c0_i32 = arith.constant 0 : i32
    %c0_i32_0 = arith.constant 0 : i32
    %c0_i32_1 = arith.constant 0 : i32
    return %c0_i32, %c0_i32_0 : i32, i32
  }
  func.func @transform_4(%arg0: i32) -> (i32, i32) {
    %c0_i32 = arith.constant 0 : i32
    %c0_i32_0 = arith.constant 0 : i32
    %c0_i32_1 = arith.constant 0 : i32
    return %c0_i32, %c0_i32_0 : i32, i32
  }
  func.func @transform_5(%arg0: i32) -> (i32, i32) {
    %c0_i32 = arith.constant 0 : i32
    %c0_i32_0 = arith.constant 0 : i32
    %c0_i32_1 = arith.constant 0 : i32
    return %c0_i32, %c0_i32_0 : i32, i32
  }
  func.func @transform_6(%arg0: i32) -> (i32, i32) {
    %c0_i32 = arith.constant 0 : i32
    %c0_i32_0 = arith.constant 0 : i32
    %c0_i32_1 = arith.constant 0 : i32
    return %c0_i32, %c0_i32_0 : i32, i32
  }
  func.func @transform_7(%arg0: i32) -> (i32, i32, i32) {
    %c0_i32 = arith.constant 0 : i32
    %c0_i32_0 = arith.constant 0 : i32
    %c0_i32_1 = arith.constant 0 : i32
    %c0_i32_2 = arith.constant 0 : i32
    return %c0_i32, %c0_i32_0, %c0_i32_1 : i32, i32, i32
  }
  func.func @transform_8(%arg0: i32) -> (i32, i32) {
    %c0_i32 = arith.constant 0 : i32
    %c0_i32_0 = arith.constant 0 : i32
    %c0_i32_1 = arith.constant 0 : i32
    return %c0_i32, %c0_i32_0 : i32, i32
  }
  func.func @transform_9(%arg0: i32) -> (i32, i32) {
    %c0_i32 = arith.constant 0 : i32
    %c0_i32_0 = arith.constant 0 : i32
    %c0_i32_1 = arith.constant 0 : i32
    return %c0_i32, %c0_i32_0 : i32, i32
  }
  func.func @transform_10(%arg0: i32) -> (i32, i32) {
    %c0_i32 = arith.constant 0 : i32
    %c0_i32_0 = arith.constant 0 : i32
    %c0_i32_1 = arith.constant 0 : i32
    return %c0_i32, %c0_i32_0 : i32, i32
  }
  func.func @transform_11(%arg0: i32) -> (i32, i32, i32) {
    %c0_i32 = arith.constant 0 : i32
    %c0_i32_0 = arith.constant 0 : i32
    %c0_i32_1 = arith.constant 0 : i32
    %c0_i32_2 = arith.constant 0 : i32
    return %c0_i32, %c0_i32_0, %c0_i32_1 : i32, i32, i32
  }
  func.func @transform_12(%arg0: i32) -> (i32, i32, i32) {
    %c0_i32 = arith.constant 0 : i32
    %c0_i32_0 = arith.constant 0 : i32
    %c0_i32_1 = arith.constant 0 : i32
    %c0_i32_2 = arith.constant 0 : i32
    return %c0_i32, %c0_i32_0, %c0_i32_1 : i32, i32, i32
  }
  func.func @transform_13(%arg0: i32) -> (i32, i32) {
    %c0_i32 = arith.constant 0 : i32
    %c0_i32_0 = arith.constant 0 : i32
    %c0_i32_1 = arith.constant 0 : i32
    return %c0_i32, %c0_i32_0 : i32, i32
  }
  func.func @transform_14(%arg0: i32) -> (i32, i32) {
    %c0_i32 = arith.constant 0 : i32
    %c0_i32_0 = arith.constant 0 : i32
    %c0_i32_1 = arith.constant 0 : i32
    return %c0_i32, %c0_i32_0 : i32, i32
  }
  func.func @transform_15(%arg0: i32) -> (i32, i32) {
    %c0_i32 = arith.constant 0 : i32
    %c0_i32_0 = arith.constant 0 : i32
    %c0_i32_1 = arith.constant 0 : i32
    return %c0_i32, %c0_i32_0 : i32, i32
  }
  func.func @transform_16(%arg0: i32) -> (i32, i32, i32) {
    %c0_i32 = arith.constant 0 : i32
    %c0_i32_0 = arith.constant 0 : i32
    %c0_i32_1 = arith.constant 0 : i32
    %c0_i32_2 = arith.constant 0 : i32
    return %c0_i32, %c0_i32_0, %c0_i32_1 : i32, i32, i32
  }
  func.func @transform_17(%arg0: i32) -> (i32, i32, i32) {
    %c0_i32 = arith.constant 0 : i32
    %c0_i32_0 = arith.constant 0 : i32
    %c0_i32_1 = arith.constant 0 : i32
    %c0_i32_2 = arith.constant 0 : i32
    return %c0_i32, %c0_i32_0, %c0_i32_1 : i32, i32, i32
  }
  func.func @transform_18(%arg0: i32) -> (i32, i32) {
    %c0_i32 = arith.constant 0 : i32
    %c0_i32_0 = arith.constant 0 : i32
    %c0_i32_1 = arith.constant 0 : i32
    return %c0_i32, %c0_i32_0 : i32, i32
  }
  func.func @transform_19(%arg0: i32) -> (i32, i32) {
    %c0_i32 = arith.constant 0 : i32
    %c0_i32_0 = arith.constant 0 : i32
    %c0_i32_1 = arith.constant 0 : i32
    return %c0_i32, %c0_i32_0 : i32, i32
  }
  func.func @transform_20(%arg0: i32) -> (i32, i32) {
    %c0_i32 = arith.constant 0 : i32
    %c0_i32_0 = arith.constant 0 : i32
    %c0_i32_1 = arith.constant 0 : i32
    return %c0_i32, %c0_i32_0 : i32, i32
  }
  func.func @transform_21(%arg0: i32) -> (i32, i32) {
    %c0_i32 = arith.constant 0 : i32
    %c0_i32_0 = arith.constant 0 : i32
    %c0_i32_1 = arith.constant 0 : i32
    return %c0_i32, %c0_i32_0 : i32, i32
  }
  func.func @transform_22(%arg0: i32) -> (i32, i32) {
    %c0_i32 = arith.constant 0 : i32
    %c0_i32_0 = arith.constant 0 : i32
    %c0_i32_1 = arith.constant 0 : i32
    return %c0_i32, %c0_i32_0 : i32, i32
  }
  func.func @transform_23(%arg0: i32) -> (i32, i32) {
    %c0_i32 = arith.constant 0 : i32
    %c0_i32_0 = arith.constant 0 : i32
    %c0_i32_1 = arith.constant 0 : i32
    return %c0_i32, %c0_i32_0 : i32, i32
  }
  func.func @transform_24(%arg0: i32) -> (i32, i32, i32) {
    %c0_i32 = arith.constant 0 : i32
    %c0_i32_0 = arith.constant 0 : i32
    %c0_i32_1 = arith.constant 0 : i32
    return %arg0, %c0_i32, %c0_i32_0 : i32, i32, i32
  }
}

</mosaic_0001>

<llo_original>
// kernel: discriminator_forward.1
$region0: #{discriminator_forward.1}
  #allocation0 [shape = 'u32[]', space=smem, size = 0x4, offset = 0x4, fixed_abs, tag = 'smem constant byte address 0x4 - core index']
  #allocation1 [shape = 'u32[144,128]{1,0:T(1,128)}', space=vmem, size = 0x12000, scoped, tag = 'internal scratch']
  #allocation2 [shape = 'f32[1,1]{1,0:T(1,128)S(1)}', space=vmem, size = 0x200, scoped, tag = 'scoped memory for discriminator_forward.1']
  %s0 = inlined_call_operand.vmem [shape: f32[1,8,256], index: 0, kind: input, shape index: {}]
  %s1 = inlined_call_operand.vmem [shape: bf16[576,256], index: 1, kind: input, shape index: {}]
  %s2 = inlined_call_operand.vmem [shape: bf16[9,8,32], index: 2, kind: input, shape index: {}]
  %s3 = inlined_call_operand.vmem [shape: f32[1,32], index: 3, kind: input, shape index: {}]
  %s4 = inlined_call_operand.vmem [shape: f32[1,32], index: 4, kind: input, shape index: {}]
  %s5 = inlined_call_operand.vmem [shape: f32[1,32], index: 5, kind: input, shape index: {}]
  %s6 = inlined_call_operand.vmem [shape: bf16[144,64], index: 6, kind: input, shape index: {}]
  %s7 = inlined_call_operand.vmem [shape: bf16[9,32,64], index: 7, kind: input, shape index: {}]
  %s8 = inlined_call_operand.vmem [shape: f32[1,64], index: 8, kind: input, shape index: {}]
  %s9 = inlined_call_operand.vmem [shape: f32[1,64], index: 9, kind: input, shape index: {}]
  %s10 = inlined_call_operand.vmem [shape: f32[1,64], index: 10, kind: input, shape index: {}]
  %s11 = inlined_call_operand.vmem [shape: bf16[9,4,16], index: 11, kind: input, shape index: {}]
  %s12 = inlined_call_operand.vmem [shape: bf16[9,64,128], index: 12, kind: input, shape index: {}]
  %s13 = inlined_call_operand.vmem [shape: f32[1,128], index: 13, kind: input, shape index: {}]
  %s14 = inlined_call_operand.vmem [shape: f32[1,128], index: 14, kind: input, shape index: {}]
  %s15 = inlined_call_operand.vmem [shape: f32[1,128], index: 15, kind: input, shape index: {}]
  %s16 = inlined_call_operand.vmem [shape: bf16[9,1,4], index: 16, kind: input, shape index: {}]
  %s17 = inlined_call_operand.vmem [shape: bf16[9,128,256], index: 17, kind: input, shape index: {}]
  %s18 = inlined_call_operand.vmem [shape: f32[1,256], index: 18, kind: input, shape index: {}]
  %s19 = inlined_call_operand.vmem [shape: f32[1,256], index: 19, kind: input, shape index: {}]
  %s20 = inlined_call_operand.vmem [shape: f32[1,256], index: 20, kind: input, shape index: {}]
  %s21 = inlined_call_operand.vmem [shape: f32[1,256], index: 21, kind: input, shape index: {}]
  %s22 = inlined_call_operand.<no memory space> [shape: f32[1,1], index: 22, kind: input, shape index: {}]
  %s23 = inlined_call_operand.vmem [shape: f32[256,2], index: 23, kind: input, shape index: {}]
  %s24 = inlined_call_operand.hbm [shape: f32[1,1,2], index: 24, kind: output, shape index: {}]
  %s25 = sld [smem:[#allocation0]]
  $region106: #{discriminator_forward.1} parent=0
    _
  %s27 = ssub.s32 1, %s25
  %s28 = scalar_select 0, %s27, %s25
  %v29 = vstv %s22
  %30 = vst [vmem:[#allocation2] sm:$0x1] %v29
  $region1: #{discriminator_forward.1} parent=0
    #allocation3 [shape = 'u8[512]{0}', space=vmem, size = 0x400, scoped, tag = 'output window, operand 0, single buffered']
    #allocation4 [shape = 's32[1]{0}', space=sflag, size = 0x4, scoped, tag = 'scoped memory for discriminator_forward.1']
    %31 = vsyncpa [#allocation4], 0
    // Predicated region
    $region2: #{discriminator_forward.1} parent=1 // pred_check
      _
    $region3: #{discriminator_forward.1} parent=1 // pred_check_branch
      %33 = sbr.rel (0) target = $region5
    $region4: #{discriminator_forward.1} parent=1 // pred_region
      _
    $region5: #{discriminator_forward.1} parent=1 // pred_fallthru
      _
    // Predicated region
    $region6: #{discriminator_forward.1} parent=1 // pred_check
      _
    $region7: #{discriminator_forward.1} parent=1 // pred_check_branch
      %35 = sbr.rel (0) target = $region9
    $region8: #{discriminator_forward.1} parent=1 // pred_region
      _
    $region9: #{discriminator_forward.1} parent=1 // pred_fallthru
      _
    // Predicated region
    $region10: #{discriminator_forward.1} parent=1 // pred_check
      _
    $region11: #{discriminator_forward.1} parent=1 // pred_check_branch
      %37 = sbr.rel (0) target = $region13
    $region12: #{discriminator_forward.1} parent=1 // pred_region
      _
    $region13: #{discriminator_forward.1} parent=1 // pred_fallthru
      _
    // Predicated region
    $region14: #{discriminator_forward.1} parent=1 // pred_check
      _
    $region15: #{discriminator_forward.1} parent=1 // pred_check_branch
      %39 = sbr.rel (0) target = $region17
    $region16: #{discriminator_forward.1} parent=1 // pred_region
      _
    $region17: #{discriminator_forward.1} parent=1 // pred_fallthru
      _
    // Predicated region
    $region18: #{discriminator_forward.1} parent=1 // pred_check
      _
    $region19: #{discriminator_forward.1} parent=1 // pred_check_branch
      %41 = sbr.rel (0) target = $region21
    $region20: #{discriminator_forward.1} parent=1 // pred_region
      _
    $region21: #{discriminator_forward.1} parent=1 // pred_fallthru
      _
    // Predicated region
    $region22: #{discriminator_forward.1} parent=1 // pred_check
      _
    $region23: #{discriminator_forward.1} parent=1 // pred_check_branch
      %43 = sbr.rel (0) target = $region25
    $region24: #{discriminator_forward.1} parent=1 // pred_region
      _
    $region25: #{discriminator_forward.1} parent=1 // pred_fallthru
      _
    // Predicated region
    $region26: #{discriminator_forward.1} parent=1 // pred_check
      _
    $region27: #{discriminator_forward.1} parent=1 // pred_check_branch
      %45 = sbr.rel (0) target = $region29
    $region28: #{discriminator_forward.1} parent=1 // pred_region
      _
    $region29: #{discriminator_forward.1} parent=1 // pred_fallthru
      _
    // Predicated region
    $region30: #{discriminator_forward.1} parent=1 // pred_check
      _
    $region31: #{discriminator_forward.1} parent=1 // pred_check_branch
      %47 = sbr.rel (0) target = $region33
    $region32: #{discriminator_forward.1} parent=1 // pred_region
      _
    $region33: #{discriminator_forward.1} parent=1 // pred_fallthru
      _
    // Predicated region
    $region34: #{discriminator_forward.1} parent=1 // pred_check
      _
    $region35: #{discriminator_forward.1} parent=1 // pred_check_branch
      %49 = sbr.rel (0) target = $region37
    $region36: #{discriminator_forward.1} parent=1 // pred_region
      _
    $region37: #{discriminator_forward.1} parent=1 // pred_fallthru
      _
    // Predicated region
    $region38: #{discriminator_forward.1} parent=1 // pred_check
      _
    $region39: #{discriminator_forward.1} parent=1 // pred_check_branch
      %51 = sbr.rel (0) target = $region41
    $region40: #{discriminator_forward.1} parent=1 // pred_region
      _
    $region41: #{discriminator_forward.1} parent=1 // pred_fallthru
      _
    // Predicated region
    $region42: #{discriminator_forward.1} parent=1 // pred_check
      _
    $region43: #{discriminator_forward.1} parent=1 // pred_check_branch
      %53 = sbr.rel (0) target = $region45
    $region44: #{discriminator_forward.1} parent=1 // pred_region
      _
    $region45: #{discriminator_forward.1} parent=1 // pred_fallthru
      _
    // Predicated region
    $region46: #{discriminator_forward.1} parent=1 // pred_check
      _
    $region47: #{discriminator_forward.1} parent=1 // pred_check_branch
      %55 = sbr.rel (0) target = $region49
    $region48: #{discriminator_forward.1} parent=1 // pred_region
      _
    $region49: #{discriminator_forward.1} parent=1 // pred_fallthru
      _
    // Predicated region
    $region50: #{discriminator_forward.1} parent=1 // pred_check
      _
    $region51: #{discriminator_forward.1} parent=1 // pred_check_branch
      %57 = sbr.rel (0) target = $region53
    $region52: #{discriminator_forward.1} parent=1 // pred_region
      _
    $region53: #{discriminator_forward.1} parent=1 // pred_fallthru
      _
    // Predicated region
    $region54: #{discriminator_forward.1} parent=1 // pred_check
      _
    $region55: #{discriminator_forward.1} parent=1 // pred_check_branch
      %59 = sbr.rel (0) target = $region57
    $region56: #{discriminator_forward.1} parent=1 // pred_region
      _
    $region57: #{discriminator_forward.1} parent=1 // pred_fallthru
      _
    // Predicated region
    $region58: #{discriminator_forward.1} parent=1 // pred_check
      _
    $region59: #{discriminator_forward.1} parent=1 // pred_check_branch
      %61 = sbr.rel (0) target = $region61
    $region60: #{discriminator_forward.1} parent=1 // pred_region
      _
    $region61: #{discriminator_forward.1} parent=1 // pred_fallthru
      _
    // Predicated region
    $region62: #{discriminator_forward.1} parent=1 // pred_check
      _
    $region63: #{discriminator_forward.1} parent=1 // pred_check_branch
      %63 = sbr.rel (0) target = $region65
    $region64: #{discriminator_forward.1} parent=1 // pred_region
      _
    $region65: #{discriminator_forward.1} parent=1 // pred_fallthru
      _
    // Predicated region
    $region66: #{discriminator_forward.1} parent=1 // pred_check
      _
    $region67: #{discriminator_forward.1} parent=1 // pred_check_branch
      %65 = sbr.rel (0) target = $region69
    $region68: #{discriminator_forward.1} parent=1 // pred_region
      _
    $region69: #{discriminator_forward.1} parent=1 // pred_fallthru
      _
    // Predicated region
    $region70: #{discriminator_forward.1} parent=1 // pred_check
      _
    $region71: #{discriminator_forward.1} parent=1 // pred_check_branch
      %67 = sbr.rel (0) target = $region73
    $region72: #{discriminator_forward.1} parent=1 // pred_region
      _
    $region73: #{discriminator_forward.1} parent=1 // pred_fallthru
      _
    // Predicated region
    $region74: #{discriminator_forward.1} parent=1 // pred_check
      _
    $region75: #{discriminator_forward.1} parent=1 // pred_check_branch
      %69 = sbr.rel (0) target = $region77
    $region76: #{discriminator_forward.1} parent=1 // pred_region
      _
    $region77: #{discriminator_forward.1} parent=1 // pred_fallthru
      _
    // Predicated region
    $region78: #{discriminator_forward.1} parent=1 // pred_check
      _
    $region79: #{discriminator_forward.1} parent=1 // pred_check_branch
      %71 = sbr.rel (0) target = $region81
    $region80: #{discriminator_forward.1} parent=1 // pred_region
      _
    $region81: #{discriminator_forward.1} parent=1 // pred_fallthru
      _
    // Predicated region
    $region82: #{discriminator_forward.1} parent=1 // pred_check
      _
    $region83: #{discriminator_forward.1} parent=1 // pred_check_branch
      %73 = sbr.rel (0) target = $region85
    $region84: #{discriminator_forward.1} parent=1 // pred_region
      _
    $region85: #{discriminator_forward.1} parent=1 // pred_fallthru
      _
    // Predicated region
    $region86: #{discriminator_forward.1} parent=1 // pred_check
      _
    $region87: #{discriminator_forward.1} parent=1 // pred_check_branch
      %75 = sbr.rel (0) target = $region89
    $region88: #{discriminator_forward.1} parent=1 // pred_region
      _
    $region89: #{discriminator_forward.1} parent=1 // pred_fallthru
      _
    // Predicated region
    $region90: #{discriminator_forward.1} parent=1 // pred_check
      _
    $region91: #{discriminator_forward.1} parent=1 // pred_check_branch
      %77 = sbr.rel (0) target = $region93
    $region92: #{discriminator_forward.1} parent=1 // pred_region
      _
    $region93: #{discriminator_forward.1} parent=1 // pred_fallthru
      _
    // Predicated region
    $region94: #{discriminator_forward.1} parent=1 // pred_check
      _
    $region95: #{discriminator_forward.1} parent=1 // pred_check_branch
      %79 = sbr.rel (0) target = $region97
    $region96: #{discriminator_forward.1} parent=1 // pred_region
      _
    $region97: #{discriminator_forward.1} parent=1 // pred_fallthru
      _
    %v81 = vld [vmem:[%s0] sm:$0xff]
    %v82 = vld [vmem:[%s0 + $0x8] sm:$0xff]
    %83 = vxpose.xlu0.b32.start [1/16] %v81, 128
    %84 = vxpose.xlu0.b32.cont [2/16] 0.0, 128
    %85 = vxpose.xlu0.b32.cont [3/16] 0.0, 128
    %86 = vxpose.xlu0.b32.cont [4/16] 0.0, 128
    %87 = vxpose.xlu0.b32.cont [5/16] 0.0, 128
    %88 = vxpose.xlu0.b32.cont [6/16] 0.0, 128
    %89 = vxpose.xlu0.b32.cont [7/16] 0.0, 128
    %90 = vxpose.xlu0.b32.cont [8/16] 0.0, 128
    %91 = vxpose.xlu0.b32.cont [9/16] 0.0, 128
    %92 = vxpose.xlu0.b32.cont [10/16] 0.0, 128
    %93 = vxpose.xlu0.b32.cont [11/16] 0.0, 128
    %94 = vxpose.xlu0.b32.cont [12/16] 0.0, 128
    %95 = vxpose.xlu0.b32.cont [13/16] 0.0, 128
    %96 = vxpose.xlu0.b32.cont [14/16] 0.0, 128
    %97 = vxpose.xlu0.b32.cont [15/16] 0.0, 128
    %98 = vxpose.xlu0.b32.end [16/16] 0.0, 128
    %v99 = vpop.trf.xlu0
    %v100 = vpop.trf.xlu0
    %v101 = vpop.trf.xlu0
    %v102 = vpop.trf.xlu0
    %v103 = vpop.trf.xlu0
    %v104 = vpop.trf.xlu0
    %v105 = vpop.trf.xlu0
    %v106 = vpop.trf.xlu0
    %v107 = vpop.trf.xlu0
    %v108 = vpop.trf.xlu0
    %v109 = vpop.trf.xlu0
    %v110 = vpop.trf.xlu0
    %v111 = vpop.trf.xlu0
    %v112 = vpop.trf.xlu0
    %v113 = vpop.trf.xlu0
    %v114 = vpop.trf.xlu0
    %115 = vxpose.xlu0.b32.start [1/16] %v82, 128
    %116 = vxpose.xlu0.b32.cont [2/16] 0.0, 128
    %117 = vxpose.xlu0.b32.cont [3/16] 0.0, 128
    %118 = vxpose.xlu0.b32.cont [4/16] 0.0, 128
    %119 = vxpose.xlu0.b32.cont [5/16] 0.0, 128
    %120 = vxpose.xlu0.b32.cont [6/16] 0.0, 128
    %121 = vxpose.xlu0.b32.cont [7/16] 0.0, 128
    %122 = vxpose.xlu0.b32.cont [8/16] 0.0, 128
    %123 = vxpose.xlu0.b32.cont [9/16] 0.0, 128
    %124 = vxpose.xlu0.b32.cont [10/16] 0.0, 128
    %125 = vxpose.xlu0.b32.cont [11/16] 0.0, 128
    %126 = vxpose.xlu0.b32.cont [12/16] 0.0, 128
    %127 = vxpose.xlu0.b32.cont [13/16] 0.0, 128
    %128 = vxpose.xlu0.b32.cont [14/16] 0.0, 128
    %129 = vxpose.xlu0.b32.cont [15/16] 0.0, 128
    %130 = vxpose.xlu0.b32.end [16/16] 0.0, 128
    %v131 = vpop.trf.xlu0
    %v132 = vpop.trf.xlu0
    %v133 = vpop.trf.xlu0
    %v134 = vpop.trf.xlu0
    %v135 = vpop.trf.xlu0
    %v136 = vpop.trf.xlu0
    %v137 = vpop.trf.xlu0
    %v138 = vpop.trf.xlu0
    %v139 = vpop.trf.xlu0
    %v140 = vpop.trf.xlu0
    %v141 = vpop.trf.xlu0
    %v142 = vpop.trf.xlu0
    %v143 = vpop.trf.xlu0
    %v144 = vpop.trf.xlu0
    %v145 = vpop.trf.xlu0
    %v146 = vpop.trf.xlu0
    %v147 = vpack.c.bf16 %v100, %v99
    %v148 = vpack.c.bf16 %v102, %v101
    %v149 = vpack.c.bf16 %v104, %v103
    %v150 = vpack.c.bf16 %v106, %v105
    %v151 = vpack.c.bf16 %v108, %v107
    %v152 = vpack.c.bf16 %v110, %v109
    %v153 = vpack.c.bf16 %v112, %v111
    %v154 = vpack.c.bf16 %v114, %v113
    %v155 = vpack.c.bf16 %v132, %v131
    %v156 = vpack.c.bf16 %v134, %v133
    %v157 = vpack.c.bf16 %v136, %v135
    %v158 = vpack.c.bf16 %v138, %v137
    %v159 = vpack.c.bf16 %v140, %v139
    %v160 = vpack.c.bf16 %v142, %v141
    %v161 = vpack.c.bf16 %v144, %v143
    %v162 = vpack.c.bf16 %v146, %v145
    %v163 = vld [vmem:[%s1] sm:$0xff]
    %v164 = vld [vmem:[%s1 + $0x8] sm:$0xff]
    %v165 = vld [vmem:[%s1 + $0x10] sm:$0xff]
    %v166 = vld [vmem:[%s1 + $0x18] sm:$0xff]
    %v167 = vld [vmem:[%s1 + $0x20] sm:$0xff]
    %v168 = vld [vmem:[%s1 + $0x28] sm:$0xff]
    %v169 = vld [vmem:[%s1 + $0x30] sm:$0xff]
    %v170 = vld [vmem:[%s1 + $0x38] sm:$0xff]
    %v171 = vld [vmem:[%s1 + $0x40] sm:$0xff]
    %v172 = vld [vmem:[%s1 + $0x48] sm:$0xff]
    %v173 = vld [vmem:[%s1 + $0x50] sm:$0xff]
    %v174 = vld [vmem:[%s1 + $0x58] sm:$0xff]
    %v175 = vld [vmem:[%s1 + $0x60] sm:$0xff]
    %v176 = vld [vmem:[%s1 + $0x68] sm:$0xff]
    %v177 = vld [vmem:[%s1 + $0x70] sm:$0xff]
    %v178 = vld [vmem:[%s1 + $0x78] sm:$0xff]
    %v179 = vld [vmem:[%s1 + $0x80] sm:$0xff]
    %v180 = vld [vmem:[%s1 + $0x88] sm:$0xff]
    %v181 = vld [vmem:[%s1 + $0x90] sm:$0xff]
    %v182 = vld [vmem:[%s1 + $0x98] sm:$0xff]
    %v183 = vld [vmem:[%s1 + $0xa0] sm:$0xff]
    %v184 = vld [vmem:[%s1 + $0xa8] sm:$0xff]
    %v185 = vld [vmem:[%s1 + $0xb0] sm:$0xff]
    %v186 = vld [vmem:[%s1 + $0xb8] sm:$0xff]
    %v187 = vld [vmem:[%s1 + $0xc0] sm:$0xff]
    %v188 = vld [vmem:[%s1 + $0xc8] sm:$0xff]
    %v189 = vld [vmem:[%s1 + $0xd0] sm:$0xff]
    %v190 = vld [vmem:[%s1 + $0xd8] sm:$0xff]
    %v191 = vld [vmem:[%s1 + $0xe0] sm:$0xff]
    %v192 = vld [vmem:[%s1 + $0xe8] sm:$0xff]
    %v193 = vld [vmem:[%s1 + $0xf0] sm:$0xff]
    %v194 = vld [vmem:[%s1 + $0xf8] sm:$0xff]
    %v195 = vld [vmem:[%s1 + $0x100] sm:$0xff]
    %v196 = vld [vmem:[%s1 + $0x108] sm:$0xff]
    %v197 = vld [vmem:[%s1 + $0x110] sm:$0xff]
    %v198 = vld [vmem:[%s1 + $0x118] sm:$0xff]
    %v199 = vld [vmem:[%s1 + $0x120] sm:$0xff]
    %v200 = vld [vmem:[%s1 + $0x128] sm:$0xff]
    %v201 = vld [vmem:[%s1 + $0x130] sm:$0xff]
    %v202 = vld [vmem:[%s1 + $0x138] sm:$0xff]
    %v203 = vld [vmem:[%s1 + $0x140] sm:$0xff]
    %v204 = vld [vmem:[%s1 + $0x148] sm:$0xff]
    %v205 = vld [vmem:[%s1 + $0x150] sm:$0xff]
    %v206 = vld [vmem:[%s1 + $0x158] sm:$0xff]
    %v207 = vld [vmem:[%s1 + $0x160] sm:$0xff]
    %v208 = vld [vmem:[%s1 + $0x168] sm:$0xff]
    %v209 = vld [vmem:[%s1 + $0x170] sm:$0xff]
    %v210 = vld [vmem:[%s1 + $0x178] sm:$0xff]
    %v211 = vld [vmem:[%s1 + $0x180] sm:$0xff]
    %v212 = vld [vmem:[%s1 + $0x188] sm:$0xff]
    %v213 = vld [vmem:[%s1 + $0x190] sm:$0xff]
    %v214 = vld [vmem:[%s1 + $0x198] sm:$0xff]
    %v215 = vld [vmem:[%s1 + $0x1a0] sm:$0xff]
    %v216 = vld [vmem:[%s1 + $0x1a8] sm:$0xff]
    %v217 = vld [vmem:[%s1 + $0x1b0] sm:$0xff]
    %v218 = vld [vmem:[%s1 + $0x1b8] sm:$0xff]
    %v219 = vld [vmem:[%s1 + $0x1c0] sm:$0xff]
    %v220 = vld [vmem:[%s1 + $0x1c8] sm:$0xff]
    %v221 = vld [vmem:[%s1 + $0x1d0] sm:$0xff]
    %v222 = vld [vmem:[%s1 + $0x1d8] sm:$0xff]
    %v223 = vld [vmem:[%s1 + $0x1e0] sm:$0xff]
    %v224 = vld [vmem:[%s1 + $0x1e8] sm:$0xff]
    %v225 = vld [vmem:[%s1 + $0x1f0] sm:$0xff]
    %v226 = vld [vmem:[%s1 + $0x1f8] sm:$0xff]
    %v227 = vld [vmem:[%s1 + $0x200] sm:$0xff]
    %v228 = vld [vmem:[%s1 + $0x208] sm:$0xff]
    %v229 = vld [vmem:[%s1 + $0x210] sm:$0xff]
    %v230 = vld [vmem:[%s1 + $0x218] sm:$0xff]
    %v231 = vld [vmem:[%s1 + $0x220] sm:$0xff]
    %v232 = vld [vmem:[%s1 + $0x228] sm:$0xff]
    %v233 = vld [vmem:[%s1 + $0x230] sm:$0xff]
    %v234 = vld [vmem:[%s1 + $0x238] sm:$0xff]
    %v307 = vunpack.c.l.b16 %v163
    %v308 = vunpack.c.h.b16 %v163
    %v309 = vunpack.c.l.b16 %v164
    %v310 = vunpack.c.h.b16 %v164
    %v311 = vunpack.c.l.b16 %v165
    %v312 = vunpack.c.h.b16 %v165
    %v313 = vunpack.c.l.b16 %v166
    %v314 = vunpack.c.h.b16 %v166
    %v315 = vunpack.c.l.b16 %v167
    %v316 = vunpack.c.h.b16 %v167
    %v317 = vunpack.c.l.b16 %v168
    %v318 = vunpack.c.h.b16 %v168
    %v319 = vunpack.c.l.b16 %v169
    %v320 = vunpack.c.h.b16 %v169
    %v321 = vunpack.c.l.b16 %v170
    %v322 = vunpack.c.h.b16 %v170
    %v323 = vunpack.c.l.b16 %v171
    %v324 = vunpack.c.h.b16 %v171
    %v325 = vunpack.c.l.b16 %v172
    %v326 = vunpack.c.h.b16 %v172
    %v327 = vunpack.c.l.b16 %v173
    %v328 = vunpack.c.h.b16 %v173
    %v329 = vunpack.c.l.b16 %v174
    %v330 = vunpack.c.h.b16 %v174
    %v331 = vunpack.c.l.b16 %v175
    %v332 = vunpack.c.h.b16 %v175
    %v333 = vunpack.c.l.b16 %v176
    %v334 = vunpack.c.h.b16 %v176
    %v335 = vunpack.c.l.b16 %v177
    %v336 = vunpack.c.h.b16 %v177
    %v337 = vunpack.c.l.b16 %v178
    %v338 = vunpack.c.h.b16 %v178
    %v339 = vunpack.c.l.b16 %v179
    %v340 = vunpack.c.h.b16 %v179
    %v341 = vunpack.c.l.b16 %v180
    %v342 = vunpack.c.h.b16 %v180
    %v343 = vunpack.c.l.b16 %v181
    %v344 = vunpack.c.h.b16 %v181
    %v345 = vunpack.c.l.b16 %v182
    %v346 = vunpack.c.h.b16 %v182
    %v347 = vunpack.c.l.b16 %v183
    %v348 = vunpack.c.h.b16 %v183
    %v349 = vunpack.c.l.b16 %v184
    %v350 = vunpack.c.h.b16 %v184
    %v351 = vunpack.c.l.b16 %v185
    %v352 = vunpack.c.h.b16 %v185
    %v353 = vunpack.c.l.b16 %v186
    %v354 = vunpack.c.h.b16 %v186
    %v355 = vunpack.c.l.b16 %v187
    %v356 = vunpack.c.h.b16 %v187
    %v357 = vunpack.c.l.b16 %v188
    %v358 = vunpack.c.h.b16 %v188
    %v359 = vunpack.c.l.b16 %v189
    %v360 = vunpack.c.h.b16 %v189
    %v361 = vunpack.c.l.b16 %v190
    %v362 = vunpack.c.h.b16 %v190
    %v363 = vunpack.c.l.b16 %v191
    %v364 = vunpack.c.h.b16 %v191
    %v365 = vunpack.c.l.b16 %v192
    %v366 = vunpack.c.h.b16 %v192
    %v367 = vunpack.c.l.b16 %v193
    %v368 = vunpack.c.h.b16 %v193
    %v369 = vunpack.c.l.b16 %v194
    %v370 = vunpack.c.h.b16 %v194
    %v371 = vunpack.c.l.b16 %v195
    %v372 = vunpack.c.h.b16 %v195
    %v373 = vunpack.c.l.b16 %v196
    %v374 = vunpack.c.h.b16 %v196
    %v375 = vunpack.c.l.b16 %v197
    %v376 = vunpack.c.h.b16 %v197
    %v377 = vunpack.c.l.b16 %v198
    %v378 = vunpack.c.h.b16 %v198
    %v379 = vunpack.c.l.b16 %v199
    %v380 = vunpack.c.h.b16 %v199
    %v381 = vunpack.c.l.b16 %v200
    %v382 = vunpack.c.h.b16 %v200
    %v383 = vunpack.c.l.b16 %v201
    %v384 = vunpack.c.h.b16 %v201
    %v385 = vunpack.c.l.b16 %v202
    %v386 = vunpack.c.h.b16 %v202
    %v387 = vunpack.c.l.b16 %v203
    %v388 = vunpack.c.h.b16 %v203
    %v389 = vunpack.c.l.b16 %v204
    %v390 = vunpack.c.h.b16 %v204
    %v391 = vunpack.c.l.b16 %v205
    %v392 = vunpack.c.h.b16 %v205
    %v393 = vunpack.c.l.b16 %v206
    %v394 = vunpack.c.h.b16 %v206
    %v395 = vunpack.c.l.b16 %v207
    %v396 = vunpack.c.h.b16 %v207
    %v397 = vunpack.c.l.b16 %v208
    %v398 = vunpack.c.h.b16 %v208
    %v399 = vunpack.c.l.b16 %v209
    %v400 = vunpack.c.h.b16 %v209
    %v401 = vunpack.c.l.b16 %v210
    %v402 = vunpack.c.h.b16 %v210
    %v403 = vunpack.c.l.b16 %v211
    %v404 = vunpack.c.h.b16 %v211
    %v405 = vunpack.c.l.b16 %v212
    %v406 = vunpack.c.h.b16 %v212
    %v407 = vunpack.c.l.b16 %v213
    %v408 = vunpack.c.h.b16 %v213
    %v409 = vunpack.c.l.b16 %v214
    %v410 = vunpack.c.h.b16 %v214
    %v411 = vunpack.c.l.b16 %v215
    %v412 = vunpack.c.h.b16 %v215
    %v413 = vunpack.c.l.b16 %v216
    %v414 = vunpack.c.h.b16 %v216
    %v415 = vunpack.c.l.b16 %v217
    %v416 = vunpack.c.h.b16 %v217
    %v417 = vunpack.c.l.b16 %v218
    %v418 = vunpack.c.h.b16 %v218
    %v419 = vunpack.c.l.b16 %v219
    %v420 = vunpack.c.h.b16 %v219
    %v421 = vunpack.c.l.b16 %v220
    %v422 = vunpack.c.h.b16 %v220
    %v423 = vunpack.c.l.b16 %v221
    %v424 = vunpack.c.h.b16 %v221
    %v425 = vunpack.c.l.b16 %v222
    %v426 = vunpack.c.h.b16 %v222
    %v427 = vunpack.c.l.b16 %v223
    %v428 = vunpack.c.h.b16 %v223
    %v429 = vunpack.c.l.b16 %v224
    %v430 = vunpack.c.h.b16 %v224
    %v431 = vunpack.c.l.b16 %v225
    %v432 = vunpack.c.h.b16 %v225
    %v433 = vunpack.c.l.b16 %v226
    %v434 = vunpack.c.h.b16 %v226
    %v435 = vunpack.c.l.b16 %v227
    %v436 = vunpack.c.h.b16 %v227
    %v437 = vunpack.c.l.b16 %v228
    %v438 = vunpack.c.h.b16 %v228
    %v439 = vunpack.c.l.b16 %v229
    %v440 = vunpack.c.h.b16 %v229
    %v441 = vunpack.c.l.b16 %v230
    %v442 = vunpack.c.h.b16 %v230
    %v443 = vunpack.c.l.b16 %v231
    %v444 = vunpack.c.h.b16 %v231
    %v445 = vunpack.c.l.b16 %v232
    %v446 = vunpack.c.h.b16 %v232
    %v447 = vunpack.c.l.b16 %v233
    %v448 = vunpack.c.h.b16 %v233
    %v449 = vunpack.c.l.b16 %v234
    %v450 = vunpack.c.h.b16 %v234
    %v451 = vpack.c.b16 %v309, %v307
    %v452 = vpack.c.b16 %v310, %v308
    %v453 = vpack.c.b16 %v313, %v311
    %v454 = vpack.c.b16 %v314, %v312
    %v455 = vpack.c.b16 %v317, %v315
    %v456 = vpack.c.b16 %v318, %v316
    %v457 = vpack.c.b16 %v321, %v319
    %v458 = vpack.c.b16 %v322, %v320
    %v459 = vpack.c.b16 %v325, %v323
    %v460 = vpack.c.b16 %v326, %v324
    %v461 = vpack.c.b16 %v329, %v327
    %v462 = vpack.c.b16 %v330, %v328
    %v463 = vpack.c.b16 %v333, %v331
    %v464 = vpack.c.b16 %v334, %v332
    %v465 = vpack.c.b16 %v337, %v335
    %v466 = vpack.c.b16 %v338, %v336
    %v467 = vpack.c.b16 %v341, %v339
    %v468 = vpack.c.b16 %v342, %v340
    %v469 = vpack.c.b16 %v345, %v343
    %v470 = vpack.c.b16 %v346, %v344
    %v471 = vpack.c.b16 %v349, %v347
    %v472 = vpack.c.b16 %v350, %v348
    %v473 = vpack.c.b16 %v353, %v351
    %v474 = vpack.c.b16 %v354, %v352
    %v475 = vpack.c.b16 %v357, %v355
    %v476 = vpack.c.b16 %v358, %v356
    %v477 = vpack.c.b16 %v361, %v359
    %v478 = vpack.c.b16 %v362, %v360
    %v479 = vpack.c.b16 %v365, %v363
    %v480 = vpack.c.b16 %v366, %v364
    %v481 = vpack.c.b16 %v369, %v367
    %v482 = vpack.c.b16 %v370, %v368
    %v483 = vpack.c.b16 %v373, %v371
    %v484 = vpack.c.b16 %v374, %v372
    %v485 = vpack.c.b16 %v377, %v375
    %v486 = vpack.c.b16 %v378, %v376
    %v487 = vpack.c.b16 %v381, %v379
    %v488 = vpack.c.b16 %v382, %v380
    %v489 = vpack.c.b16 %v385, %v383
    %v490 = vpack.c.b16 %v386, %v384
    %v491 = vpack.c.b16 %v389, %v387
    %v492 = vpack.c.b16 %v390, %v388
    %v493 = vpack.c.b16 %v393, %v391
    %v494 = vpack.c.b16 %v394, %v392
    %v495 = vpack.c.b16 %v397, %v395
    %v496 = vpack.c.b16 %v398, %v396
    %v497 = vpack.c.b16 %v401, %v399
    %v498 = vpack.c.b16 %v402, %v400
    %v499 = vpack.c.b16 %v405, %v403
    %v500 = vpack.c.b16 %v406, %v404
    %v501 = vpack.c.b16 %v409, %v407
    %v502 = vpack.c.b16 %v410, %v408
    %v503 = vpack.c.b16 %v413, %v411
    %v504 = vpack.c.b16 %v414, %v412
    %v505 = vpack.c.b16 %v417, %v415
    %v506 = vpack.c.b16 %v418, %v416
    %v507 = vpack.c.b16 %v421, %v419
    %v508 = vpack.c.b16 %v422, %v420
    %v509 = vpack.c.b16 %v425, %v423
    %v510 = vpack.c.b16 %v426, %v424
    %v511 = vpack.c.b16 %v429, %v427
    %v512 = vpack.c.b16 %v430, %v428
    %v513 = vpack.c.b16 %v433, %v431
    %v514 = vpack.c.b16 %v434, %v432
    %v515 = vpack.c.b16 %v437, %v435
    %v516 = vpack.c.b16 %v438, %v436
    %v517 = vpack.c.b16 %v441, %v439
    %v518 = vpack.c.b16 %v442, %v440
    %v519 = vpack.c.b16 %v445, %v443
    %v520 = vpack.c.b16 %v446, %v444
    %v521 = vpack.c.b16 %v449, %v447
    %v522 = vpack.c.b16 %v450, %v448
    %595 = vmatprep.subr.bf16.mxu0 0
    %596 = vmatpush1.bf16.msra.mxu0 %v154
    %597 = vmatprep.subr.bf16.mxu0 0
    %598 = vmatpush1.bf16.msra.mxu0 %v153
    %599 = vmatprep.subr.bf16.mxu0 0
    %600 = vmatpush1.bf16.msra.mxu0 %v152
    %601 = vmatprep.subr.bf16.mxu0 0
    %602 = vmatpush1.bf16.msra.mxu0 %v151
    %603 = vmatprep.subr.bf16.mxu0 0
    %604 = vmatpush1.bf16.msra.mxu0 %v150
    %605 = vmatprep.subr.bf16.mxu0 0
    %606 = vmatpush1.bf16.msra.mxu0 %v149
    %607 = vmatprep.subr.bf16.mxu0 0
    %608 = vmatpush1.bf16.msra.mxu0 %v148
    %609 = vmatprep.subr.bf16.mxu0 0
    %610 = vmatpush1.bf16.msra.mxu0 %v147
    %611 = vmatprep.subr.bf16.mxu0 0
    %612 = vmatpush2.bf16.msra.mxu0 %v162
    %613 = vmatprep.subr.bf16.mxu0 0
    %614 = vmatpush2.bf16.msra.mxu0 %v161
    %615 = vmatprep.subr.bf16.mxu0 0
    %616 = vmatpush2.bf16.msra.mxu0 %v160
    %617 = vmatprep.subr.bf16.mxu0 0
    %618 = vmatpush2.bf16.msra.mxu0 %v159
    %619 = vmatprep.subr.bf16.mxu0 0
    %620 = vmatpush2.bf16.msra.mxu0 %v158
    %621 = vmatprep.subr.bf16.mxu0 0
    %622 = vmatpush2.bf16.msra.mxu0 %v157
    %623 = vmatprep.subr.bf16.mxu0 0
    %624 = vmatpush2.bf16.msra.mxu0 %v156
    %625 = vmatprep.subr.bf16.mxu0 0
    %626 = vmatpush2.bf16.msra.mxu0 %v155
    %627 = vmatprep.mubr.bf16.mxu0 %v452
    %628 = vmatmul.mubr.bf16.gmra.mxu0 %v451
    %v629 = vpop.f32.mrf.mxu0
    %v630 = vadd.f32 0.0, %v629
    %v631 = vpop.f32.mrf.mxu0
    %v632 = vpop.f32.mrf.mxu0
    %v633 = vadd.f32 0.0, %v632
    %v634 = vpop.f32.mrf.mxu0
    %635 = vmatprep.mubr.bf16.mxu0 %v454
    %636 = vmatmul.mubr.bf16.gmra.mxu0 %v453
    %v637 = vpop.f32.mrf.mxu0
    %v638 = vadd.f32 0.0, %v637
    %v639 = vpop.f32.mrf.mxu0
    %v640 = vpop.f32.mrf.mxu0
    %v641 = vadd.f32 0.0, %v640
    %v642 = vpop.f32.mrf.mxu0
    %643 = vmatprep.mubr.bf16.mxu0 %v456
    %644 = vmatmul.mubr.bf16.gmra.mxu0 %v455
    %v645 = vpop.f32.mrf.mxu0
    %v646 = vadd.f32 0.0, %v645
    %v647 = vpop.f32.mrf.mxu0
    %v648 = vpop.f32.mrf.mxu0
    %v649 = vadd.f32 0.0, %v648
    %v650 = vpop.f32.mrf.mxu0
    %651 = vmatprep.mubr.bf16.mxu0 %v458
    %652 = vmatmul.mubr.bf16.gmra.mxu0 %v457
    %v653 = vpop.f32.mrf.mxu0
    %v654 = vadd.f32 0.0, %v653
    %v655 = vpop.f32.mrf.mxu0
    %v656 = vpop.f32.mrf.mxu0
    %v657 = vadd.f32 0.0, %v656
    %v658 = vpop.f32.mrf.mxu0
    %659 = vmatprep.mubr.bf16.mxu0 %v460
    %660 = vmatmul.mubr.bf16.gmra.mxu0 %v459
    %v661 = vpop.f32.mrf.mxu0
    %v662 = vadd.f32 0.0, %v661
    %v663 = vpop.f32.mrf.mxu0
    %v664 = vpop.f32.mrf.mxu0
    %v665 = vadd.f32 0.0, %v664
    %v666 = vpop.f32.mrf.mxu0
    %667 = vmatprep.mubr.bf16.mxu0 %v462
    %668 = vmatmul.mubr.bf16.gmra.mxu0 %v461
    %v669 = vpop.f32.mrf.mxu0
    %v670 = vadd.f32 0.0, %v669
    %v671 = vpop.f32.mrf.mxu0
    %v672 = vpop.f32.mrf.mxu0
    %v673 = vadd.f32 0.0, %v672
    %v674 = vpop.f32.mrf.mxu0
    %675 = vmatprep.mubr.bf16.mxu0 %v464
    %676 = vmatmul.mubr.bf16.gmra.mxu0 %v463
    %v677 = vpop.f32.mrf.mxu0
    %v678 = vadd.f32 0.0, %v677
    %v679 = vpop.f32.mrf.mxu0
    %v680 = vpop.f32.mrf.mxu0
    %v681 = vadd.f32 0.0, %v680
    %v682 = vpop.f32.mrf.mxu0
    %683 = vmatprep.mubr.bf16.mxu0 %v466
    %684 = vmatmul.mubr.bf16.gmra.mxu0 %v465
    %v685 = vpop.f32.mrf.mxu0
    %v686 = vadd.f32 0.0, %v685
    %v687 = vpop.f32.mrf.mxu0
    %v688 = vpop.f32.mrf.mxu0
    %v689 = vadd.f32 0.0, %v688
    %v690 = vpop.f32.mrf.mxu0
    %691 = vmatprep.mubr.bf16.mxu0 %v468
    %692 = vmatmul.mubr.bf16.gmra.mxu0 %v467
    %v693 = vpop.f32.mrf.mxu0
    %v694 = vadd.f32 0.0, %v693
    %v695 = vpop.f32.mrf.mxu0
    %v696 = vpop.f32.mrf.mxu0
    %v697 = vadd.f32 0.0, %v696
    %v698 = vpop.f32.mrf.mxu0
    %699 = vmatprep.mubr.bf16.mxu0 %v470
    %700 = vmatmul.mubr.bf16.gmra.mxu0 %v469
    %v701 = vpop.f32.mrf.mxu0
    %v702 = vadd.f32 0.0, %v701
    %v703 = vpop.f32.mrf.mxu0
    %v704 = vpop.f32.mrf.mxu0
    %v705 = vadd.f32 0.0, %v704
    %v706 = vpop.f32.mrf.mxu0
    %707 = vmatprep.mubr.bf16.mxu0 %v472
    %708 = vmatmul.mubr.bf16.gmra.mxu0 %v471
    %v709 = vpop.f32.mrf.mxu0
    %v710 = vadd.f32 0.0, %v709
    %v711 = vpop.f32.mrf.mxu0
    %v712 = vpop.f32.mrf.mxu0
    %v713 = vadd.f32 0.0, %v712
    %v714 = vpop.f32.mrf.mxu0
    %715 = vmatprep.mubr.bf16.mxu0 %v474
    %716 = vmatmul.mubr.bf16.gmra.mxu0 %v473
    %v717 = vpop.f32.mrf.mxu0
    %v718 = vadd.f32 0.0, %v717
    %v719 = vpop.f32.mrf.mxu0
    %v720 = vpop.f32.mrf.mxu0
    %v721 = vadd.f32 0.0, %v720
    %v722 = vpop.f32.mrf.mxu0
    %723 = vmatprep.mubr.bf16.mxu0 %v476
    %724 = vmatmul.mubr.bf16.gmra.mxu0 %v475
    %v725 = vpop.f32.mrf.mxu0
    %v726 = vadd.f32 0.0, %v725
    %v727 = vpop.f32.mrf.mxu0
    %v728 = vpop.f32.mrf.mxu0
    %v729 = vadd.f32 0.0, %v728
    %v730 = vpop.f32.mrf.mxu0
    %731 = vmatprep.mubr.bf16.mxu0 %v478
    %732 = vmatmul.mubr.bf16.gmra.mxu0 %v477
    %v733 = vpop.f32.mrf.mxu0
    %v734 = vadd.f32 0.0, %v733
    %v735 = vpop.f32.mrf.mxu0
    %v736 = vpop.f32.mrf.mxu0
    %v737 = vadd.f32 0.0, %v736
    %v738 = vpop.f32.mrf.mxu0
    %739 = vmatprep.mubr.bf16.mxu0 %v480
    %740 = vmatmul.mubr.bf16.gmra.mxu0 %v479
    %v741 = vpop.f32.mrf.mxu0
    %v742 = vadd.f32 0.0, %v741
    %v743 = vpop.f32.mrf.mxu0
    %v744 = vpop.f32.mrf.mxu0
    %v745 = vadd.f32 0.0, %v744
    %v746 = vpop.f32.mrf.mxu0
    %747 = vmatprep.mubr.bf16.mxu0 %v482
    %748 = vmatmul.mubr.bf16.gmra.mxu0 %v481
    %v749 = vpop.f32.mrf.mxu0
    %v750 = vadd.f32 0.0, %v749
    %v751 = vpop.f32.mrf.mxu0
    %v752 = vpop.f32.mrf.mxu0
    %v753 = vadd.f32 0.0, %v752
    %v754 = vpop.f32.mrf.mxu0
    %755 = vmatprep.mubr.bf16.mxu0 %v484
    %756 = vmatmul.mubr.bf16.gmra.mxu0 %v483
    %v757 = vpop.f32.mrf.mxu0
    %v758 = vadd.f32 0.0, %v757
    %v759 = vpop.f32.mrf.mxu0
    %v760 = vpop.f32.mrf.mxu0
    %v761 = vadd.f32 0.0, %v760
    %v762 = vpop.f32.mrf.mxu0
    %763 = vmatprep.mubr.bf16.mxu0 %v486
    %764 = vmatmul.mubr.bf16.gmra.mxu0 %v485
    %v765 = vpop.f32.mrf.mxu0
    %v766 = vadd.f32 0.0, %v765
    %v767 = vpop.f32.mrf.mxu0
    %v768 = vpop.f32.mrf.mxu0
    %v769 = vadd.f32 0.0, %v768
    %v770 = vpop.f32.mrf.mxu0
    %771 = vmatprep.mubr.bf16.mxu0 %v488
    %772 = vmatmul.mubr.bf16.gmra.mxu0 %v487
    %v773 = vpop.f32.mrf.mxu0
    %v774 = vadd.f32 0.0, %v773
    %v775 = vpop.f32.mrf.mxu0
    %v776 = vpop.f32.mrf.mxu0
    %v777 = vadd.f32 0.0, %v776
    %v778 = vpop.f32.mrf.mxu0
    %779 = vmatprep.mubr.bf16.mxu0 %v490
    %780 = vmatmul.mubr.bf16.gmra.mxu0 %v489
    %v781 = vpop.f32.mrf.mxu0
    %v782 = vadd.f32 0.0, %v781
    %v783 = vpop.f32.mrf.mxu0
    %v784 = vpop.f32.mrf.mxu0
    %v785 = vadd.f32 0.0, %v784
    %v786 = vpop.f32.mrf.mxu0
    %787 = vmatprep.mubr.bf16.mxu0 %v492
    %788 = vmatmul.mubr.bf16.gmra.mxu0 %v491
    %v789 = vpop.f32.mrf.mxu0
    %v790 = vadd.f32 0.0, %v789
    %v791 = vpop.f32.mrf.mxu0
    %v792 = vpop.f32.mrf.mxu0
    %v793 = vadd.f32 0.0, %v792
    %v794 = vpop.f32.mrf.mxu0
    %795 = vmatprep.mubr.bf16.mxu0 %v494
    %796 = vmatmul.mubr.bf16.gmra.mxu0 %v493
    %v797 = vpop.f32.mrf.mxu0
    %v798 = vadd.f32 0.0, %v797
    %v799 = vpop.f32.mrf.mxu0
    %v800 = vpop.f32.mrf.mxu0
    %v801 = vadd.f32 0.0, %v800
    %v802 = vpop.f32.mrf.mxu0
    %803 = vmatprep.mubr.bf16.mxu0 %v496
    %804 = vmatmul.mubr.bf16.gmra.mxu0 %v495
    %v805 = vpop.f32.mrf.mxu0
    %v806 = vadd.f32 0.0, %v805
    %v807 = vpop.f32.mrf.mxu0
    %v808 = vpop.f32.mrf.mxu0
    %v809 = vadd.f32 0.0, %v808
    %v810 = vpop.f32.mrf.mxu0
    %811 = vmatprep.mubr.bf16.mxu0 %v498
    %812 = vmatmul.mubr.bf16.gmra.mxu0 %v497
    %v813 = vpop.f32.mrf.mxu0
    %v814 = vadd.f32 0.0, %v813
    %v815 = vpop.f32.mrf.mxu0
    %v816 = vpop.f32.mrf.mxu0
    %v817 = vadd.f32 0.0, %v816
    %v818 = vpop.f32.mrf.mxu0
    %819 = vmatprep.mubr.bf16.mxu0 %v500
    %820 = vmatmul.mubr.bf16.gmra.mxu0 %v499
    %v821 = vpop.f32.mrf.mxu0
    %v822 = vadd.f32 0.0, %v821
    %v823 = vpop.f32.mrf.mxu0
    %v824 = vpop.f32.mrf.mxu0
    %v825 = vadd.f32 0.0, %v824
    %v826 = vpop.f32.mrf.mxu0
    %827 = vmatprep.mubr.bf16.mxu0 %v502
    %828 = vmatmul.mubr.bf16.gmra.mxu0 %v501
    %v829 = vpop.f32.mrf.mxu0
    %v830 = vadd.f32 0.0, %v829
    %v831 = vpop.f32.mrf.mxu0
    %v832 = vpop.f32.mrf.mxu0
    %v833 = vadd.f32 0.0, %v832
    %v834 = vpop.f32.mrf.mxu0
    %835 = vmatprep.mubr.bf16.mxu0 %v504
    %836 = vmatmul.mubr.bf16.gmra.mxu0 %v503
    %v837 = vpop.f32.mrf.mxu0
    %v838 = vadd.f32 0.0, %v837
    %v839 = vpop.f32.mrf.mxu0
    %v840 = vpop.f32.mrf.mxu0
    %v841 = vadd.f32 0.0, %v840
    %v842 = vpop.f32.mrf.mxu0
    %843 = vmatprep.mubr.bf16.mxu0 %v506
    %844 = vmatmul.mubr.bf16.gmra.mxu0 %v505
    %v845 = vpop.f32.mrf.mxu0
    %v846 = vadd.f32 0.0, %v845
    %v847 = vpop.f32.mrf.mxu0
    %v848 = vpop.f32.mrf.mxu0
    %v849 = vadd.f32 0.0, %v848
    %v850 = vpop.f32.mrf.mxu0
    %851 = vmatprep.mubr.bf16.mxu0 %v508
    %852 = vmatmul.mubr.bf16.gmra.mxu0 %v507
    %v853 = vpop.f32.mrf.mxu0
    %v854 = vadd.f32 0.0, %v853
    %v855 = vpop.f32.mrf.mxu0
    %v856 = vpop.f32.mrf.mxu0
    %v857 = vadd.f32 0.0, %v856
    %v858 = vpop.f32.mrf.mxu0
    %859 = vmatprep.mubr.bf16.mxu0 %v510
    %860 = vmatmul.mubr.bf16.gmra.mxu0 %v509
    %v861 = vpop.f32.mrf.mxu0
    %v862 = vadd.f32 0.0, %v861
    %v863 = vpop.f32.mrf.mxu0
    %v864 = vpop.f32.mrf.mxu0
    %v865 = vadd.f32 0.0, %v864
    %v866 = vpop.f32.mrf.mxu0
    %867 = vmatprep.mubr.bf16.mxu0 %v512
    %868 = vmatmul.mubr.bf16.gmra.mxu0 %v511
    %v869 = vpop.f32.mrf.mxu0
    %v870 = vadd.f32 0.0, %v869
    %v871 = vpop.f32.mrf.mxu0
    %v872 = vpop.f32.mrf.mxu0
    %v873 = vadd.f32 0.0, %v872
    %v874 = vpop.f32.mrf.mxu0
    %875 = vmatprep.mubr.bf16.mxu0 %v514
    %876 = vmatmul.mubr.bf16.gmra.mxu0 %v513
    %v877 = vpop.f32.mrf.mxu0
    %v878 = vadd.f32 0.0, %v877
    %v879 = vpop.f32.mrf.mxu0
    %v880 = vpop.f32.mrf.mxu0
    %v881 = vadd.f32 0.0, %v880
    %v882 = vpop.f32.mrf.mxu0
    %883 = vmatprep.mubr.bf16.mxu0 %v516
    %884 = vmatmul.mubr.bf16.gmra.mxu0 %v515
    %v885 = vpop.f32.mrf.mxu0
    %v886 = vadd.f32 0.0, %v885
    %v887 = vpop.f32.mrf.mxu0
    %v888 = vpop.f32.mrf.mxu0
    %v889 = vadd.f32 0.0, %v888
    %v890 = vpop.f32.mrf.mxu0
    %891 = vmatprep.mubr.bf16.mxu0 %v518
    %892 = vmatmul.mubr.bf16.gmra.mxu0 %v517
    %v893 = vpop.f32.mrf.mxu0
    %v894 = vadd.f32 0.0, %v893
    %v895 = vpop.f32.mrf.mxu0
    %v896 = vpop.f32.mrf.mxu0
    %v897 = vadd.f32 0.0, %v896
    %v898 = vpop.f32.mrf.mxu0
    %899 = vmatprep.mubr.bf16.mxu0 %v520
    %900 = vmatmul.mubr.bf16.gmra.mxu0 %v519
    %v901 = vpop.f32.mrf.mxu0
    %v902 = vadd.f32 0.0, %v901
    %v903 = vpop.f32.mrf.mxu0
    %v904 = vpop.f32.mrf.mxu0
    %v905 = vadd.f32 0.0, %v904
    %v906 = vpop.f32.mrf.mxu0
    %907 = vmatprep.mubr.bf16.mxu0 %v522
    %908 = vmatmul.mubr.bf16.gmra.mxu0 %v521
    %v909 = vpop.f32.mrf.mxu0
    %v910 = vadd.f32 0.0, %v909
    %v911 = vpop.f32.mrf.mxu0
    %v912 = vpop.f32.mrf.mxu0
    %v913 = vadd.f32 0.0, %v912
    %v914 = vpop.f32.mrf.mxu0
    %915 = vdwg.mxu0
    %v916 = vpack.c.bf16 %v633, %v630
    %v917 = vpack.c.bf16 %v641, %v638
    %v918 = vpack.c.bf16 %v649, %v646
    %v919 = vpack.c.bf16 %v657, %v654
    %v920 = vpack.c.bf16 %v665, %v662
    %v921 = vpack.c.bf16 %v673, %v670
    %v922 = vpack.c.bf16 %v681, %v678
    %v923 = vpack.c.bf16 %v689, %v686
    %v924 = vpack.c.bf16 %v697, %v694
    %v925 = vpack.c.bf16 %v705, %v702
    %v926 = vpack.c.bf16 %v713, %v710
    %v927 = vpack.c.bf16 %v721, %v718
    %v928 = vpack.c.bf16 %v729, %v726
    %v929 = vpack.c.bf16 %v737, %v734
    %v930 = vpack.c.bf16 %v745, %v742
    %v931 = vpack.c.bf16 %v753, %v750
    %v932 = vpack.c.bf16 %v761, %v758
    %v933 = vpack.c.bf16 %v769, %v766
    %v934 = vpack.c.bf16 %v777, %v774
    %v935 = vpack.c.bf16 %v785, %v782
    %v936 = vpack.c.bf16 %v793, %v790
    %v937 = vpack.c.bf16 %v801, %v798
    %v938 = vpack.c.bf16 %v809, %v806
    %v939 = vpack.c.bf16 %v817, %v814
    %v940 = vpack.c.bf16 %v825, %v822
    %v941 = vpack.c.bf16 %v833, %v830
    %v942 = vpack.c.bf16 %v841, %v838
    %v943 = vpack.c.bf16 %v849, %v846
    %v944 = vpack.c.bf16 %v857, %v854
    %v945 = vpack.c.bf16 %v865, %v862
    %v946 = vpack.c.bf16 %v873, %v870
    %v947 = vpack.c.bf16 %v881, %v878
    %v948 = vpack.c.bf16 %v889, %v886
    %v949 = vpack.c.bf16 %v897, %v894
    %v950 = vpack.c.bf16 %v905, %v902
    %v951 = vpack.c.bf16 %v913, %v910
    %v952 = vld [vmem:[%s2] sm:$0xf]
    %s953 = scalar_lea.vmem %s2, 4
    %v954 = vld [vmem:[%s953] sm:$0xf]
    %vm955 = vcmask 64512
    %v957 = vsel %vm955, %v920, 0
    %v960 = vsel %vm955, %v921, 0
    %v963 = vsel %vm955, %v922, 0
    %v966 = vsel %vm955, %v923, 0
    %vm968 = vcmask 1043456
    %v970 = vsel %vm968, %v954, 0
    %972 = vmatprep.subr.bf16.mxu0 0
    %973 = vmatpush1.bf16.msra.mxu0 0
    %974 = vmatprep.subr.bf16.mxu0 0
    %975 = vmatpush1.bf16.msra.mxu0 0
    %976 = vmatprep.subr.bf16.mxu0 0
    %977 = vmatpush1.bf16.msra.mxu0 0
    %978 = vmatprep.subr.bf16.mxu0 0
    %979 = vmatpush1.bf16.msra.mxu0 0
    %980 = vmatprep.subr.bf16.mxu0 0
    %981 = vmatpush1.bf16.msra.mxu0 0
    %982 = vmatprep.subr.bf16.mxu0 0
    %983 = vmatpush1.bf16.msra.mxu0 0
    %984 = vmatprep.subr.bf16.mxu0 0
    %985 = vmatpush1.bf16.msra.mxu0 0
    %986 = vmatprep.subr.bf16.mxu0 0
    %987 = vmatpush1.bf16.msra.mxu0 %v970
    %988 = vmatprep.subr.bf16.mxu0 0
    %989 = vmatpush2.bf16.msra.mxu0 0
    %990 = vmatprep.subr.bf16.mxu0 0
    %991 = vmatpush2.bf16.msra.mxu0 0
    %992 = vmatprep.subr.bf16.mxu0 0
    %993 = vmatpush2.bf16.msra.mxu0 0
    %994 = vmatprep.subr.bf16.mxu0 0
    %995 = vmatpush2.bf16.msra.mxu0 0
    %996 = vmatprep.subr.bf16.mxu0 0
    %997 = vmatpush2.bf16.msra.mxu0 0
    %998 = vmatprep.subr.bf16.mxu0 0
    %999 = vmatpush2.bf16.msra.mxu0 0
    %1000 = vmatprep.subr.bf16.mxu0 0
    %1001 = vmatpush2.bf16.msra.mxu0 0
    %1002 = vmatprep.subr.bf16.mxu0 0
    %1003 = vmatpush2.bf16.msra.mxu0 0
    %1004 = vmatprep.mubr.bf16.mxu0 0
    %1005 = vmatmul.mubr.bf16.gmra.mxu0 %v957
    %v1006 = vpop.f32.mrf.mxu0
    %v1007 = vadd.f32 0.0, %v1006
    %v1008 = vpop.f32.mrf.mxu0
    %v1009 = vpop.f32.mrf.mxu0
    %v1010 = vadd.f32 0.0, %v1009
    %v1011 = vpop.f32.mrf.mxu0
    %1012 = vmatprep.mubr.bf16.mxu0 0
    %1013 = vmatmul.mubr.bf16.gmra.mxu0 %v960
    %v1014 = vpop.f32.mrf.mxu0
    %v1015 = vadd.f32 0.0, %v1014
    %v1016 = vpop.f32.mrf.mxu0
    %v1017 = vpop.f32.mrf.mxu0
    %v1018 = vadd.f32 0.0, %v1017
    %v1019 = vpop.f32.mrf.mxu0
    %1020 = vmatprep.mubr.bf16.mxu0 0
    %1021 = vmatmul.mubr.bf16.gmra.mxu0 %v963
    %v1022 = vpop.f32.mrf.mxu0
    %v1023 = vadd.f32 0.0, %v1022
    %v1024 = vpop.f32.mrf.mxu0
    %v1025 = vpop.f32.mrf.mxu0
    %v1026 = vadd.f32 0.0, %v1025
    %v1027 = vpop.f32.mrf.mxu0
    %1028 = vmatprep.mubr.bf16.mxu0 0
    %1029 = vmatmul.mubr.bf16.gmra.mxu0 %v966
    %v1030 = vpop.f32.mrf.mxu0
    %v1031 = vadd.f32 0.0, %v1030
    %v1032 = vpop.f32.mrf.mxu0
    %v1033 = vpop.f32.mrf.mxu0
    %v1034 = vadd.f32 0.0, %v1033
    %v1035 = vpop.f32.mrf.mxu0
    %1036 = vdwg.mxu0
    %v1038 = vsel %vm955, %v916, 0
    %v1041 = vsel %vm955, %v917, 0
    %v1044 = vsel %vm955, %v918, 0
    %v1047 = vsel %vm955, %v919, 0
    %v1050 = vsel %vm968, %v952, 0
    %1052 = vmatprep.subr.bf16.mxu0 0
    %1053 = vmatpush1.bf16.msra.mxu0 0
    %1054 = vmatprep.subr.bf16.mxu0 0
    %1055 = vmatpush1.bf16.msra.mxu0 0
    %1056 = vmatprep.subr.bf16.mxu0 0
    %1057 = vmatpush1.bf16.msra.mxu0 0
    %1058 = vmatprep.subr.bf16.mxu0 0
    %1059 = vmatpush1.bf16.msra.mxu0 0
    %1060 = vmatprep.subr.bf16.mxu0 0
    %1061 = vmatpush1.bf16.msra.mxu0 0
    %1062 = vmatprep.subr.bf16.mxu0 0
    %1063 = vmatpush1.bf16.msra.mxu0 0
    %1064 = vmatprep.subr.bf16.mxu0 0
    %1065 = vmatpush1.bf16.msra.mxu0 0
    %1066 = vmatprep.subr.bf16.mxu0 0
    %1067 = vmatpush1.bf16.msra.mxu0 %v1050
    %1068 = vmatprep.subr.bf16.mxu0 0
    %1069 = vmatpush2.bf16.msra.mxu0 0
    %1070 = vmatprep.subr.bf16.mxu0 0
    %1071 = vmatpush2.bf16.msra.mxu0 0
    %1072 = vmatprep.subr.bf16.mxu0 0
    %1073 = vmatpush2.bf16.msra.mxu0 0
    %1074 = vmatprep.subr.bf16.mxu0 0
    %1075 = vmatpush2.bf16.msra.mxu0 0
    %1076 = vmatprep.subr.bf16.mxu0 0
    %1077 = vmatpush2.bf16.msra.mxu0 0
    %1078 = vmatprep.subr.bf16.mxu0 0
    %1079 = vmatpush2.bf16.msra.mxu0 0
    %1080 = vmatprep.subr.bf16.mxu0 0
    %1081 = vmatpush2.bf16.msra.mxu0 0
    %1082 = vmatprep.subr.bf16.mxu0 0
    %1083 = vmatpush2.bf16.msra.mxu0 0
    %1084 = vmatprep.mubr.bf16.mxu0 0
    %1085 = vmatmul.mubr.bf16.gmra.mxu0 %v1038
    %v1086 = vpop.f32.mrf.mxu0
    %v1087 = vadd.f32 %v1007, %v1086
    %v1088 = vpop.f32.mrf.mxu0
    %v1089 = vpop.f32.mrf.mxu0
    %v1090 = vadd.f32 %v1010, %v1089
    %v1091 = vpop.f32.mrf.mxu0
    %1092 = vmatprep.mubr.bf16.mxu0 0
    %1093 = vmatmul.mubr.bf16.gmra.mxu0 %v1041
    %v1094 = vpop.f32.mrf.mxu0
    %v1095 = vadd.f32 %v1015, %v1094
    %v1096 = vpop.f32.mrf.mxu0
    %v1097 = vpop.f32.mrf.mxu0
    %v1098 = vadd.f32 %v1018, %v1097
    %v1099 = vpop.f32.mrf.mxu0
    %1100 = vmatprep.mubr.bf16.mxu0 0
    %1101 = vmatmul.mubr.bf16.gmra.mxu0 %v1044
    %v1102 = vpop.f32.mrf.mxu0
    %v1103 = vadd.f32 %v1023, %v1102
    %v1104 = vpop.f32.mrf.mxu0
    %v1105 = vpop.f32.mrf.mxu0
    %v1106 = vadd.f32 %v1026, %v1105
    %v1107 = vpop.f32.mrf.mxu0
    %1108 = vmatprep.mubr.bf16.mxu0 0
    %1109 = vmatmul.mubr.bf16.gmra.mxu0 %v1047
    %v1110 = vpop.f32.mrf.mxu0
    %v1111 = vadd.f32 %v1031, %v1110
    %v1112 = vpop.f32.mrf.mxu0
    %v1113 = vpop.f32.mrf.mxu0
    %v1114 = vadd.f32 %v1034, %v1113
    %v1115 = vpop.f32.mrf.mxu0
    %1116 = vdwg.mxu0
    %s1117 = scalar_lea.vmem %s2, 8
    %v1118 = vld [vmem:[%s1117] sm:$0xf]
    %v1120 = vsel %vm955, %v924, 0
    %v1123 = vsel %vm955, %v925, 0
    %v1126 = vsel %vm955, %v926, 0
    %v1129 = vsel %vm955, %v927, 0
    %v1132 = vsel %vm968, %v1118, 0
    %1134 = vmatprep.subr.bf16.mxu0 0
    %1135 = vmatpush1.bf16.msra.mxu0 0
    %1136 = vmatprep.subr.bf16.mxu0 0
    %1137 = vmatpush1.bf16.msra.mxu0 0
    %1138 = vmatprep.subr.bf16.mxu0 0
    %1139 = vmatpush1.bf16.msra.mxu0 0
    %1140 = vmatprep.subr.bf16.mxu0 0
    %1141 = vmatpush1.bf16.msra.mxu0 0
    %1142 = vmatprep.subr.bf16.mxu0 0
    %1143 = vmatpush1.bf16.msra.mxu0 0
    %1144 = vmatprep.subr.bf16.mxu0 0
    %1145 = vmatpush1.bf16.msra.mxu0 0
    %1146 = vmatprep.subr.bf16.mxu0 0
    %1147 = vmatpush1.bf16.msra.mxu0 0
    %1148 = vmatprep.subr.bf16.mxu0 0
    %1149 = vmatpush1.bf16.msra.mxu0 %v1132
    %1150 = vmatprep.subr.bf16.mxu0 0
    %1151 = vmatpush2.bf16.msra.mxu0 0
    %1152 = vmatprep.subr.bf16.mxu0 0
    %1153 = vmatpush2.bf16.msra.mxu0 0
    %1154 = vmatprep.subr.bf16.mxu0 0
    %1155 = vmatpush2.bf16.msra.mxu0 0
    %1156 = vmatprep.subr.bf16.mxu0 0
    %1157 = vmatpush2.bf16.msra.mxu0 0
    %1158 = vmatprep.subr.bf16.mxu0 0
    %1159 = vmatpush2.bf16.msra.mxu0 0
    %1160 = vmatprep.subr.bf16.mxu0 0
    %1161 = vmatpush2.bf16.msra.mxu0 0
    %1162 = vmatprep.subr.bf16.mxu0 0
    %1163 = vmatpush2.bf16.msra.mxu0 0
    %1164 = vmatprep.subr.bf16.mxu0 0
    %1165 = vmatpush2.bf16.msra.mxu0 0
    %1166 = vmatprep.mubr.bf16.mxu0 0
    %1167 = vmatmul.mubr.bf16.gmra.mxu0 %v1120
    %v1168 = vpop.f32.mrf.mxu0
    %v1169 = vadd.f32 0.0, %v1168
    %v1170 = vpop.f32.mrf.mxu0
    %v1171 = vpop.f32.mrf.mxu0
    %v1172 = vadd.f32 0.0, %v1171
    %v1173 = vpop.f32.mrf.mxu0
    %1174 = vmatprep.mubr.bf16.mxu0 0
    %1175 = vmatmul.mubr.bf16.gmra.mxu0 %v1123
    %v1176 = vpop.f32.mrf.mxu0
    %v1177 = vadd.f32 0.0, %v1176
    %v1178 = vpop.f32.mrf.mxu0
    %v1179 = vpop.f32.mrf.mxu0
    %v1180 = vadd.f32 0.0, %v1179
    %v1181 = vpop.f32.mrf.mxu0
    %1182 = vmatprep.mubr.bf16.mxu0 0
    %1183 = vmatmul.mubr.bf16.gmra.mxu0 %v1126
    %v1184 = vpop.f32.mrf.mxu0
    %v1185 = vadd.f32 0.0, %v1184
    %v1186 = vpop.f32.mrf.mxu0
    %v1187 = vpop.f32.mrf.mxu0
    %v1188 = vadd.f32 0.0, %v1187
    %v1189 = vpop.f32.mrf.mxu0
    %1190 = vmatprep.mubr.bf16.mxu0 0
    %1191 = vmatmul.mubr.bf16.gmra.mxu0 %v1129
    %v1192 = vpop.f32.mrf.mxu0
    %v1193 = vadd.f32 0.0, %v1192
    %v1194 = vpop.f32.mrf.mxu0
    %v1195 = vpop.f32.mrf.mxu0
    %v1196 = vadd.f32 0.0, %v1195
    %v1197 = vpop.f32.mrf.mxu0
    %1198 = vdwg.mxu0
    %v1199 = vadd.f32 %v1087, %v1169
    %v1200 = vadd.f32 %v1090, %v1172
    %v1201 = vadd.f32 %v1095, %v1177
    %v1202 = vadd.f32 %v1098, %v1180
    %v1203 = vadd.f32 %v1103, %v1185
    %v1204 = vadd.f32 %v1106, %v1188
    %v1205 = vadd.f32 %v1111, %v1193
    %v1206 = vadd.f32 %v1114, %v1196
    %s1207 = scalar_lea.vmem %s2, 12
    %v1208 = vld [vmem:[%s1207] sm:$0xf]
    %v1210 = vsel %vm955, %v928, 0
    %v1213 = vsel %vm955, %v929, 0
    %v1216 = vsel %vm955, %v930, 0
    %v1219 = vsel %vm955, %v931, 0
    %v1222 = vsel %vm968, %v1208, 0
    %1224 = vmatprep.subr.bf16.mxu0 0
    %1225 = vmatpush1.bf16.msra.mxu0 0
    %1226 = vmatprep.subr.bf16.mxu0 0
    %1227 = vmatpush1.bf16.msra.mxu0 0
    %1228 = vmatprep.subr.bf16.mxu0 0
    %1229 = vmatpush1.bf16.msra.mxu0 0
    %1230 = vmatprep.subr.bf16.mxu0 0
    %1231 = vmatpush1.bf16.msra.mxu0 0
    %1232 = vmatprep.subr.bf16.mxu0 0
    %1233 = vmatpush1.bf16.msra.mxu0 0
    %1234 = vmatprep.subr.bf16.mxu0 0
    %1235 = vmatpush1.bf16.msra.mxu0 0
    %1236 = vmatprep.subr.bf16.mxu0 0
    %1237 = vmatpush1.bf16.msra.mxu0 0
    %1238 = vmatprep.subr.bf16.mxu0 0
    %1239 = vmatpush1.bf16.msra.mxu0 %v1222
    %1240 = vmatprep.subr.bf16.mxu0 0
    %1241 = vmatpush2.bf16.msra.mxu0 0
    %1242 = vmatprep.subr.bf16.mxu0 0
    %1243 = vmatpush2.bf16.msra.mxu0 0
    %1244 = vmatprep.subr.bf16.mxu0 0
    %1245 = vmatpush2.bf16.msra.mxu0 0
    %1246 = vmatprep.subr.bf16.mxu0 0
    %1247 = vmatpush2.bf16.msra.mxu0 0
    %1248 = vmatprep.subr.bf16.mxu0 0
    %1249 = vmatpush2.bf16.msra.mxu0 0
    %1250 = vmatprep.subr.bf16.mxu0 0
    %1251 = vmatpush2.bf16.msra.mxu0 0
    %1252 = vmatprep.subr.bf16.mxu0 0
    %1253 = vmatpush2.bf16.msra.mxu0 0
    %1254 = vmatprep.subr.bf16.mxu0 0
    %1255 = vmatpush2.bf16.msra.mxu0 0
    %1256 = vmatprep.mubr.bf16.mxu0 0
    %1257 = vmatmul.mubr.bf16.gmra.mxu0 %v1210
    %v1258 = vpop.f32.mrf.mxu0
    %v1259 = vadd.f32 0.0, %v1258
    %v1260 = vpop.f32.mrf.mxu0
    %v1261 = vpop.f32.mrf.mxu0
    %v1262 = vadd.f32 0.0, %v1261
    %v1263 = vpop.f32.mrf.mxu0
    %1264 = vmatprep.mubr.bf16.mxu0 0
    %1265 = vmatmul.mubr.bf16.gmra.mxu0 %v1213
    %v1266 = vpop.f32.mrf.mxu0
    %v1267 = vadd.f32 0.0, %v1266
    %v1268 = vpop.f32.mrf.mxu0
    %v1269 = vpop.f32.mrf.mxu0
    %v1270 = vadd.f32 0.0, %v1269
    %v1271 = vpop.f32.mrf.mxu0
    %1272 = vmatprep.mubr.bf16.mxu0 0
    %1273 = vmatmul.mubr.bf16.gmra.mxu0 %v1216
    %v1274 = vpop.f32.mrf.mxu0
    %v1275 = vadd.f32 0.0, %v1274
    %v1276 = vpop.f32.mrf.mxu0
    %v1277 = vpop.f32.mrf.mxu0
    %v1278 = vadd.f32 0.0, %v1277
    %v1279 = vpop.f32.mrf.mxu0
    %1280 = vmatprep.mubr.bf16.mxu0 0
    %1281 = vmatmul.mubr.bf16.gmra.mxu0 %v1219
    %v1282 = vpop.f32.mrf.mxu0
    %v1283 = vadd.f32 0.0, %v1282
    %v1284 = vpop.f32.mrf.mxu0
    %v1285 = vpop.f32.mrf.mxu0
    %v1286 = vadd.f32 0.0, %v1285
    %v1287 = vpop.f32.mrf.mxu0
    %1288 = vdwg.mxu0
    %v1289 = vadd.f32 %v1199, %v1259
    %v1290 = vadd.f32 %v1200, %v1262
    %v1291 = vadd.f32 %v1201, %v1267
    %v1292 = vadd.f32 %v1202, %v1270
    %v1293 = vadd.f32 %v1203, %v1275
    %v1294 = vadd.f32 %v1204, %v1278
    %v1295 = vadd.f32 %v1205, %v1283
    %v1296 = vadd.f32 %v1206, %v1286
    %s1297 = scalar_lea.vmem %s2, 16
    %v1298 = vld [vmem:[%s1297] sm:$0xf]
    %v1300 = vsel %vm955, %v932, 0
    %v1303 = vsel %vm955, %v933, 0
    %v1306 = vsel %vm955, %v934, 0
    %v1309 = vsel %vm955, %v935, 0
    %v1312 = vsel %vm968, %v1298, 0
    %1314 = vmatprep.subr.bf16.mxu0 0
    %1315 = vmatpush1.bf16.msra.mxu0 0
    %1316 = vmatprep.subr.bf16.mxu0 0
    %1317 = vmatpush1.bf16.msra.mxu0 0
    %1318 = vmatprep.subr.bf16.mxu0 0
    %1319 = vmatpush1.bf16.msra.mxu0 0
    %1320 = vmatprep.subr.bf16.mxu0 0
    %1321 = vmatpush1.bf16.msra.mxu0 0
    %1322 = vmatprep.subr.bf16.mxu0 0
    %1323 = vmatpush1.bf16.msra.mxu0 0
    %1324 = vmatprep.subr.bf16.mxu0 0
    %1325 = vmatpush1.bf16.msra.mxu0 0
    %1326 = vmatprep.subr.bf16.mxu0 0
    %1327 = vmatpush1.bf16.msra.mxu0 0
    %1328 = vmatprep.subr.bf16.mxu0 0
    %1329 = vmatpush1.bf16.msra.mxu0 %v1312
    %1330 = vmatprep.subr.bf16.mxu0 0
    %1331 = vmatpush2.bf16.msra.mxu0 0
    %1332 = vmatprep.subr.bf16.mxu0 0
    %1333 = vmatpush2.bf16.msra.mxu0 0
    %1334 = vmatprep.subr.bf16.mxu0 0
    %1335 = vmatpush2.bf16.msra.mxu0 0
    %1336 = vmatprep.subr.bf16.mxu0 0
    %1337 = vmatpush2.bf16.msra.mxu0 0
    %1338 = vmatprep.subr.bf16.mxu0 0
    %1339 = vmatpush2.bf16.msra.mxu0 0
    %1340 = vmatprep.subr.bf16.mxu0 0
    %1341 = vmatpush2.bf16.msra.mxu0 0
    %1342 = vmatprep.subr.bf16.mxu0 0
    %1343 = vmatpush2.bf16.msra.mxu0 0
    %1344 = vmatprep.subr.bf16.mxu0 0
    %1345 = vmatpush2.bf16.msra.mxu0 0
    %1346 = vmatprep.mubr.bf16.mxu0 0
    %1347 = vmatmul.mubr.bf16.gmra.mxu0 %v1300
    %v1348 = vpop.f32.mrf.mxu0
    %v1349 = vadd.f32 0.0, %v1348
    %v1350 = vpop.f32.mrf.mxu0
    %v1351 = vpop.f32.mrf.mxu0
    %v1352 = vadd.f32 0.0, %v1351
    %v1353 = vpop.f32.mrf.mxu0
    %1354 = vmatprep.mubr.bf16.mxu0 0
    %1355 = vmatmul.mubr.bf16.gmra.mxu0 %v1303
    %v1356 = vpop.f32.mrf.mxu0
    %v1357 = vadd.f32 0.0, %v1356
    %v1358 = vpop.f32.mrf.mxu0
    %v1359 = vpop.f32.mrf.mxu0
    %v1360 = vadd.f32 0.0, %v1359
    %v1361 = vpop.f32.mrf.mxu0
    %1362 = vmatprep.mubr.bf16.mxu0 0
    %1363 = vmatmul.mubr.bf16.gmra.mxu0 %v1306
    %v1364 = vpop.f32.mrf.mxu0
    %v1365 = vadd.f32 0.0, %v1364
    %v1366 = vpop.f32.mrf.mxu0
    %v1367 = vpop.f32.mrf.mxu0
    %v1368 = vadd.f32 0.0, %v1367
    %v1369 = vpop.f32.mrf.mxu0
    %1370 = vmatprep.mubr.bf16.mxu0 0
    %1371 = vmatmul.mubr.bf16.gmra.mxu0 %v1309
    %v1372 = vpop.f32.mrf.mxu0
    %v1373 = vadd.f32 0.0, %v1372
    %v1374 = vpop.f32.mrf.mxu0
    %v1375 = vpop.f32.mrf.mxu0
    %v1376 = vadd.f32 0.0, %v1375
    %v1377 = vpop.f32.mrf.mxu0
    %1378 = vdwg.mxu0
    %v1379 = vadd.f32 %v1289, %v1349
    %v1380 = vadd.f32 %v1290, %v1352
    %v1381 = vadd.f32 %v1291, %v1357
    %v1382 = vadd.f32 %v1292, %v1360
    %v1383 = vadd.f32 %v1293, %v1365
    %v1384 = vadd.f32 %v1294, %v1368
    %v1385 = vadd.f32 %v1295, %v1373
    %v1386 = vadd.f32 %v1296, %v1376
    %s1387 = scalar_lea.vmem %s2, 20
    %v1388 = vld [vmem:[%s1387] sm:$0xf]
    %v1390 = vsel %vm955, %v936, 0
    %v1393 = vsel %vm955, %v937, 0
    %v1396 = vsel %vm955, %v938, 0
    %v1399 = vsel %vm955, %v939, 0
    %v1402 = vsel %vm968, %v1388, 0
    %1404 = vmatprep.subr.bf16.mxu0 0
    %1405 = vmatpush1.bf16.msra.mxu0 0
    %1406 = vmatprep.subr.bf16.mxu0 0
    %1407 = vmatpush1.bf16.msra.mxu0 0
    %1408 = vmatprep.subr.bf16.mxu0 0
    %1409 = vmatpush1.bf16.msra.mxu0 0
    %1410 = vmatprep.subr.bf16.mxu0 0
    %1411 = vmatpush1.bf16.msra.mxu0 0
    %1412 = vmatprep.subr.bf16.mxu0 0
    %1413 = vmatpush1.bf16.msra.mxu0 0
    %1414 = vmatprep.subr.bf16.mxu0 0
    %1415 = vmatpush1.bf16.msra.mxu0 0
    %1416 = vmatprep.subr.bf16.mxu0 0
    %1417 = vmatpush1.bf16.msra.mxu0 0
    %1418 = vmatprep.subr.bf16.mxu0 0
    %1419 = vmatpush1.bf16.msra.mxu0 %v1402
    %1420 = vmatprep.subr.bf16.mxu0 0
    %1421 = vmatpush2.bf16.msra.mxu0 0
    %1422 = vmatprep.subr.bf16.mxu0 0
    %1423 = vmatpush2.bf16.msra.mxu0 0
    %1424 = vmatprep.subr.bf16.mxu0 0
    %1425 = vmatpush2.bf16.msra.mxu0 0
    %1426 = vmatprep.subr.bf16.mxu0 0
    %1427 = vmatpush2.bf16.msra.mxu0 0
    %1428 = vmatprep.subr.bf16.mxu0 0
    %1429 = vmatpush2.bf16.msra.mxu0 0
    %1430 = vmatprep.subr.bf16.mxu0 0
    %1431 = vmatpush2.bf16.msra.mxu0 0
    %1432 = vmatprep.subr.bf16.mxu0 0
    %1433 = vmatpush2.bf16.msra.mxu0 0
    %1434 = vmatprep.subr.bf16.mxu0 0
    %1435 = vmatpush2.bf16.msra.mxu0 0
    %1436 = vmatprep.mubr.bf16.mxu0 0
    %1437 = vmatmul.mubr.bf16.gmra.mxu0 %v1390
    %v1438 = vpop.f32.mrf.mxu0
    %v1439 = vadd.f32 0.0, %v1438
    %v1440 = vpop.f32.mrf.mxu0
    %v1441 = vpop.f32.mrf.mxu0
    %v1442 = vadd.f32 0.0, %v1441
    %v1443 = vpop.f32.mrf.mxu0
    %1444 = vmatprep.mubr.bf16.mxu0 0
    %1445 = vmatmul.mubr.bf16.gmra.mxu0 %v1393
    %v1446 = vpop.f32.mrf.mxu0
    %v1447 = vadd.f32 0.0, %v1446
    %v1448 = vpop.f32.mrf.mxu0
    %v1449 = vpop.f32.mrf.mxu0
    %v1450 = vadd.f32 0.0, %v1449
    %v1451 = vpop.f32.mrf.mxu0
    %1452 = vmatprep.mubr.bf16.mxu0 0
    %1453 = vmatmul.mubr.bf16.gmra.mxu0 %v1396
    %v1454 = vpop.f32.mrf.mxu0
    %v1455 = vadd.f32 0.0, %v1454
    %v1456 = vpop.f32.mrf.mxu0
    %v1457 = vpop.f32.mrf.mxu0
    %v1458 = vadd.f32 0.0, %v1457
    %v1459 = vpop.f32.mrf.mxu0
    %1460 = vmatprep.mubr.bf16.mxu0 0
    %1461 = vmatmul.mubr.bf16.gmra.mxu0 %v1399
    %v1462 = vpop.f32.mrf.mxu0
    %v1463 = vadd.f32 0.0, %v1462
    %v1464 = vpop.f32.mrf.mxu0
    %v1465 = vpop.f32.mrf.mxu0
    %v1466 = vadd.f32 0.0, %v1465
    %v1467 = vpop.f32.mrf.mxu0
    %1468 = vdwg.mxu0
    %v1469 = vadd.f32 %v1379, %v1439
    %v1470 = vadd.f32 %v1380, %v1442
    %v1471 = vadd.f32 %v1381, %v1447
    %v1472 = vadd.f32 %v1382, %v1450
    %v1473 = vadd.f32 %v1383, %v1455
    %v1474 = vadd.f32 %v1384, %v1458
    %v1475 = vadd.f32 %v1385, %v1463
    %v1476 = vadd.f32 %v1386, %v1466
    %s1477 = scalar_lea.vmem %s2, 24
    %v1478 = vld [vmem:[%s1477] sm:$0xf]
    %v1480 = vsel %vm955, %v940, 0
    %v1483 = vsel %vm955, %v941, 0
    %v1486 = vsel %vm955, %v942, 0
    %v1489 = vsel %vm955, %v943, 0
    %v1492 = vsel %vm968, %v1478, 0
    %1494 = vmatprep.subr.bf16.mxu0 0
    %1495 = vmatpush1.bf16.msra.mxu0 0
    %1496 = vmatprep.subr.bf16.mxu0 0
    %1497 = vmatpush1.bf16.msra.mxu0 0
    %1498 = vmatprep.subr.bf16.mxu0 0
    %1499 = vmatpush1.bf16.msra.mxu0 0
    %1500 = vmatprep.subr.bf16.mxu0 0
    %1501 = vmatpush1.bf16.msra.mxu0 0
    %1502 = vmatprep.subr.bf16.mxu0 0
    %1503 = vmatpush1.bf16.msra.mxu0 0
    %1504 = vmatprep.subr.bf16.mxu0 0
    %1505 = vmatpush1.bf16.msra.mxu0 0
    %1506 = vmatprep.subr.bf16.mxu0 0
    %1507 = vmatpush1.bf16.msra.mxu0 0
    %1508 = vmatprep.subr.bf16.mxu0 0
    %1509 = vmatpush1.bf16.msra.mxu0 %v1492
    %1510 = vmatprep.subr.bf16.mxu0 0
    %1511 = vmatpush2.bf16.msra.mxu0 0
    %1512 = vmatprep.subr.bf16.mxu0 0
    %1513 = vmatpush2.bf16.msra.mxu0 0
    %1514 = vmatprep.subr.bf16.mxu0 0
    %1515 = vmatpush2.bf16.msra.mxu0 0
    %1516 = vmatprep.subr.bf16.mxu0 0
    %1517 = vmatpush2.bf16.msra.mxu0 0
    %1518 = vmatprep.subr.bf16.mxu0 0
    %1519 = vmatpush2.bf16.msra.mxu0 0
    %1520 = vmatprep.subr.bf16.mxu0 0
    %1521 = vmatpush2.bf16.msra.mxu0 0
    %1522 = vmatprep.subr.bf16.mxu0 0
    %1523 = vmatpush2.bf16.msra.mxu0 0
    %1524 = vmatprep.subr.bf16.mxu0 0
    %1525 = vmatpush2.bf16.msra.mxu0 0
    %1526 = vmatprep.mubr.bf16.mxu0 0
    %1527 = vmatmul.mubr.bf16.gmra.mxu0 %v1480
    %v1528 = vpop.f32.mrf.mxu0
    %v1529 = vadd.f32 0.0, %v1528
    %v1530 = vpop.f32.mrf.mxu0
    %v1531 = vpop.f32.mrf.mxu0
    %v1532 = vadd.f32 0.0, %v1531
    %v1533 = vpop.f32.mrf.mxu0
    %1534 = vmatprep.mubr.bf16.mxu0 0
    %1535 = vmatmul.mubr.bf16.gmra.mxu0 %v1483
    %v1536 = vpop.f32.mrf.mxu0
    %v1537 = vadd.f32 0.0, %v1536
    %v1538 = vpop.f32.mrf.mxu0
    %v1539 = vpop.f32.mrf.mxu0
    %v1540 = vadd.f32 0.0, %v1539
    %v1541 = vpop.f32.mrf.mxu0
    %1542 = vmatprep.mubr.bf16.mxu0 0
    %1543 = vmatmul.mubr.bf16.gmra.mxu0 %v1486
    %v1544 = vpop.f32.mrf.mxu0
    %v1545 = vadd.f32 0.0, %v1544
    %v1546 = vpop.f32.mrf.mxu0
    %v1547 = vpop.f32.mrf.mxu0
    %v1548 = vadd.f32 0.0, %v1547
    %v1549 = vpop.f32.mrf.mxu0
    %1550 = vmatprep.mubr.bf16.mxu0 0
    %1551 = vmatmul.mubr.bf16.gmra.mxu0 %v1489
    %v1552 = vpop.f32.mrf.mxu0
    %v1553 = vadd.f32 0.0, %v1552
    %v1554 = vpop.f32.mrf.mxu0
    %v1555 = vpop.f32.mrf.mxu0
    %v1556 = vadd.f32 0.0, %v1555
    %v1557 = vpop.f32.mrf.mxu0
    %1558 = vdwg.mxu0
    %v1559 = vadd.f32 %v1469, %v1529
    %v1560 = vadd.f32 %v1470, %v1532
    %v1561 = vadd.f32 %v1471, %v1537
    %v1562 = vadd.f32 %v1472, %v1540
    %v1563 = vadd.f32 %v1473, %v1545
    %v1564 = vadd.f32 %v1474, %v1548
    %v1565 = vadd.f32 %v1475, %v1553
    %v1566 = vadd.f32 %v1476, %v1556
    %s1567 = scalar_lea.vmem %s2, 28
    %v1568 = vld [vmem:[%s1567] sm:$0xf]
    %v1570 = vsel %vm955, %v944, 0
    %v1573 = vsel %vm955, %v945, 0
    %v1576 = vsel %vm955, %v946, 0
    %v1579 = vsel %vm955, %v947, 0
    %v1582 = vsel %vm968, %v1568, 0
    %1584 = vmatprep.subr.bf16.mxu0 0
    %1585 = vmatpush1.bf16.msra.mxu0 0
    %1586 = vmatprep.subr.bf16.mxu0 0
    %1587 = vmatpush1.bf16.msra.mxu0 0
    %1588 = vmatprep.subr.bf16.mxu0 0
    %1589 = vmatpush1.bf16.msra.mxu0 0
    %1590 = vmatprep.subr.bf16.mxu0 0
    %1591 = vmatpush1.bf16.msra.mxu0 0
    %1592 = vmatprep.subr.bf16.mxu0 0
    %1593 = vmatpush1.bf16.msra.mxu0 0
    %1594 = vmatprep.subr.bf16.mxu0 0
    %1595 = vmatpush1.bf16.msra.mxu0 0
    %1596 = vmatprep.subr.bf16.mxu0 0
    %1597 = vmatpush1.bf16.msra.mxu0 0
    %1598 = vmatprep.subr.bf16.mxu0 0
    %1599 = vmatpush1.bf16.msra.mxu0 %v1582
    %1600 = vmatprep.subr.bf16.mxu0 0
    %1601 = vmatpush2.bf16.msra.mxu0 0
    %1602 = vmatprep.subr.bf16.mxu0 0
    %1603 = vmatpush2.bf16.msra.mxu0 0
    %1604 = vmatprep.subr.bf16.mxu0 0
    %1605 = vmatpush2.bf16.msra.mxu0 0
    %1606 = vmatprep.subr.bf16.mxu0 0
    %1607 = vmatpush2.bf16.msra.mxu0 0
    %1608 = vmatprep.subr.bf16.mxu0 0
    %1609 = vmatpush2.bf16.msra.mxu0 0
    %1610 = vmatprep.subr.bf16.mxu0 0
    %1611 = vmatpush2.bf16.msra.mxu0 0
    %1612 = vmatprep.subr.bf16.mxu0 0
    %1613 = vmatpush2.bf16.msra.mxu0 0
    %1614 = vmatprep.subr.bf16.mxu0 0
    %1615 = vmatpush2.bf16.msra.mxu0 0
    %1616 = vmatprep.mubr.bf16.mxu0 0
    %1617 = vmatmul.mubr.bf16.gmra.mxu0 %v1570
    %v1618 = vpop.f32.mrf.mxu0
    %v1619 = vadd.f32 0.0, %v1618
    %v1620 = vpop.f32.mrf.mxu0
    %v1621 = vpop.f32.mrf.mxu0
    %v1622 = vadd.f32 0.0, %v1621
    %v1623 = vpop.f32.mrf.mxu0
    %1624 = vmatprep.mubr.bf16.mxu0 0
    %1625 = vmatmul.mubr.bf16.gmra.mxu0 %v1573
    %v1626 = vpop.f32.mrf.mxu0
    %v1627 = vadd.f32 0.0, %v1626
    %v1628 = vpop.f32.mrf.mxu0
    %v1629 = vpop.f32.mrf.mxu0
    %v1630 = vadd.f32 0.0, %v1629
    %v1631 = vpop.f32.mrf.mxu0
    %1632 = vmatprep.mubr.bf16.mxu0 0
    %1633 = vmatmul.mubr.bf16.gmra.mxu0 %v1576
    %v1634 = vpop.f32.mrf.mxu0
    %v1635 = vadd.f32 0.0, %v1634
    %v1636 = vpop.f32.mrf.mxu0
    %v1637 = vpop.f32.mrf.mxu0
    %v1638 = vadd.f32 0.0, %v1637
    %v1639 = vpop.f32.mrf.mxu0
    %1640 = vmatprep.mubr.bf16.mxu0 0
    %1641 = vmatmul.mubr.bf16.gmra.mxu0 %v1579
    %v1642 = vpop.f32.mrf.mxu0
    %v1643 = vadd.f32 0.0, %v1642
    %v1644 = vpop.f32.mrf.mxu0
    %v1645 = vpop.f32.mrf.mxu0
    %v1646 = vadd.f32 0.0, %v1645
    %v1647 = vpop.f32.mrf.mxu0
    %1648 = vdwg.mxu0
    %v1649 = vadd.f32 %v1559, %v1619
    %v1650 = vadd.f32 %v1560, %v1622
    %v1651 = vadd.f32 %v1561, %v1627
    %v1652 = vadd.f32 %v1562, %v1630
    %v1653 = vadd.f32 %v1563, %v1635
    %v1654 = vadd.f32 %v1564, %v1638
    %v1655 = vadd.f32 %v1565, %v1643
    %v1656 = vadd.f32 %v1566, %v1646
    %s1657 = scalar_lea.vmem %s2, 32
    %v1658 = vld [vmem:[%s1657] sm:$0xf]
    %v1660 = vsel %vm955, %v948, 0
    %v1663 = vsel %vm955, %v949, 0
    %v1666 = vsel %vm955, %v950, 0
    %v1669 = vsel %vm955, %v951, 0
    %v1672 = vsel %vm968, %v1658, 0
    %1674 = vmatprep.subr.bf16.mxu0 0
    %1675 = vmatpush1.bf16.msra.mxu0 0
    %1676 = vmatprep.subr.bf16.mxu0 0
    %1677 = vmatpush1.bf16.msra.mxu0 0
    %1678 = vmatprep.subr.bf16.mxu0 0
    %1679 = vmatpush1.bf16.msra.mxu0 0
    %1680 = vmatprep.subr.bf16.mxu0 0
    %1681 = vmatpush1.bf16.msra.mxu0 0
    %1682 = vmatprep.subr.bf16.mxu0 0
    %1683 = vmatpush1.bf16.msra.mxu0 0
    %1684 = vmatprep.subr.bf16.mxu0 0
    %1685 = vmatpush1.bf16.msra.mxu0 0
    %1686 = vmatprep.subr.bf16.mxu0 0
    %1687 = vmatpush1.bf16.msra.mxu0 0
    %1688 = vmatprep.subr.bf16.mxu0 0
    %1689 = vmatpush1.bf16.msra.mxu0 %v1672
    %1690 = vmatprep.subr.bf16.mxu0 0
    %1691 = vmatpush2.bf16.msra.mxu0 0
    %1692 = vmatprep.subr.bf16.mxu0 0
    %1693 = vmatpush2.bf16.msra.mxu0 0
    %1694 = vmatprep.subr.bf16.mxu0 0
    %1695 = vmatpush2.bf16.msra.mxu0 0
    %1696 = vmatprep.subr.bf16.mxu0 0
    %1697 = vmatpush2.bf16.msra.mxu0 0
    %1698 = vmatprep.subr.bf16.mxu0 0
    %1699 = vmatpush2.bf16.msra.mxu0 0
    %1700 = vmatprep.subr.bf16.mxu0 0
    %1701 = vmatpush2.bf16.msra.mxu0 0
    %1702 = vmatprep.subr.bf16.mxu0 0
    %1703 = vmatpush2.bf16.msra.mxu0 0
    %1704 = vmatprep.subr.bf16.mxu0 0
    %1705 = vmatpush2.bf16.msra.mxu0 0
    %1706 = vmatprep.mubr.bf16.mxu0 0
    %1707 = vmatmul.mubr.bf16.gmra.mxu0 %v1660
    %v1708 = vpop.f32.mrf.mxu0
    %v1709 = vadd.f32 0.0, %v1708
    %v1710 = vpop.f32.mrf.mxu0
    %v1711 = vpop.f32.mrf.mxu0
    %v1712 = vadd.f32 0.0, %v1711
    %v1713 = vpop.f32.mrf.mxu0
    %1714 = vmatprep.mubr.bf16.mxu0 0
    %1715 = vmatmul.mubr.bf16.gmra.mxu0 %v1663
    %v1716 = vpop.f32.mrf.mxu0
    %v1717 = vadd.f32 0.0, %v1716
    %v1718 = vpop.f32.mrf.mxu0
    %v1719 = vpop.f32.mrf.mxu0
    %v1720 = vadd.f32 0.0, %v1719
    %v1721 = vpop.f32.mrf.mxu0
    %1722 = vmatprep.mubr.bf16.mxu0 0
    %1723 = vmatmul.mubr.bf16.gmra.mxu0 %v1666
    %v1724 = vpop.f32.mrf.mxu0
    %v1725 = vadd.f32 0.0, %v1724
    %v1726 = vpop.f32.mrf.mxu0
    %v1727 = vpop.f32.mrf.mxu0
    %v1728 = vadd.f32 0.0, %v1727
    %v1729 = vpop.f32.mrf.mxu0
    %1730 = vmatprep.mubr.bf16.mxu0 0
    %1731 = vmatmul.mubr.bf16.gmra.mxu0 %v1669
    %v1732 = vpop.f32.mrf.mxu0
    %v1733 = vadd.f32 0.0, %v1732
    %v1734 = vpop.f32.mrf.mxu0
    %v1735 = vpop.f32.mrf.mxu0
    %v1736 = vadd.f32 0.0, %v1735
    %v1737 = vpop.f32.mrf.mxu0
    %1738 = vdwg.mxu0
    %v1739 = vadd.f32 %v1649, %v1709
    %v1740 = vadd.f32 %v1650, %v1712
    %v1741 = vadd.f32 %v1651, %v1717
    %v1742 = vadd.f32 %v1652, %v1720
    %v1743 = vadd.f32 %v1653, %v1725
    %v1744 = vadd.f32 %v1654, %v1728
    %v1745 = vadd.f32 %v1655, %v1733
    %v1746 = vadd.f32 %v1656, %v1736
    %v1747 = vld [vmem:[%s3] sm:$0x1]
    %v1749 = vlaneseq
    %v1750 = vshrl.u32 %v1749, 7
    %v1751 = vsub.s32 0, %v1750
    %v1752 = vrot.slane %v1747, %v1751
    %v1754 = vadd.f32 %v1739, %v1752
    %v1755 = vadd.f32 %v1740, %v1752
    %v1756 = vadd.f32 %v1741, %v1752
    %v1757 = vadd.f32 %v1742, %v1752
    %v1758 = vadd.f32 %v1743, %v1752
    %v1759 = vadd.f32 %v1744, %v1752
    %v1760 = vadd.f32 %v1745, %v1752
    %v1761 = vadd.f32 %v1746, %v1752
    %vm1762 = vcmp.gt.f32.partialorder %v1754, 0.0
    %vm1763 = vcmp.gt.f32.partialorder %v1755, 0.0
    %vm1764 = vcmp.gt.f32.partialorder %v1756, 0.0
    %vm1765 = vcmp.gt.f32.partialorder %v1757, 0.0
    %vm1766 = vcmp.gt.f32.partialorder %v1758, 0.0
    %vm1767 = vcmp.gt.f32.partialorder %v1759, 0.0
    %vm1768 = vcmp.gt.f32.partialorder %v1760, 0.0
    %vm1769 = vcmp.gt.f32.partialorder %v1761, 0.0
    %v1770 = vmul.f32 %v1754, 0.2
    %v1771 = vmul.f32 %v1755, 0.2
    %v1772 = vmul.f32 %v1756, 0.2
    %v1773 = vmul.f32 %v1757, 0.2
    %v1774 = vmul.f32 %v1758, 0.2
    %v1775 = vmul.f32 %v1759, 0.2
    %v1776 = vmul.f32 %v1760, 0.2
    %v1777 = vmul.f32 %v1761, 0.2
    %v1778 = vsel %vm1762, %v1754, %v1770
    %v1779 = vsel %vm1763, %v1755, %v1771
    %v1780 = vsel %vm1764, %v1756, %v1772
    %v1781 = vsel %vm1765, %v1757, %v1773
    %v1782 = vsel %vm1766, %v1758, %v1774
    %v1783 = vsel %vm1767, %v1759, %v1775
    %v1784 = vsel %vm1768, %v1760, %v1776
    %v1785 = vsel %vm1769, %v1761, %v1777
    %v1786 = vld [vmem:[%s4] sm:$0x1]
    %v1788 = vlaneseq
    %v1789 = vshrl.u32 %v1788, 7
    %v1790 = vsub.s32 0, %v1789
    %v1791 = vrot.slane %v1786, %v1790
    %v1793 = vmul.f32 %v1778, %v1791
    %v1794 = vmul.f32 %v1779, %v1791
    %v1795 = vmul.f32 %v1780, %v1791
    %v1796 = vmul.f32 %v1781, %v1791
    %v1797 = vmul.f32 %v1782, %v1791
    %v1798 = vmul.f32 %v1783, %v1791
    %v1799 = vmul.f32 %v1784, %v1791
    %v1800 = vmul.f32 %v1785, %v1791
    %v1801 = vld [vmem:[%s5] sm:$0x1]
    %v1803 = vlaneseq
    %v1804 = vshrl.u32 %v1803, 7
    %v1805 = vsub.s32 0, %v1804
    %v1806 = vrot.slane %v1801, %v1805
    %v1808 = vadd.f32 %v1793, %v1806
    %v1809 = vadd.f32 %v1794, %v1806
    %v1810 = vadd.f32 %v1795, %v1806
    %v1811 = vadd.f32 %v1796, %v1806
    %v1812 = vadd.f32 %v1797, %v1806
    %v1813 = vadd.f32 %v1798, %v1806
    %v1814 = vadd.f32 %v1799, %v1806
    %v1815 = vadd.f32 %v1800, %v1806
    %v1816 = vpack.c.bf16 %v1809, %v1808
    %v1817 = vpack.c.bf16 %v1811, %v1810
    %v1818 = vpack.c.bf16 %v1813, %v1812
    %v1819 = vpack.c.bf16 %v1815, %v1814
    %v1820 = vld [vmem:[%s6] sm:$0xf]
    %v1821 = vld [vmem:[%s6 + $0x4] sm:$0xf]
    %v1822 = vld [vmem:[%s6 + $0x8] sm:$0xf]
    %v1823 = vld [vmem:[%s6 + $0xc] sm:$0xf]
    %v1824 = vld [vmem:[%s6 + $0x10] sm:$0xf]
    %v1825 = vld [vmem:[%s6 + $0x14] sm:$0xf]
    %v1826 = vld [vmem:[%s6 + $0x18] sm:$0xf]
    %v1827 = vld [vmem:[%s6 + $0x1c] sm:$0xf]
    %v1828 = vld [vmem:[%s6 + $0x20] sm:$0xf]
    %v1829 = vld [vmem:[%s6 + $0x24] sm:$0xf]
    %v1830 = vld [vmem:[%s6 + $0x28] sm:$0xf]
    %v1831 = vld [vmem:[%s6 + $0x2c] sm:$0xf]
    %v1832 = vld [vmem:[%s6 + $0x30] sm:$0xf]
    %v1833 = vld [vmem:[%s6 + $0x34] sm:$0xf]
    %v1834 = vld [vmem:[%s6 + $0x38] sm:$0xf]
    %v1835 = vld [vmem:[%s6 + $0x3c] sm:$0xf]
    %v1836 = vld [vmem:[%s6 + $0x40] sm:$0xf]
    %v1837 = vld [vmem:[%s6 + $0x44] sm:$0xf]
    %v1856 = vunpack.c.l.b16 %v1820
    %v1857 = vunpack.c.l.b16 %v1821
    %v1858 = vunpack.c.l.b16 %v1822
    %v1859 = vunpack.c.l.b16 %v1823
    %v1860 = vunpack.c.l.b16 %v1824
    %v1861 = vunpack.c.l.b16 %v1825
    %v1862 = vunpack.c.l.b16 %v1826
    %v1863 = vunpack.c.l.b16 %v1827
    %v1864 = vunpack.c.l.b16 %v1828
    %v1865 = vunpack.c.l.b16 %v1829
    %v1866 = vunpack.c.l.b16 %v1830
    %v1867 = vunpack.c.l.b16 %v1831
    %v1868 = vunpack.c.l.b16 %v1832
    %v1869 = vunpack.c.l.b16 %v1833
    %v1870 = vunpack.c.l.b16 %v1834
    %v1871 = vunpack.c.l.b16 %v1835
    %v1872 = vunpack.c.l.b16 %v1836
    %v1873 = vunpack.c.l.b16 %v1837
    %v1874 = vpack.c.b16 %v1857, %v1856
    %v1875 = vpack.c.b16 %v1859, %v1858
    %v1876 = vpack.c.b16 %v1861, %v1860
    %v1877 = vpack.c.b16 %v1863, %v1862
    %v1878 = vpack.c.b16 %v1865, %v1864
    %v1879 = vpack.c.b16 %v1867, %v1866
    %v1880 = vpack.c.b16 %v1869, %v1868
    %v1881 = vpack.c.b16 %v1871, %v1870
    %v1882 = vpack.c.b16 %v1873, %v1872
    %vm1883 = vcmask 523264
    %v1885 = vsel %vm1883, %v1874, 0
    %v1888 = vsel %vm1883, %v1875, 0
    %v1891 = vsel %vm1883, %v1876, 0
    %v1894 = vsel %vm1883, %v1877, 0
    %v1897 = vsel %vm1883, %v1878, 0
    %v1900 = vsel %vm1883, %v1879, 0
    %v1903 = vsel %vm1883, %v1880, 0
    %v1906 = vsel %vm1883, %v1881, 0
    %v1909 = vsel %vm1883, %v1882, 0
    %1911 = vmatprep.subr.bf16.mxu0 0
    %1912 = vmatpush1.bf16.msra.mxu0 0
    %1913 = vmatprep.subr.bf16.mxu0 0
    %1914 = vmatpush1.bf16.msra.mxu0 0
    %1915 = vmatprep.subr.bf16.mxu0 0
    %1916 = vmatpush1.bf16.msra.mxu0 0
    %1917 = vmatprep.subr.bf16.mxu0 0
    %1918 = vmatpush1.bf16.msra.mxu0 0
    %1919 = vmatprep.subr.bf16.mxu0 0
    %1920 = vmatpush1.bf16.msra.mxu0 %v1819
    %1921 = vmatprep.subr.bf16.mxu0 0
    %1922 = vmatpush1.bf16.msra.mxu0 %v1818
    %1923 = vmatprep.subr.bf16.mxu0 0
    %1924 = vmatpush1.bf16.msra.mxu0 %v1817
    %1925 = vmatprep.subr.bf16.mxu0 0
    %1926 = vmatpush1.bf16.msra.mxu0 %v1816
    %1927 = vmatprep.subr.bf16.mxu0 0
    %1928 = vmatpush2.bf16.msra.mxu0 0
    %1929 = vmatprep.subr.bf16.mxu0 0
    %1930 = vmatpush2.bf16.msra.mxu0 0
    %1931 = vmatprep.subr.bf16.mxu0 0
    %1932 = vmatpush2.bf16.msra.mxu0 0
    %1933 = vmatprep.subr.bf16.mxu0 0
    %1934 = vmatpush2.bf16.msra.mxu0 0
    %1935 = vmatprep.subr.bf16.mxu0 0
    %1936 = vmatpush2.bf16.msra.mxu0 0
    %1937 = vmatprep.subr.bf16.mxu0 0
    %1938 = vmatpush2.bf16.msra.mxu0 0
    %1939 = vmatprep.subr.bf16.mxu0 0
    %1940 = vmatpush2.bf16.msra.mxu0 0
    %1941 = vmatprep.subr.bf16.mxu0 0
    %1942 = vmatpush2.bf16.msra.mxu0 0
    %1943 = vmatprep.mubr.bf16.mxu0 0
    %1944 = vmatmul.mubr.bf16.gmra.mxu0 %v1885
    %v1945 = vpop.f32.mrf.mxu0
    %v1946 = vadd.f32 0.0, %v1945
    %v1947 = vpop.f32.mrf.mxu0
    %v1948 = vpop.f32.mrf.mxu0
    %v1949 = vadd.f32 0.0, %v1948
    %v1950 = vpop.f32.mrf.mxu0
    %1951 = vmatprep.mubr.bf16.mxu0 0
    %1952 = vmatmul.mubr.bf16.gmra.mxu0 %v1888
    %v1953 = vpop.f32.mrf.mxu0
    %v1954 = vadd.f32 0.0, %v1953
    %v1955 = vpop.f32.mrf.mxu0
    %v1956 = vpop.f32.mrf.mxu0
    %v1957 = vadd.f32 0.0, %v1956
    %v1958 = vpop.f32.mrf.mxu0
    %1959 = vmatprep.mubr.bf16.mxu0 0
    %1960 = vmatmul.mubr.bf16.gmra.mxu0 %v1891
    %v1961 = vpop.f32.mrf.mxu0
    %v1962 = vadd.f32 0.0, %v1961
    %v1963 = vpop.f32.mrf.mxu0
    %v1964 = vpop.f32.mrf.mxu0
    %v1965 = vadd.f32 0.0, %v1964
    %v1966 = vpop.f32.mrf.mxu0
    %1967 = vmatprep.mubr.bf16.mxu0 0
    %1968 = vmatmul.mubr.bf16.gmra.mxu0 %v1894
    %v1969 = vpop.f32.mrf.mxu0
    %v1970 = vadd.f32 0.0, %v1969
    %v1971 = vpop.f32.mrf.mxu0
    %v1972 = vpop.f32.mrf.mxu0
    %v1973 = vadd.f32 0.0, %v1972
    %v1974 = vpop.f32.mrf.mxu0
    %1975 = vmatprep.mubr.bf16.mxu0 0
    %1976 = vmatmul.mubr.bf16.gmra.mxu0 %v1897
    %v1977 = vpop.f32.mrf.mxu0
    %v1978 = vadd.f32 0.0, %v1977
    %v1979 = vpop.f32.mrf.mxu0
    %v1980 = vpop.f32.mrf.mxu0
    %v1981 = vadd.f32 0.0, %v1980
    %v1982 = vpop.f32.mrf.mxu0
    %1983 = vmatprep.mubr.bf16.mxu0 0
    %1984 = vmatmul.mubr.bf16.gmra.mxu0 %v1900
    %v1985 = vpop.f32.mrf.mxu0
    %v1986 = vadd.f32 0.0, %v1985
    %v1987 = vpop.f32.mrf.mxu0
    %v1988 = vpop.f32.mrf.mxu0
    %v1989 = vadd.f32 0.0, %v1988
    %v1990 = vpop.f32.mrf.mxu0
    %1991 = vmatprep.mubr.bf16.mxu0 0
    %1992 = vmatmul.mubr.bf16.gmra.mxu0 %v1903
    %v1993 = vpop.f32.mrf.mxu0
    %v1994 = vadd.f32 0.0, %v1993
    %v1995 = vpop.f32.mrf.mxu0
    %v1996 = vpop.f32.mrf.mxu0
    %v1997 = vadd.f32 0.0, %v1996
    %v1998 = vpop.f32.mrf.mxu0
    %1999 = vmatprep.mubr.bf16.mxu0 0
    %2000 = vmatmul.mubr.bf16.gmra.mxu0 %v1906
    %v2001 = vpop.f32.mrf.mxu0
    %v2002 = vadd.f32 0.0, %v2001
    %v2003 = vpop.f32.mrf.mxu0
    %v2004 = vpop.f32.mrf.mxu0
    %v2005 = vadd.f32 0.0, %v2004
    %v2006 = vpop.f32.mrf.mxu0
    %2007 = vmatprep.mubr.bf16.mxu0 0
    %2008 = vmatmul.mubr.bf16.gmra.mxu0 %v1909
    %v2009 = vpop.f32.mrf.mxu0
    %v2010 = vadd.f32 0.0, %v2009
    %v2011 = vpop.f32.mrf.mxu0
    %v2012 = vpop.f32.mrf.mxu0
    %v2013 = vadd.f32 0.0, %v2012
    %v2014 = vpop.f32.mrf.mxu0
    %2015 = vdwg.mxu0
    %v2016 = vpack.c.bf16 %v1949, %v1946
    %v2017 = vpack.c.bf16 %v1957, %v1954
    %v2018 = vpack.c.bf16 %v1965, %v1962
    %v2019 = vpack.c.bf16 %v1973, %v1970
    %v2020 = vpack.c.bf16 %v1981, %v1978
    %v2021 = vpack.c.bf16 %v1989, %v1986
    %v2022 = vpack.c.bf16 %v1997, %v1994
    %v2023 = vpack.c.bf16 %v2005, %v2002
    %v2024 = vpack.c.bf16 %v2013, %v2010
    %v2025 = vld [vmem:[%s7] sm:$0xf]
    %v2026 = vld [vmem:[%s7 + $0x4] sm:$0xf]
    %v2027 = vld [vmem:[%s7 + $0x8] sm:$0xf]
    %v2028 = vld [vmem:[%s7 + $0xc] sm:$0xf]
    %s2029 = scalar_lea.vmem %s7, 16
    %v2030 = vld [vmem:[%s2029] sm:$0xf]
    %v2031 = vld [vmem:[%s2029 + $0x4] sm:$0xf]
    %v2032 = vld [vmem:[%s2029 + $0x8] sm:$0xf]
    %v2033 = vld [vmem:[%s2029 + $0xc] sm:$0xf]
    %v2038 = vunpack.c.l.b16 %v2030
    %v2039 = vunpack.c.l.b16 %v2031
    %v2040 = vunpack.c.l.b16 %v2032
    %v2041 = vunpack.c.l.b16 %v2033
    %v2042 = vpack.c.b16 %v2039, %v2038
    %v2043 = vpack.c.b16 %v2041, %v2040
    %vm2046 = vcmask 261120
    %v2048 = vsel %vm2046, %v2017, 0
    %2050 = vmatprep.subr.bf16.mxu0 0
    %2051 = vmatpush1.bf16.msra.mxu0 0
    %2052 = vmatprep.subr.bf16.mxu0 0
    %2053 = vmatpush1.bf16.msra.mxu0 0
    %2054 = vmatprep.subr.bf16.mxu0 0
    %2055 = vmatpush1.bf16.msra.mxu0 0
    %2056 = vmatprep.subr.bf16.mxu0 0
    %2057 = vmatpush1.bf16.msra.mxu0 0
    %2058 = vmatprep.subr.bf16.mxu0 0
    %2059 = vmatpush1.bf16.msra.mxu0 0
    %2060 = vmatprep.subr.bf16.mxu0 0
    %2061 = vmatpush1.bf16.msra.mxu0 0
    %2062 = vmatprep.subr.bf16.mxu0 0
    %2063 = vmatpush1.bf16.msra.mxu0 %v2043
    %2064 = vmatprep.subr.bf16.mxu0 0
    %2065 = vmatpush1.bf16.msra.mxu0 %v2042
    %2066 = vmatprep.subr.bf16.mxu0 0
    %2067 = vmatpush2.bf16.msra.mxu0 0
    %2068 = vmatprep.subr.bf16.mxu0 0
    %2069 = vmatpush2.bf16.msra.mxu0 0
    %2070 = vmatprep.subr.bf16.mxu0 0
    %2071 = vmatpush2.bf16.msra.mxu0 0
    %2072 = vmatprep.subr.bf16.mxu0 0
    %2073 = vmatpush2.bf16.msra.mxu0 0
    %2074 = vmatprep.subr.bf16.mxu0 0
    %2075 = vmatpush2.bf16.msra.mxu0 0
    %2076 = vmatprep.subr.bf16.mxu0 0
    %2077 = vmatpush2.bf16.msra.mxu0 0
    %2078 = vmatprep.subr.bf16.mxu0 0
    %2079 = vmatpush2.bf16.msra.mxu0 0
    %2080 = vmatprep.subr.bf16.mxu0 0
    %2081 = vmatpush2.bf16.msra.mxu0 0
    %2082 = vmatprep.mubr.bf16.mxu0 0
    %2083 = vmatmul.mubr.bf16.gmra.mxu0 %v2048
    %v2084 = vpop.f32.mrf.mxu0
    %v2085 = vadd.f32 0.0, %v2084
    %v2086 = vpop.f32.mrf.mxu0
    %v2087 = vpop.f32.mrf.mxu0
    %v2088 = vadd.f32 0.0, %v2087
    %v2089 = vpop.f32.mrf.mxu0
    %2090 = vdwg.mxu0
    %v2095 = vunpack.c.l.b16 %v2025
    %v2096 = vunpack.c.l.b16 %v2026
    %v2097 = vunpack.c.l.b16 %v2027
    %v2098 = vunpack.c.l.b16 %v2028
    %v2099 = vpack.c.b16 %v2096, %v2095
    %v2100 = vpack.c.b16 %v2098, %v2097
    %v2104 = vsel %vm2046, %v2016, 0
    %2106 = vmatprep.subr.bf16.mxu0 0
    %2107 = vmatpush1.bf16.msra.mxu0 0
    %2108 = vmatprep.subr.bf16.mxu0 0
    %2109 = vmatpush1.bf16.msra.mxu0 0
    %2110 = vmatprep.subr.bf16.mxu0 0
    %2111 = vmatpush1.bf16.msra.mxu0 0
    %2112 = vmatprep.subr.bf16.mxu0 0
    %2113 = vmatpush1.bf16.msra.mxu0 0
    %2114 = vmatprep.subr.bf16.mxu0 0
    %2115 = vmatpush1.bf16.msra.mxu0 0
    %2116 = vmatprep.subr.bf16.mxu0 0
    %2117 = vmatpush1.bf16.msra.mxu0 0
    %2118 = vmatprep.subr.bf16.mxu0 0
    %2119 = vmatpush1.bf16.msra.mxu0 %v2100
    %2120 = vmatprep.subr.bf16.mxu0 0
    %2121 = vmatpush1.bf16.msra.mxu0 %v2099
    %2122 = vmatprep.subr.bf16.mxu0 0
    %2123 = vmatpush2.bf16.msra.mxu0 0
    %2124 = vmatprep.subr.bf16.mxu0 0
    %2125 = vmatpush2.bf16.msra.mxu0 0
    %2126 = vmatprep.subr.bf16.mxu0 0
    %2127 = vmatpush2.bf16.msra.mxu0 0
    %2128 = vmatprep.subr.bf16.mxu0 0
    %2129 = vmatpush2.bf16.msra.mxu0 0
    %2130 = vmatprep.subr.bf16.mxu0 0
    %2131 = vmatpush2.bf16.msra.mxu0 0
    %2132 = vmatprep.subr.bf16.mxu0 0
    %2133 = vmatpush2.bf16.msra.mxu0 0
    %2134 = vmatprep.subr.bf16.mxu0 0
    %2135 = vmatpush2.bf16.msra.mxu0 0
    %2136 = vmatprep.subr.bf16.mxu0 0
    %2137 = vmatpush2.bf16.msra.mxu0 0
    %2138 = vmatprep.mubr.bf16.mxu0 0
    %2139 = vmatmul.mubr.bf16.gmra.mxu0 %v2104
    %v2140 = vpop.f32.mrf.mxu0
    %v2141 = vadd.f32 %v2085, %v2140
    %v2142 = vpop.f32.mrf.mxu0
    %v2143 = vpop.f32.mrf.mxu0
    %v2144 = vadd.f32 %v2088, %v2143
    %v2145 = vpop.f32.mrf.mxu0
    %2146 = vdwg.mxu0
    %s2147 = scalar_lea.vmem %s7, 32
    %v2148 = vld [vmem:[%s2147] sm:$0xf]
    %v2149 = vld [vmem:[%s2147 + $0x4] sm:$0xf]
    %v2150 = vld [vmem:[%s2147 + $0x8] sm:$0xf]
    %v2151 = vld [vmem:[%s2147 + $0xc] sm:$0xf]
    %v2156 = vunpack.c.l.b16 %v2148
    %v2157 = vunpack.c.l.b16 %v2149
    %v2158 = vunpack.c.l.b16 %v2150
    %v2159 = vunpack.c.l.b16 %v2151
    %v2160 = vpack.c.b16 %v2157, %v2156
    %v2161 = vpack.c.b16 %v2159, %v2158
    %v2165 = vsel %vm2046, %v2018, 0
    %2167 = vmatprep.subr.bf16.mxu0 0
    %2168 = vmatpush1.bf16.msra.mxu0 0
    %2169 = vmatprep.subr.bf16.mxu0 0
    %2170 = vmatpush1.bf16.msra.mxu0 0
    %2171 = vmatprep.subr.bf16.mxu0 0
    %2172 = vmatpush1.bf16.msra.mxu0 0
    %2173 = vmatprep.subr.bf16.mxu0 0
    %2174 = vmatpush1.bf16.msra.mxu0 0
    %2175 = vmatprep.subr.bf16.mxu0 0
    %2176 = vmatpush1.bf16.msra.mxu0 0
    %2177 = vmatprep.subr.bf16.mxu0 0
    %2178 = vmatpush1.bf16.msra.mxu0 0
    %2179 = vmatprep.subr.bf16.mxu0 0
    %2180 = vmatpush1.bf16.msra.mxu0 %v2161
    %2181 = vmatprep.subr.bf16.mxu0 0
    %2182 = vmatpush1.bf16.msra.mxu0 %v2160
    %2183 = vmatprep.subr.bf16.mxu0 0
    %2184 = vmatpush2.bf16.msra.mxu0 0
    %2185 = vmatprep.subr.bf16.mxu0 0
    %2186 = vmatpush2.bf16.msra.mxu0 0
    %2187 = vmatprep.subr.bf16.mxu0 0
    %2188 = vmatpush2.bf16.msra.mxu0 0
    %2189 = vmatprep.subr.bf16.mxu0 0
    %2190 = vmatpush2.bf16.msra.mxu0 0
    %2191 = vmatprep.subr.bf16.mxu0 0
    %2192 = vmatpush2.bf16.msra.mxu0 0
    %2193 = vmatprep.subr.bf16.mxu0 0
    %2194 = vmatpush2.bf16.msra.mxu0 0
    %2195 = vmatprep.subr.bf16.mxu0 0
    %2196 = vmatpush2.bf16.msra.mxu0 0
    %2197 = vmatprep.subr.bf16.mxu0 0
    %2198 = vmatpush2.bf16.msra.mxu0 0
    %2199 = vmatprep.mubr.bf16.mxu0 0
    %2200 = vmatmul.mubr.bf16.gmra.mxu0 %v2165
    %v2201 = vpop.f32.mrf.mxu0
    %v2202 = vadd.f32 0.0, %v2201
    %v2203 = vpop.f32.mrf.mxu0
    %v2204 = vpop.f32.mrf.mxu0
    %v2205 = vadd.f32 0.0, %v2204
    %v2206 = vpop.f32.mrf.mxu0
    %2207 = vdwg.mxu0
    %v2208 = vadd.f32 %v2141, %v2202
    %v2209 = vadd.f32 %v2144, %v2205
    %s2210 = scalar_lea.vmem %s7, 48
    %v2211 = vld [vmem:[%s2210] sm:$0xf]
    %v2212 = vld [vmem:[%s2210 + $0x4] sm:$0xf]
    %v2213 = vld [vmem:[%s2210 + $0x8] sm:$0xf]
    %v2214 = vld [vmem:[%s2210 + $0xc] sm:$0xf]
    %v2219 = vunpack.c.l.b16 %v2211
    %v2220 = vunpack.c.l.b16 %v2212
    %v2221 = vunpack.c.l.b16 %v2213
    %v2222 = vunpack.c.l.b16 %v2214
    %v2223 = vpack.c.b16 %v2220, %v2219
    %v2224 = vpack.c.b16 %v2222, %v2221
    %v2228 = vsel %vm2046, %v2019, 0
    %2230 = vmatprep.subr.bf16.mxu0 0
    %2231 = vmatpush1.bf16.msra.mxu0 0
    %2232 = vmatprep.subr.bf16.mxu0 0
    %2233 = vmatpush1.bf16.msra.mxu0 0
    %2234 = vmatprep.subr.bf16.mxu0 0
    %2235 = vmatpush1.bf16.msra.mxu0 0
    %2236 = vmatprep.subr.bf16.mxu0 0
    %2237 = vmatpush1.bf16.msra.mxu0 0
    %2238 = vmatprep.subr.bf16.mxu0 0
    %2239 = vmatpush1.bf16.msra.mxu0 0
    %2240 = vmatprep.subr.bf16.mxu0 0
    %2241 = vmatpush1.bf16.msra.mxu0 0
    %2242 = vmatprep.subr.bf16.mxu0 0
    %2243 = vmatpush1.bf16.msra.mxu0 %v2224
    %2244 = vmatprep.subr.bf16.mxu0 0
    %2245 = vmatpush1.bf16.msra.mxu0 %v2223
    %2246 = vmatprep.subr.bf16.mxu0 0
    %2247 = vmatpush2.bf16.msra.mxu0 0
    %2248 = vmatprep.subr.bf16.mxu0 0
    %2249 = vmatpush2.bf16.msra.mxu0 0
    %2250 = vmatprep.subr.bf16.mxu0 0
    %2251 = vmatpush2.bf16.msra.mxu0 0
    %2252 = vmatprep.subr.bf16.mxu0 0
    %2253 = vmatpush2.bf16.msra.mxu0 0
    %2254 = vmatprep.subr.bf16.mxu0 0
    %2255 = vmatpush2.bf16.msra.mxu0 0
    %2256 = vmatprep.subr.bf16.mxu0 0
    %2257 = vmatpush2.bf16.msra.mxu0 0
    %2258 = vmatprep.subr.bf16.mxu0 0
    %2259 = vmatpush2.bf16.msra.mxu0 0
    %2260 = vmatprep.subr.bf16.mxu0 0
    %2261 = vmatpush2.bf16.msra.mxu0 0
    %2262 = vmatprep.mubr.bf16.mxu0 0
    %2263 = vmatmul.mubr.bf16.gmra.mxu0 %v2228
    %v2264 = vpop.f32.mrf.mxu0
    %v2265 = vadd.f32 0.0, %v2264
    %v2266 = vpop.f32.mrf.mxu0
    %v2267 = vpop.f32.mrf.mxu0
    %v2268 = vadd.f32 0.0, %v2267
    %v2269 = vpop.f32.mrf.mxu0
    %2270 = vdwg.mxu0
    %v2271 = vadd.f32 %v2208, %v2265
    %v2272 = vadd.f32 %v2209, %v2268
    %s2273 = scalar_lea.vmem %s7, 64
    %v2274 = vld [vmem:[%s2273] sm:$0xf]
    %v2275 = vld [vmem:[%s2273 + $0x4] sm:$0xf]
    %v2276 = vld [vmem:[%s2273 + $0x8] sm:$0xf]
    %v2277 = vld [vmem:[%s2273 + $0xc] sm:$0xf]
    %v2282 = vunpack.c.l.b16 %v2274
    %v2283 = vunpack.c.l.b16 %v2275
    %v2284 = vunpack.c.l.b16 %v2276
    %v2285 = vunpack.c.l.b16 %v2277
    %v2286 = vpack.c.b16 %v2283, %v2282
    %v2287 = vpack.c.b16 %v2285, %v2284
    %v2291 = vsel %vm2046, %v2020, 0
    %2293 = vmatprep.subr.bf16.mxu0 0
    %2294 = vmatpush1.bf16.msra.mxu0 0
    %2295 = vmatprep.subr.bf16.mxu0 0
    %2296 = vmatpush1.bf16.msra.mxu0 0
    %2297 = vmatprep.subr.bf16.mxu0 0
    %2298 = vmatpush1.bf16.msra.mxu0 0
    %2299 = vmatprep.subr.bf16.mxu0 0
    %2300 = vmatpush1.bf16.msra.mxu0 0
    %2301 = vmatprep.subr.bf16.mxu0 0
    %2302 = vmatpush1.bf16.msra.mxu0 0
    %2303 = vmatprep.subr.bf16.mxu0 0
    %2304 = vmatpush1.bf16.msra.mxu0 0
    %2305 = vmatprep.subr.bf16.mxu0 0
    %2306 = vmatpush1.bf16.msra.mxu0 %v2287
    %2307 = vmatprep.subr.bf16.mxu0 0
    %2308 = vmatpush1.bf16.msra.mxu0 %v2286
    %2309 = vmatprep.subr.bf16.mxu0 0
    %2310 = vmatpush2.bf16.msra.mxu0 0
    %2311 = vmatprep.subr.bf16.mxu0 0
    %2312 = vmatpush2.bf16.msra.mxu0 0
    %2313 = vmatprep.subr.bf16.mxu0 0
    %2314 = vmatpush2.bf16.msra.mxu0 0
    %2315 = vmatprep.subr.bf16.mxu0 0
    %2316 = vmatpush2.bf16.msra.mxu0 0
    %2317 = vmatprep.subr.bf16.mxu0 0
    %2318 = vmatpush2.bf16.msra.mxu0 0
    %2319 = vmatprep.subr.bf16.mxu0 0
    %2320 = vmatpush2.bf16.msra.mxu0 0
    %2321 = vmatprep.subr.bf16.mxu0 0
    %2322 = vmatpush2.bf16.msra.mxu0 0
    %2323 = vmatprep.subr.bf16.mxu0 0
    %2324 = vmatpush2.bf16.msra.mxu0 0
    %2325 = vmatprep.mubr.bf16.mxu0 0
    %2326 = vmatmul.mubr.bf16.gmra.mxu0 %v2291
    %v2327 = vpop.f32.mrf.mxu0
    %v2328 = vadd.f32 0.0, %v2327
    %v2329 = vpop.f32.mrf.mxu0
    %v2330 = vpop.f32.mrf.mxu0
    %v2331 = vadd.f32 0.0, %v2330
    %v2332 = vpop.f32.mrf.mxu0
    %2333 = vdwg.mxu0
    %v2334 = vadd.f32 %v2271, %v2328
    %v2335 = vadd.f32 %v2272, %v2331
    %s2336 = scalar_lea.vmem %s7, 80
    %v2337 = vld [vmem:[%s2336] sm:$0xf]
    %v2338 = vld [vmem:[%s2336 + $0x4] sm:$0xf]
    %v2339 = vld [vmem:[%s2336 + $0x8] sm:$0xf]
    %v2340 = vld [vmem:[%s2336 + $0xc] sm:$0xf]
    %v2345 = vunpack.c.l.b16 %v2337
    %v2346 = vunpack.c.l.b16 %v2338
    %v2347 = vunpack.c.l.b16 %v2339
    %v2348 = vunpack.c.l.b16 %v2340
    %v2349 = vpack.c.b16 %v2346, %v2345
    %v2350 = vpack.c.b16 %v2348, %v2347
    %v2354 = vsel %vm2046, %v2021, 0
    %2356 = vmatprep.subr.bf16.mxu0 0
    %2357 = vmatpush1.bf16.msra.mxu0 0
    %2358 = vmatprep.subr.bf16.mxu0 0
    %2359 = vmatpush1.bf16.msra.mxu0 0
    %2360 = vmatprep.subr.bf16.mxu0 0
    %2361 = vmatpush1.bf16.msra.mxu0 0
    %2362 = vmatprep.subr.bf16.mxu0 0
    %2363 = vmatpush1.bf16.msra.mxu0 0
    %2364 = vmatprep.subr.bf16.mxu0 0
    %2365 = vmatpush1.bf16.msra.mxu0 0
    %2366 = vmatprep.subr.bf16.mxu0 0
    %2367 = vmatpush1.bf16.msra.mxu0 0
    %2368 = vmatprep.subr.bf16.mxu0 0
    %2369 = vmatpush1.bf16.msra.mxu0 %v2350
    %2370 = vmatprep.subr.bf16.mxu0 0
    %2371 = vmatpush1.bf16.msra.mxu0 %v2349
    %2372 = vmatprep.subr.bf16.mxu0 0
    %2373 = vmatpush2.bf16.msra.mxu0 0
    %2374 = vmatprep.subr.bf16.mxu0 0
    %2375 = vmatpush2.bf16.msra.mxu0 0
    %2376 = vmatprep.subr.bf16.mxu0 0
    %2377 = vmatpush2.bf16.msra.mxu0 0
    %2378 = vmatprep.subr.bf16.mxu0 0
    %2379 = vmatpush2.bf16.msra.mxu0 0
    %2380 = vmatprep.subr.bf16.mxu0 0
    %2381 = vmatpush2.bf16.msra.mxu0 0
    %2382 = vmatprep.subr.bf16.mxu0 0
    %2383 = vmatpush2.bf16.msra.mxu0 0
    %2384 = vmatprep.subr.bf16.mxu0 0
    %2385 = vmatpush2.bf16.msra.mxu0 0
    %2386 = vmatprep.subr.bf16.mxu0 0
    %2387 = vmatpush2.bf16.msra.mxu0 0
    %2388 = vmatprep.mubr.bf16.mxu0 0
    %2389 = vmatmul.mubr.bf16.gmra.mxu0 %v2354
    %v2390 = vpop.f32.mrf.mxu0
    %v2391 = vadd.f32 0.0, %v2390
    %v2392 = vpop.f32.mrf.mxu0
    %v2393 = vpop.f32.mrf.mxu0
    %v2394 = vadd.f32 0.0, %v2393
    %v2395 = vpop.f32.mrf.mxu0
    %2396 = vdwg.mxu0
    %v2397 = vadd.f32 %v2334, %v2391
    %v2398 = vadd.f32 %v2335, %v2394
    %s2399 = scalar_lea.vmem %s7, 96
    %v2400 = vld [vmem:[%s2399] sm:$0xf]
    %v2401 = vld [vmem:[%s2399 + $0x4] sm:$0xf]
    %v2402 = vld [vmem:[%s2399 + $0x8] sm:$0xf]
    %v2403 = vld [vmem:[%s2399 + $0xc] sm:$0xf]
    %v2408 = vunpack.c.l.b16 %v2400
    %v2409 = vunpack.c.l.b16 %v2401
    %v2410 = vunpack.c.l.b16 %v2402
    %v2411 = vunpack.c.l.b16 %v2403
    %v2412 = vpack.c.b16 %v2409, %v2408
    %v2413 = vpack.c.b16 %v2411, %v2410
    %v2417 = vsel %vm2046, %v2022, 0
    %2419 = vmatprep.subr.bf16.mxu0 0
    %2420 = vmatpush1.bf16.msra.mxu0 0
    %2421 = vmatprep.subr.bf16.mxu0 0
    %2422 = vmatpush1.bf16.msra.mxu0 0
    %2423 = vmatprep.subr.bf16.mxu0 0
    %2424 = vmatpush1.bf16.msra.mxu0 0
    %2425 = vmatprep.subr.bf16.mxu0 0
    %2426 = vmatpush1.bf16.msra.mxu0 0
    %2427 = vmatprep.subr.bf16.mxu0 0
    %2428 = vmatpush1.bf16.msra.mxu0 0
    %2429 = vmatprep.subr.bf16.mxu0 0
    %2430 = vmatpush1.bf16.msra.mxu0 0
    %2431 = vmatprep.subr.bf16.mxu0 0
    %2432 = vmatpush1.bf16.msra.mxu0 %v2413
    %2433 = vmatprep.subr.bf16.mxu0 0
    %2434 = vmatpush1.bf16.msra.mxu0 %v2412
    %2435 = vmatprep.subr.bf16.mxu0 0
    %2436 = vmatpush2.bf16.msra.mxu0 0
    %2437 = vmatprep.subr.bf16.mxu0 0
    %2438 = vmatpush2.bf16.msra.mxu0 0
    %2439 = vmatprep.subr.bf16.mxu0 0
    %2440 = vmatpush2.bf16.msra.mxu0 0
    %2441 = vmatprep.subr.bf16.mxu0 0
    %2442 = vmatpush2.bf16.msra.mxu0 0
    %2443 = vmatprep.subr.bf16.mxu0 0
    %2444 = vmatpush2.bf16.msra.mxu0 0
    %2445 = vmatprep.subr.bf16.mxu0 0
    %2446 = vmatpush2.bf16.msra.mxu0 0
    %2447 = vmatprep.subr.bf16.mxu0 0
    %2448 = vmatpush2.bf16.msra.mxu0 0
    %2449 = vmatprep.subr.bf16.mxu0 0
    %2450 = vmatpush2.bf16.msra.mxu0 0
    %2451 = vmatprep.mubr.bf16.mxu0 0
    %2452 = vmatmul.mubr.bf16.gmra.mxu0 %v2417
    %v2453 = vpop.f32.mrf.mxu0
    %v2454 = vadd.f32 0.0, %v2453
    %v2455 = vpop.f32.mrf.mxu0
    %v2456 = vpop.f32.mrf.mxu0
    %v2457 = vadd.f32 0.0, %v2456
    %v2458 = vpop.f32.mrf.mxu0
    %2459 = vdwg.mxu0
    %v2460 = vadd.f32 %v2397, %v2454
    %v2461 = vadd.f32 %v2398, %v2457
    %s2462 = scalar_lea.vmem %s7, 112
    %v2463 = vld [vmem:[%s2462] sm:$0xf]
    %v2464 = vld [vmem:[%s2462 + $0x4] sm:$0xf]
    %v2465 = vld [vmem:[%s2462 + $0x8] sm:$0xf]
    %v2466 = vld [vmem:[%s2462 + $0xc] sm:$0xf]
    %v2471 = vunpack.c.l.b16 %v2463
    %v2472 = vunpack.c.l.b16 %v2464
    %v2473 = vunpack.c.l.b16 %v2465
    %v2474 = vunpack.c.l.b16 %v2466
    %v2475 = vpack.c.b16 %v2472, %v2471
    %v2476 = vpack.c.b16 %v2474, %v2473
    %v2480 = vsel %vm2046, %v2023, 0
    %2482 = vmatprep.subr.bf16.mxu0 0
    %2483 = vmatpush1.bf16.msra.mxu0 0
    %2484 = vmatprep.subr.bf16.mxu0 0
    %2485 = vmatpush1.bf16.msra.mxu0 0
    %2486 = vmatprep.subr.bf16.mxu0 0
    %2487 = vmatpush1.bf16.msra.mxu0 0
    %2488 = vmatprep.subr.bf16.mxu0 0
    %2489 = vmatpush1.bf16.msra.mxu0 0
    %2490 = vmatprep.subr.bf16.mxu0 0
    %2491 = vmatpush1.bf16.msra.mxu0 0
    %2492 = vmatprep.subr.bf16.mxu0 0
    %2493 = vmatpush1.bf16.msra.mxu0 0
    %2494 = vmatprep.subr.bf16.mxu0 0
    %2495 = vmatpush1.bf16.msra.mxu0 %v2476
    %2496 = vmatprep.subr.bf16.mxu0 0
    %2497 = vmatpush1.bf16.msra.mxu0 %v2475
    %2498 = vmatprep.subr.bf16.mxu0 0
    %2499 = vmatpush2.bf16.msra.mxu0 0
    %2500 = vmatprep.subr.bf16.mxu0 0
    %2501 = vmatpush2.bf16.msra.mxu0 0
    %2502 = vmatprep.subr.bf16.mxu0 0
    %2503 = vmatpush2.bf16.msra.mxu0 0
    %2504 = vmatprep.subr.bf16.mxu0 0
    %2505 = vmatpush2.bf16.msra.mxu0 0
    %2506 = vmatprep.subr.bf16.mxu0 0
    %2507 = vmatpush2.bf16.msra.mxu0 0
    %2508 = vmatprep.subr.bf16.mxu0 0
    %2509 = vmatpush2.bf16.msra.mxu0 0
    %2510 = vmatprep.subr.bf16.mxu0 0
    %2511 = vmatpush2.bf16.msra.mxu0 0
    %2512 = vmatprep.subr.bf16.mxu0 0
    %2513 = vmatpush2.bf16.msra.mxu0 0
    %2514 = vmatprep.mubr.bf16.mxu0 0
    %2515 = vmatmul.mubr.bf16.gmra.mxu0 %v2480
    %v2516 = vpop.f32.mrf.mxu0
    %v2517 = vadd.f32 0.0, %v2516
    %v2518 = vpop.f32.mrf.mxu0
    %v2519 = vpop.f32.mrf.mxu0
    %v2520 = vadd.f32 0.0, %v2519
    %v2521 = vpop.f32.mrf.mxu0
    %2522 = vdwg.mxu0
    %v2523 = vadd.f32 %v2460, %v2517
    %v2524 = vadd.f32 %v2461, %v2520
    %s2525 = scalar_lea.vmem %s7, 128
    %v2526 = vld [vmem:[%s2525] sm:$0xf]
    %v2527 = vld [vmem:[%s2525 + $0x4] sm:$0xf]
    %v2528 = vld [vmem:[%s2525 + $0x8] sm:$0xf]
    %v2529 = vld [vmem:[%s2525 + $0xc] sm:$0xf]
    %v2534 = vunpack.c.l.b16 %v2526
    %v2535 = vunpack.c.l.b16 %v2527
    %v2536 = vunpack.c.l.b16 %v2528
    %v2537 = vunpack.c.l.b16 %v2529
    %v2538 = vpack.c.b16 %v2535, %v2534
    %v2539 = vpack.c.b16 %v2537, %v2536
    %v2543 = vsel %vm2046, %v2024, 0
    %2545 = vmatprep.subr.bf16.mxu0 0
    %2546 = vmatpush1.bf16.msra.mxu0 0
    %2547 = vmatprep.subr.bf16.mxu0 0
    %2548 = vmatpush1.bf16.msra.mxu0 0
    %2549 = vmatprep.subr.bf16.mxu0 0
    %2550 = vmatpush1.bf16.msra.mxu0 0
    %2551 = vmatprep.subr.bf16.mxu0 0
    %2552 = vmatpush1.bf16.msra.mxu0 0
    %2553 = vmatprep.subr.bf16.mxu0 0
    %2554 = vmatpush1.bf16.msra.mxu0 0
    %2555 = vmatprep.subr.bf16.mxu0 0
    %2556 = vmatpush1.bf16.msra.mxu0 0
    %2557 = vmatprep.subr.bf16.mxu0 0
    %2558 = vmatpush1.bf16.msra.mxu0 %v2539
    %2559 = vmatprep.subr.bf16.mxu0 0
    %2560 = vmatpush1.bf16.msra.mxu0 %v2538
    %2561 = vmatprep.subr.bf16.mxu0 0
    %2562 = vmatpush2.bf16.msra.mxu0 0
    %2563 = vmatprep.subr.bf16.mxu0 0
    %2564 = vmatpush2.bf16.msra.mxu0 0
    %2565 = vmatprep.subr.bf16.mxu0 0
    %2566 = vmatpush2.bf16.msra.mxu0 0
    %2567 = vmatprep.subr.bf16.mxu0 0
    %2568 = vmatpush2.bf16.msra.mxu0 0
    %2569 = vmatprep.subr.bf16.mxu0 0
    %2570 = vmatpush2.bf16.msra.mxu0 0
    %2571 = vmatprep.subr.bf16.mxu0 0
    %2572 = vmatpush2.bf16.msra.mxu0 0
    %2573 = vmatprep.subr.bf16.mxu0 0
    %2574 = vmatpush2.bf16.msra.mxu0 0
    %2575 = vmatprep.subr.bf16.mxu0 0
    %2576 = vmatpush2.bf16.msra.mxu0 0
    %2577 = vmatprep.mubr.bf16.mxu0 0
    %2578 = vmatmul.mubr.bf16.gmra.mxu0 %v2543
    %v2579 = vpop.f32.mrf.mxu0
    %v2580 = vadd.f32 0.0, %v2579
    %v2581 = vpop.f32.mrf.mxu0
    %v2582 = vpop.f32.mrf.mxu0
    %v2583 = vadd.f32 0.0, %v2582
    %v2584 = vpop.f32.mrf.mxu0
    %2585 = vdwg.mxu0
    %v2586 = vadd.f32 %v2523, %v2580
    %v2587 = vadd.f32 %v2524, %v2583
    %v2588 = vld [vmem:[%s8] sm:$0x1]
    %v2590 = vlaneseq
    %v2591 = vshrl.u32 %v2590, 7
    %v2592 = vsub.s32 0, %v2591
    %v2593 = vrot.slane %v2588, %v2592
    %v2595 = vadd.f32 %v2586, %v2593
    %v2596 = vadd.f32 %v2587, %v2593
    %vm2597 = vcmp.gt.f32.partialorder %v2595, 0.0
    %vm2598 = vcmp.gt.f32.partialorder %v2596, 0.0
    %v2599 = vmul.f32 %v2595, 0.2
    %v2600 = vmul.f32 %v2596, 0.2
    %v2601 = vsel %vm2597, %v2595, %v2599
    %v2602 = vsel %vm2598, %v2596, %v2600
    %v2603 = vld [vmem:[%s9] sm:$0x1]
    %v2605 = vlaneseq
    %v2606 = vshrl.u32 %v2605, 7
    %v2607 = vsub.s32 0, %v2606
    %v2608 = vrot.slane %v2603, %v2607
    %v2610 = vmul.f32 %v2601, %v2608
    %v2611 = vmul.f32 %v2602, %v2608
    %v2612 = vld [vmem:[%s10] sm:$0x1]
    %v2614 = vlaneseq
    %v2615 = vshrl.u32 %v2614, 7
    %v2616 = vsub.s32 0, %v2615
    %v2617 = vrot.slane %v2612, %v2616
    %v2619 = vadd.f32 %v2610, %v2617
    %v2620 = vadd.f32 %v2611, %v2617
    %v2621 = vpack.c.bf16 %v2620, %v2619
    %v2622 = vld [vmem:[%s11] sm:$0x3]
    %vm2623 = vcmask 130048
    %v2625 = vsel %vm2623, %v2622, 0
    %2627 = vmatprep.subr.bf16.mxu0 0
    %2628 = vmatpush1.bf16.msra.mxu0 0
    %2629 = vmatprep.subr.bf16.mxu0 0
    %2630 = vmatpush1.bf16.msra.mxu0 0
    %2631 = vmatprep.subr.bf16.mxu0 0
    %2632 = vmatpush1.bf16.msra.mxu0 0
    %2633 = vmatprep.subr.bf16.mxu0 0
    %2634 = vmatpush1.bf16.msra.mxu0 0
    %2635 = vmatprep.subr.bf16.mxu0 0
    %2636 = vmatpush1.bf16.msra.mxu0 0
    %2637 = vmatprep.subr.bf16.mxu0 0
    %2638 = vmatpush1.bf16.msra.mxu0 0
    %2639 = vmatprep.subr.bf16.mxu0 0
    %2640 = vmatpush1.bf16.msra.mxu0 0
    %2641 = vmatprep.subr.bf16.mxu0 0
    %2642 = vmatpush1.bf16.msra.mxu0 %v2621
    %2643 = vmatprep.subr.bf16.mxu0 0
    %2644 = vmatpush2.bf16.msra.mxu0 0
    %2645 = vmatprep.subr.bf16.mxu0 0
    %2646 = vmatpush2.bf16.msra.mxu0 0
    %2647 = vmatprep.subr.bf16.mxu0 0
    %2648 = vmatpush2.bf16.msra.mxu0 0
    %2649 = vmatprep.subr.bf16.mxu0 0
    %2650 = vmatpush2.bf16.msra.mxu0 0
    %2651 = vmatprep.subr.bf16.mxu0 0
    %2652 = vmatpush2.bf16.msra.mxu0 0
    %2653 = vmatprep.subr.bf16.mxu0 0
    %2654 = vmatpush2.bf16.msra.mxu0 0
    %2655 = vmatprep.subr.bf16.mxu0 0
    %2656 = vmatpush2.bf16.msra.mxu0 0
    %2657 = vmatprep.subr.bf16.mxu0 0
    %2658 = vmatpush2.bf16.msra.mxu0 0
    %2659 = vmatprep.mubr.bf16.mxu0 0
    %2660 = vmatmul.mubr.bf16.gmra.mxu0 %v2625
    %v2661 = vpop.f32.mrf.mxu0
    %v2662 = vadd.f32 0.0, %v2661
    %v2663 = vpop.f32.mrf.mxu0
    %v2664 = vpop.f32.mrf.mxu0
    %v2665 = vpop.f32.mrf.mxu0
    %2666 = vdwg.mxu0
    %v2667 = vpack.c.bf16 %v2662, %v2662
    %v2668 = vld [vmem:[%s12] sm:$0xf]
    %v2669 = vld [vmem:[%s12 + $0x4] sm:$0xf]
    %v2670 = vld [vmem:[%s12 + $0x8] sm:$0xf]
    %v2671 = vld [vmem:[%s12 + $0xc] sm:$0xf]
    %v2672 = vld [vmem:[%s12 + $0x10] sm:$0xf]
    %v2673 = vld [vmem:[%s12 + $0x14] sm:$0xf]
    %v2674 = vld [vmem:[%s12 + $0x18] sm:$0xf]
    %v2675 = vld [vmem:[%s12 + $0x1c] sm:$0xf]
    %s2676 = scalar_lea.vmem %s11, 2
    %v2677 = vld [vmem:[%s2676] sm:$0x3]
    %v2679 = vsel %vm2623, %v2677, 0
    %2681 = vmatprep.subr.bf16.mxu0 0
    %2682 = vmatpush1.bf16.msra.mxu0 0
    %2683 = vmatprep.subr.bf16.mxu0 0
    %2684 = vmatpush1.bf16.msra.mxu0 0
    %2685 = vmatprep.subr.bf16.mxu0 0
    %2686 = vmatpush1.bf16.msra.mxu0 0
    %2687 = vmatprep.subr.bf16.mxu0 0
    %2688 = vmatpush1.bf16.msra.mxu0 0
    %2689 = vmatprep.subr.bf16.mxu0 0
    %2690 = vmatpush1.bf16.msra.mxu0 0
    %2691 = vmatprep.subr.bf16.mxu0 0
    %2692 = vmatpush1.bf16.msra.mxu0 0
    %2693 = vmatprep.subr.bf16.mxu0 0
    %2694 = vmatpush1.bf16.msra.mxu0 0
    %2695 = vmatprep.subr.bf16.mxu0 0
    %2696 = vmatpush1.bf16.msra.mxu0 %v2621
    %2697 = vmatprep.subr.bf16.mxu0 0
    %2698 = vmatpush2.bf16.msra.mxu0 0
    %2699 = vmatprep.subr.bf16.mxu0 0
    %2700 = vmatpush2.bf16.msra.mxu0 0
    %2701 = vmatprep.subr.bf16.mxu0 0
    %2702 = vmatpush2.bf16.msra.mxu0 0
    %2703 = vmatprep.subr.bf16.mxu0 0
    %2704 = vmatpush2.bf16.msra.mxu0 0
    %2705 = vmatprep.subr.bf16.mxu0 0
    %2706 = vmatpush2.bf16.msra.mxu0 0
    %2707 = vmatprep.subr.bf16.mxu0 0
    %2708 = vmatpush2.bf16.msra.mxu0 0
    %2709 = vmatprep.subr.bf16.mxu0 0
    %2710 = vmatpush2.bf16.msra.mxu0 0
    %2711 = vmatprep.subr.bf16.mxu0 0
    %2712 = vmatpush2.bf16.msra.mxu0 0
    %2713 = vmatprep.mubr.bf16.mxu0 0
    %2714 = vmatmul.mubr.bf16.gmra.mxu0 %v2679
    %v2715 = vpop.f32.mrf.mxu0
    %v2716 = vadd.f32 0.0, %v2715
    %v2717 = vpop.f32.mrf.mxu0
    %v2718 = vpop.f32.mrf.mxu0
    %v2719 = vpop.f32.mrf.mxu0
    %2720 = vdwg.mxu0
    %v2721 = vpack.c.bf16 %v2716, %v2716
    %s2722 = scalar_lea.vmem %s12, 32
    %v2723 = vld [vmem:[%s2722] sm:$0xf]
    %v2724 = vld [vmem:[%s2722 + $0x4] sm:$0xf]
    %v2725 = vld [vmem:[%s2722 + $0x8] sm:$0xf]
    %v2726 = vld [vmem:[%s2722 + $0xc] sm:$0xf]
    %v2727 = vld [vmem:[%s2722 + $0x10] sm:$0xf]
    %v2728 = vld [vmem:[%s2722 + $0x14] sm:$0xf]
    %v2729 = vld [vmem:[%s2722 + $0x18] sm:$0xf]
    %v2730 = vld [vmem:[%s2722 + $0x1c] sm:$0xf]
    %v2739 = vunpack.c.l.b16 %v2723
    %v2740 = vunpack.c.l.b16 %v2724
    %v2741 = vunpack.c.l.b16 %v2725
    %v2742 = vunpack.c.l.b16 %v2726
    %v2743 = vunpack.c.l.b16 %v2727
    %v2744 = vunpack.c.l.b16 %v2728
    %v2745 = vunpack.c.l.b16 %v2729
    %v2746 = vunpack.c.l.b16 %v2730
    %v2747 = vpack.c.b16 %v2740, %v2739
    %v2748 = vpack.c.b16 %v2742, %v2741
    %v2749 = vpack.c.b16 %v2744, %v2743
    %v2750 = vpack.c.b16 %v2746, %v2745
    %v2756 = vsel %vm1883, %v2721, 0
    %2758 = vmatprep.subr.bf16.mxu0 0
    %2759 = vmatpush1.bf16.msra.mxu0 0
    %2760 = vmatprep.subr.bf16.mxu0 0
    %2761 = vmatpush1.bf16.msra.mxu0 0
    %2762 = vmatprep.subr.bf16.mxu0 0
    %2763 = vmatpush1.bf16.msra.mxu0 0
    %2764 = vmatprep.subr.bf16.mxu0 0
    %2765 = vmatpush1.bf16.msra.mxu0 0
    %2766 = vmatprep.subr.bf16.mxu0 0
    %2767 = vmatpush1.bf16.msra.mxu0 %v2750
    %2768 = vmatprep.subr.bf16.mxu0 0
    %2769 = vmatpush1.bf16.msra.mxu0 %v2749
    %2770 = vmatprep.subr.bf16.mxu0 0
    %2771 = vmatpush1.bf16.msra.mxu0 %v2748
    %2772 = vmatprep.subr.bf16.mxu0 0
    %2773 = vmatpush1.bf16.msra.mxu0 %v2747
    %2774 = vmatprep.subr.bf16.mxu0 0
    %2775 = vmatpush2.bf16.msra.mxu0 0
    %2776 = vmatprep.subr.bf16.mxu0 0
    %2777 = vmatpush2.bf16.msra.mxu0 0
    %2778 = vmatprep.subr.bf16.mxu0 0
    %2779 = vmatpush2.bf16.msra.mxu0 0
    %2780 = vmatprep.subr.bf16.mxu0 0
    %2781 = vmatpush2.bf16.msra.mxu0 0
    %2782 = vmatprep.subr.bf16.mxu0 0
    %2783 = vmatpush2.bf16.msra.mxu0 0
    %2784 = vmatprep.subr.bf16.mxu0 0
    %2785 = vmatpush2.bf16.msra.mxu0 0
    %2786 = vmatprep.subr.bf16.mxu0 0
    %2787 = vmatpush2.bf16.msra.mxu0 0
    %2788 = vmatprep.subr.bf16.mxu0 0
    %2789 = vmatpush2.bf16.msra.mxu0 0
    %2790 = vmatprep.mubr.bf16.mxu0 0
    %2791 = vmatmul.mubr.bf16.gmra.mxu0 %v2756
    %v2792 = vpop.f32.mrf.mxu0
    %v2793 = vadd.f32 0.0, %v2792
    %v2794 = vpop.f32.mrf.mxu0
    %v2795 = vpop.f32.mrf.mxu0
    %v2796 = vpop.f32.mrf.mxu0
    %2797 = vdwg.mxu0
    %v2806 = vunpack.c.l.b16 %v2668
    %v2807 = vunpack.c.l.b16 %v2669
    %v2808 = vunpack.c.l.b16 %v2670
    %v2809 = vunpack.c.l.b16 %v2671
    %v2810 = vunpack.c.l.b16 %v2672
    %v2811 = vunpack.c.l.b16 %v2673
    %v2812 = vunpack.c.l.b16 %v2674
    %v2813 = vunpack.c.l.b16 %v2675
    %v2814 = vpack.c.b16 %v2807, %v2806
    %v2815 = vpack.c.b16 %v2809, %v2808
    %v2816 = vpack.c.b16 %v2811, %v2810
    %v2817 = vpack.c.b16 %v2813, %v2812
    %v2823 = vsel %vm1883, %v2667, 0
    %2825 = vmatprep.subr.bf16.mxu0 0
    %2826 = vmatpush1.bf16.msra.mxu0 0
    %2827 = vmatprep.subr.bf16.mxu0 0
    %2828 = vmatpush1.bf16.msra.mxu0 0
    %2829 = vmatprep.subr.bf16.mxu0 0
    %2830 = vmatpush1.bf16.msra.mxu0 0
    %2831 = vmatprep.subr.bf16.mxu0 0
    %2832 = vmatpush1.bf16.msra.mxu0 0
    %2833 = vmatprep.subr.bf16.mxu0 0
    %2834 = vmatpush1.bf16.msra.mxu0 %v2817
    %2835 = vmatprep.subr.bf16.mxu0 0
    %2836 = vmatpush1.bf16.msra.mxu0 %v2816
    %2837 = vmatprep.subr.bf16.mxu0 0
    %2838 = vmatpush1.bf16.msra.mxu0 %v2815
    %2839 = vmatprep.subr.bf16.mxu0 0
    %2840 = vmatpush1.bf16.msra.mxu0 %v2814
    %2841 = vmatprep.subr.bf16.mxu0 0
    %2842 = vmatpush2.bf16.msra.mxu0 0
    %2843 = vmatprep.subr.bf16.mxu0 0
    %2844 = vmatpush2.bf16.msra.mxu0 0
    %2845 = vmatprep.subr.bf16.mxu0 0
    %2846 = vmatpush2.bf16.msra.mxu0 0
    %2847 = vmatprep.subr.bf16.mxu0 0
    %2848 = vmatpush2.bf16.msra.mxu0 0
    %2849 = vmatprep.subr.bf16.mxu0 0
    %2850 = vmatpush2.bf16.msra.mxu0 0
    %2851 = vmatprep.subr.bf16.mxu0 0
    %2852 = vmatpush2.bf16.msra.mxu0 0
    %2853 = vmatprep.subr.bf16.mxu0 0
    %2854 = vmatpush2.bf16.msra.mxu0 0
    %2855 = vmatprep.subr.bf16.mxu0 0
    %2856 = vmatpush2.bf16.msra.mxu0 0
    %2857 = vmatprep.mubr.bf16.mxu0 0
    %2858 = vmatmul.mubr.bf16.gmra.mxu0 %v2823
    %v2859 = vpop.f32.mrf.mxu0
    %v2860 = vadd.f32 %v2793, %v2859
    %v2861 = vpop.f32.mrf.mxu0
    %v2862 = vpop.f32.mrf.mxu0
    %v2863 = vpop.f32.mrf.mxu0
    %2864 = vdwg.mxu0
    %s2865 = scalar_lea.vmem %s11, 4
    %v2866 = vld [vmem:[%s2865] sm:$0x3]
    %v2868 = vsel %vm2623, %v2866, 0
    %2870 = vmatprep.subr.bf16.mxu0 0
    %2871 = vmatpush1.bf16.msra.mxu0 0
    %2872 = vmatprep.subr.bf16.mxu0 0
    %2873 = vmatpush1.bf16.msra.mxu0 0
    %2874 = vmatprep.subr.bf16.mxu0 0
    %2875 = vmatpush1.bf16.msra.mxu0 0
    %2876 = vmatprep.subr.bf16.mxu0 0
    %2877 = vmatpush1.bf16.msra.mxu0 0
    %2878 = vmatprep.subr.bf16.mxu0 0
    %2879 = vmatpush1.bf16.msra.mxu0 0
    %2880 = vmatprep.subr.bf16.mxu0 0
    %2881 = vmatpush1.bf16.msra.mxu0 0
    %2882 = vmatprep.subr.bf16.mxu0 0
    %2883 = vmatpush1.bf16.msra.mxu0 0
    %2884 = vmatprep.subr.bf16.mxu0 0
    %2885 = vmatpush1.bf16.msra.mxu0 %v2621
    %2886 = vmatprep.subr.bf16.mxu0 0
    %2887 = vmatpush2.bf16.msra.mxu0 0
    %2888 = vmatprep.subr.bf16.mxu0 0
    %2889 = vmatpush2.bf16.msra.mxu0 0
    %2890 = vmatprep.subr.bf16.mxu0 0
    %2891 = vmatpush2.bf16.msra.mxu0 0
    %2892 = vmatprep.subr.bf16.mxu0 0
    %2893 = vmatpush2.bf16.msra.mxu0 0
    %2894 = vmatprep.subr.bf16.mxu0 0
    %2895 = vmatpush2.bf16.msra.mxu0 0
    %2896 = vmatprep.subr.bf16.mxu0 0
    %2897 = vmatpush2.bf16.msra.mxu0 0
    %2898 = vmatprep.subr.bf16.mxu0 0
    %2899 = vmatpush2.bf16.msra.mxu0 0
    %2900 = vmatprep.subr.bf16.mxu0 0
    %2901 = vmatpush2.bf16.msra.mxu0 0
    %2902 = vmatprep.mubr.bf16.mxu0 0
    %2903 = vmatmul.mubr.bf16.gmra.mxu0 %v2868
    %v2904 = vpop.f32.mrf.mxu0
    %v2905 = vadd.f32 0.0, %v2904
    %v2906 = vpop.f32.mrf.mxu0
    %v2907 = vpop.f32.mrf.mxu0
    %v2908 = vpop.f32.mrf.mxu0
    %2909 = vdwg.mxu0
    %v2910 = vpack.c.bf16 %v2905, %v2905
    %s2911 = scalar_lea.vmem %s12, 64
    %v2912 = vld [vmem:[%s2911] sm:$0xf]
    %v2913 = vld [vmem:[%s2911 + $0x4] sm:$0xf]
    %v2914 = vld [vmem:[%s2911 + $0x8] sm:$0xf]
    %v2915 = vld [vmem:[%s2911 + $0xc] sm:$0xf]
    %v2916 = vld [vmem:[%s2911 + $0x10] sm:$0xf]
    %v2917 = vld [vmem:[%s2911 + $0x14] sm:$0xf]
    %v2918 = vld [vmem:[%s2911 + $0x18] sm:$0xf]
    %v2919 = vld [vmem:[%s2911 + $0x1c] sm:$0xf]
    %v2928 = vunpack.c.l.b16 %v2912
    %v2929 = vunpack.c.l.b16 %v2913
    %v2930 = vunpack.c.l.b16 %v2914
    %v2931 = vunpack.c.l.b16 %v2915
    %v2932 = vunpack.c.l.b16 %v2916
    %v2933 = vunpack.c.l.b16 %v2917
    %v2934 = vunpack.c.l.b16 %v2918
    %v2935 = vunpack.c.l.b16 %v2919
    %v2936 = vpack.c.b16 %v2929, %v2928
    %v2937 = vpack.c.b16 %v2931, %v2930
    %v2938 = vpack.c.b16 %v2933, %v2932
    %v2939 = vpack.c.b16 %v2935, %v2934
    %v2945 = vsel %vm1883, %v2910, 0
    %2947 = vmatprep.subr.bf16.mxu0 0
    %2948 = vmatpush1.bf16.msra.mxu0 0
    %2949 = vmatprep.subr.bf16.mxu0 0
    %2950 = vmatpush1.bf16.msra.mxu0 0
    %2951 = vmatprep.subr.bf16.mxu0 0
    %2952 = vmatpush1.bf16.msra.mxu0 0
    %2953 = vmatprep.subr.bf16.mxu0 0
    %2954 = vmatpush1.bf16.msra.mxu0 0
    %2955 = vmatprep.subr.bf16.mxu0 0
    %2956 = vmatpush1.bf16.msra.mxu0 %v2939
    %2957 = vmatprep.subr.bf16.mxu0 0
    %2958 = vmatpush1.bf16.msra.mxu0 %v2938
    %2959 = vmatprep.subr.bf16.mxu0 0
    %2960 = vmatpush1.bf16.msra.mxu0 %v2937
    %2961 = vmatprep.subr.bf16.mxu0 0
    %2962 = vmatpush1.bf16.msra.mxu0 %v2936
    %2963 = vmatprep.subr.bf16.mxu0 0
    %2964 = vmatpush2.bf16.msra.mxu0 0
    %2965 = vmatprep.subr.bf16.mxu0 0
    %2966 = vmatpush2.bf16.msra.mxu0 0
    %2967 = vmatprep.subr.bf16.mxu0 0
    %2968 = vmatpush2.bf16.msra.mxu0 0
    %2969 = vmatprep.subr.bf16.mxu0 0
    %2970 = vmatpush2.bf16.msra.mxu0 0
    %2971 = vmatprep.subr.bf16.mxu0 0
    %2972 = vmatpush2.bf16.msra.mxu0 0
    %2973 = vmatprep.subr.bf16.mxu0 0
    %2974 = vmatpush2.bf16.msra.mxu0 0
    %2975 = vmatprep.subr.bf16.mxu0 0
    %2976 = vmatpush2.bf16.msra.mxu0 0
    %2977 = vmatprep.subr.bf16.mxu0 0
    %2978 = vmatpush2.bf16.msra.mxu0 0
    %2979 = vmatprep.mubr.bf16.mxu0 0
    %2980 = vmatmul.mubr.bf16.gmra.mxu0 %v2945
    %v2981 = vpop.f32.mrf.mxu0
    %v2982 = vadd.f32 0.0, %v2981
    %v2983 = vpop.f32.mrf.mxu0
    %v2984 = vpop.f32.mrf.mxu0
    %v2985 = vpop.f32.mrf.mxu0
    %2986 = vdwg.mxu0
    %v2987 = vadd.f32 %v2860, %v2982
    %s2988 = scalar_lea.vmem %s11, 6
    %v2989 = vld [vmem:[%s2988] sm:$0x3]
    %v2991 = vsel %vm2623, %v2989, 0
    %2993 = vmatprep.subr.bf16.mxu0 0
    %2994 = vmatpush1.bf16.msra.mxu0 0
    %2995 = vmatprep.subr.bf16.mxu0 0
    %2996 = vmatpush1.bf16.msra.mxu0 0
    %2997 = vmatprep.subr.bf16.mxu0 0
    %2998 = vmatpush1.bf16.msra.mxu0 0
    %2999 = vmatprep.subr.bf16.mxu0 0
    %3000 = vmatpush1.bf16.msra.mxu0 0
    %3001 = vmatprep.subr.bf16.mxu0 0
    %3002 = vmatpush1.bf16.msra.mxu0 0
    %3003 = vmatprep.subr.bf16.mxu0 0
    %3004 = vmatpush1.bf16.msra.mxu0 0
    %3005 = vmatprep.subr.bf16.mxu0 0
    %3006 = vmatpush1.bf16.msra.mxu0 0
    %3007 = vmatprep.subr.bf16.mxu0 0
    %3008 = vmatpush1.bf16.msra.mxu0 %v2621
    %3009 = vmatprep.subr.bf16.mxu0 0
    %3010 = vmatpush2.bf16.msra.mxu0 0
    %3011 = vmatprep.subr.bf16.mxu0 0
    %3012 = vmatpush2.bf16.msra.mxu0 0
    %3013 = vmatprep.subr.bf16.mxu0 0
    %3014 = vmatpush2.bf16.msra.mxu0 0
    %3015 = vmatprep.subr.bf16.mxu0 0
    %3016 = vmatpush2.bf16.msra.mxu0 0
    %3017 = vmatprep.subr.bf16.mxu0 0
    %3018 = vmatpush2.bf16.msra.mxu0 0
    %3019 = vmatprep.subr.bf16.mxu0 0
    %3020 = vmatpush2.bf16.msra.mxu0 0
    %3021 = vmatprep.subr.bf16.mxu0 0
    %3022 = vmatpush2.bf16.msra.mxu0 0
    %3023 = vmatprep.subr.bf16.mxu0 0
    %3024 = vmatpush2.bf16.msra.mxu0 0
    %3025 = vmatprep.mubr.bf16.mxu0 0
    %3026 = vmatmul.mubr.bf16.gmra.mxu0 %v2991
    %v3027 = vpop.f32.mrf.mxu0
    %v3028 = vadd.f32 0.0, %v3027
    %v3029 = vpop.f32.mrf.mxu0
    %v3030 = vpop.f32.mrf.mxu0
    %v3031 = vpop.f32.mrf.mxu0
    %3032 = vdwg.mxu0
    %v3033 = vpack.c.bf16 %v3028, %v3028
    %s3034 = scalar_lea.vmem %s12, 96
    %v3035 = vld [vmem:[%s3034] sm:$0xf]
    %v3036 = vld [vmem:[%s3034 + $0x4] sm:$0xf]
    %v3037 = vld [vmem:[%s3034 + $0x8] sm:$0xf]
    %v3038 = vld [vmem:[%s3034 + $0xc] sm:$0xf]
    %v3039 = vld [vmem:[%s3034 + $0x10] sm:$0xf]
    %v3040 = vld [vmem:[%s3034 + $0x14] sm:$0xf]
    %v3041 = vld [vmem:[%s3034 + $0x18] sm:$0xf]
    %v3042 = vld [vmem:[%s3034 + $0x1c] sm:$0xf]
    %v3051 = vunpack.c.l.b16 %v3035
    %v3052 = vunpack.c.l.b16 %v3036
    %v3053 = vunpack.c.l.b16 %v3037
    %v3054 = vunpack.c.l.b16 %v3038
    %v3055 = vunpack.c.l.b16 %v3039
    %v3056 = vunpack.c.l.b16 %v3040
    %v3057 = vunpack.c.l.b16 %v3041
    %v3058 = vunpack.c.l.b16 %v3042
    %v3059 = vpack.c.b16 %v3052, %v3051
    %v3060 = vpack.c.b16 %v3054, %v3053
    %v3061 = vpack.c.b16 %v3056, %v3055
    %v3062 = vpack.c.b16 %v3058, %v3057
    %v3068 = vsel %vm1883, %v3033, 0
    %3070 = vmatprep.subr.bf16.mxu0 0
    %3071 = vmatpush1.bf16.msra.mxu0 0
    %3072 = vmatprep.subr.bf16.mxu0 0
    %3073 = vmatpush1.bf16.msra.mxu0 0
    %3074 = vmatprep.subr.bf16.mxu0 0
    %3075 = vmatpush1.bf16.msra.mxu0 0
    %3076 = vmatprep.subr.bf16.mxu0 0
    %3077 = vmatpush1.bf16.msra.mxu0 0
    %3078 = vmatprep.subr.bf16.mxu0 0
    %3079 = vmatpush1.bf16.msra.mxu0 %v3062
    %3080 = vmatprep.subr.bf16.mxu0 0
    %3081 = vmatpush1.bf16.msra.mxu0 %v3061
    %3082 = vmatprep.subr.bf16.mxu0 0
    %3083 = vmatpush1.bf16.msra.mxu0 %v3060
    %3084 = vmatprep.subr.bf16.mxu0 0
    %3085 = vmatpush1.bf16.msra.mxu0 %v3059
    %3086 = vmatprep.subr.bf16.mxu0 0
    %3087 = vmatpush2.bf16.msra.mxu0 0
    %3088 = vmatprep.subr.bf16.mxu0 0
    %3089 = vmatpush2.bf16.msra.mxu0 0
    %3090 = vmatprep.subr.bf16.mxu0 0
    %3091 = vmatpush2.bf16.msra.mxu0 0
    %3092 = vmatprep.subr.bf16.mxu0 0
    %3093 = vmatpush2.bf16.msra.mxu0 0
    %3094 = vmatprep.subr.bf16.mxu0 0
    %3095 = vmatpush2.bf16.msra.mxu0 0
    %3096 = vmatprep.subr.bf16.mxu0 0
    %3097 = vmatpush2.bf16.msra.mxu0 0
    %3098 = vmatprep.subr.bf16.mxu0 0
    %3099 = vmatpush2.bf16.msra.mxu0 0
    %3100 = vmatprep.subr.bf16.mxu0 0
    %3101 = vmatpush2.bf16.msra.mxu0 0
    %3102 = vmatprep.mubr.bf16.mxu0 0
    %3103 = vmatmul.mubr.bf16.gmra.mxu0 %v3068
    %v3104 = vpop.f32.mrf.mxu0
    %v3105 = vadd.f32 0.0, %v3104
    %v3106 = vpop.f32.mrf.mxu0
    %v3107 = vpop.f32.mrf.mxu0
    %v3108 = vpop.f32.mrf.mxu0
    %3109 = vdwg.mxu0
    %v3110 = vadd.f32 %v2987, %v3105
    %s3111 = scalar_lea.vmem %s11, 8
    %v3112 = vld [vmem:[%s3111] sm:$0x3]
    %v3114 = vsel %vm2623, %v3112, 0
    %3116 = vmatprep.subr.bf16.mxu0 0
    %3117 = vmatpush1.bf16.msra.mxu0 0
    %3118 = vmatprep.subr.bf16.mxu0 0
    %3119 = vmatpush1.bf16.msra.mxu0 0
    %3120 = vmatprep.subr.bf16.mxu0 0
    %3121 = vmatpush1.bf16.msra.mxu0 0
    %3122 = vmatprep.subr.bf16.mxu0 0
    %3123 = vmatpush1.bf16.msra.mxu0 0
    %3124 = vmatprep.subr.bf16.mxu0 0
    %3125 = vmatpush1.bf16.msra.mxu0 0
    %3126 = vmatprep.subr.bf16.mxu0 0
    %3127 = vmatpush1.bf16.msra.mxu0 0
    %3128 = vmatprep.subr.bf16.mxu0 0
    %3129 = vmatpush1.bf16.msra.mxu0 0
    %3130 = vmatprep.subr.bf16.mxu0 0
    %3131 = vmatpush1.bf16.msra.mxu0 %v2621
    %3132 = vmatprep.subr.bf16.mxu0 0
    %3133 = vmatpush2.bf16.msra.mxu0 0
    %3134 = vmatprep.subr.bf16.mxu0 0
    %3135 = vmatpush2.bf16.msra.mxu0 0
    %3136 = vmatprep.subr.bf16.mxu0 0
    %3137 = vmatpush2.bf16.msra.mxu0 0
    %3138 = vmatprep.subr.bf16.mxu0 0
    %3139 = vmatpush2.bf16.msra.mxu0 0
    %3140 = vmatprep.subr.bf16.mxu0 0
    %3141 = vmatpush2.bf16.msra.mxu0 0
    %3142 = vmatprep.subr.bf16.mxu0 0
    %3143 = vmatpush2.bf16.msra.mxu0 0
    %3144 = vmatprep.subr.bf16.mxu0 0
    %3145 = vmatpush2.bf16.msra.mxu0 0
    %3146 = vmatprep.subr.bf16.mxu0 0
    %3147 = vmatpush2.bf16.msra.mxu0 0
    %3148 = vmatprep.mubr.bf16.mxu0 0
    %3149 = vmatmul.mubr.bf16.gmra.mxu0 %v3114
    %v3150 = vpop.f32.mrf.mxu0
    %v3151 = vadd.f32 0.0, %v3150
    %v3152 = vpop.f32.mrf.mxu0
    %v3153 = vpop.f32.mrf.mxu0
    %v3154 = vpop.f32.mrf.mxu0
    %3155 = vdwg.mxu0
    %v3156 = vpack.c.bf16 %v3151, %v3151
    %s3157 = scalar_lea.vmem %s12, 128
    %v3158 = vld [vmem:[%s3157] sm:$0xf]
    %v3159 = vld [vmem:[%s3157 + $0x4] sm:$0xf]
    %v3160 = vld [vmem:[%s3157 + $0x8] sm:$0xf]
    %v3161 = vld [vmem:[%s3157 + $0xc] sm:$0xf]
    %v3162 = vld [vmem:[%s3157 + $0x10] sm:$0xf]
    %v3163 = vld [vmem:[%s3157 + $0x14] sm:$0xf]
    %v3164 = vld [vmem:[%s3157 + $0x18] sm:$0xf]
    %v3165 = vld [vmem:[%s3157 + $0x1c] sm:$0xf]
    %v3174 = vunpack.c.l.b16 %v3158
    %v3175 = vunpack.c.l.b16 %v3159
    %v3176 = vunpack.c.l.b16 %v3160
    %v3177 = vunpack.c.l.b16 %v3161
    %v3178 = vunpack.c.l.b16 %v3162
    %v3179 = vunpack.c.l.b16 %v3163
    %v3180 = vunpack.c.l.b16 %v3164
    %v3181 = vunpack.c.l.b16 %v3165
    %v3182 = vpack.c.b16 %v3175, %v3174
    %v3183 = vpack.c.b16 %v3177, %v3176
    %v3184 = vpack.c.b16 %v3179, %v3178
    %v3185 = vpack.c.b16 %v3181, %v3180
    %v3191 = vsel %vm1883, %v3156, 0
    %3193 = vmatprep.subr.bf16.mxu0 0
    %3194 = vmatpush1.bf16.msra.mxu0 0
    %3195 = vmatprep.subr.bf16.mxu0 0
    %3196 = vmatpush1.bf16.msra.mxu0 0
    %3197 = vmatprep.subr.bf16.mxu0 0
    %3198 = vmatpush1.bf16.msra.mxu0 0
    %3199 = vmatprep.subr.bf16.mxu0 0
    %3200 = vmatpush1.bf16.msra.mxu0 0
    %3201 = vmatprep.subr.bf16.mxu0 0
    %3202 = vmatpush1.bf16.msra.mxu0 %v3185
    %3203 = vmatprep.subr.bf16.mxu0 0
    %3204 = vmatpush1.bf16.msra.mxu0 %v3184
    %3205 = vmatprep.subr.bf16.mxu0 0
    %3206 = vmatpush1.bf16.msra.mxu0 %v3183
    %3207 = vmatprep.subr.bf16.mxu0 0
    %3208 = vmatpush1.bf16.msra.mxu0 %v3182
    %3209 = vmatprep.subr.bf16.mxu0 0
    %3210 = vmatpush2.bf16.msra.mxu0 0
    %3211 = vmatprep.subr.bf16.mxu0 0
    %3212 = vmatpush2.bf16.msra.mxu0 0
    %3213 = vmatprep.subr.bf16.mxu0 0
    %3214 = vmatpush2.bf16.msra.mxu0 0
    %3215 = vmatprep.subr.bf16.mxu0 0
    %3216 = vmatpush2.bf16.msra.mxu0 0
    %3217 = vmatprep.subr.bf16.mxu0 0
    %3218 = vmatpush2.bf16.msra.mxu0 0
    %3219 = vmatprep.subr.bf16.mxu0 0
    %3220 = vmatpush2.bf16.msra.mxu0 0
    %3221 = vmatprep.subr.bf16.mxu0 0
    %3222 = vmatpush2.bf16.msra.mxu0 0
    %3223 = vmatprep.subr.bf16.mxu0 0
    %3224 = vmatpush2.bf16.msra.mxu0 0
    %3225 = vmatprep.mubr.bf16.mxu0 0
    %3226 = vmatmul.mubr.bf16.gmra.mxu0 %v3191
    %v3227 = vpop.f32.mrf.mxu0
    %v3228 = vadd.f32 0.0, %v3227
    %v3229 = vpop.f32.mrf.mxu0
    %v3230 = vpop.f32.mrf.mxu0
    %v3231 = vpop.f32.mrf.mxu0
    %3232 = vdwg.mxu0
    %v3233 = vadd.f32 %v3110, %v3228
    %s3234 = scalar_lea.vmem %s11, 10
    %v3235 = vld [vmem:[%s3234] sm:$0x3]
    %v3237 = vsel %vm2623, %v3235, 0
    %3239 = vmatprep.subr.bf16.mxu0 0
    %3240 = vmatpush1.bf16.msra.mxu0 0
    %3241 = vmatprep.subr.bf16.mxu0 0
    %3242 = vmatpush1.bf16.msra.mxu0 0
    %3243 = vmatprep.subr.bf16.mxu0 0
    %3244 = vmatpush1.bf16.msra.mxu0 0
    %3245 = vmatprep.subr.bf16.mxu0 0
    %3246 = vmatpush1.bf16.msra.mxu0 0
    %3247 = vmatprep.subr.bf16.mxu0 0
    %3248 = vmatpush1.bf16.msra.mxu0 0
    %3249 = vmatprep.subr.bf16.mxu0 0
    %3250 = vmatpush1.bf16.msra.mxu0 0
    %3251 = vmatprep.subr.bf16.mxu0 0
    %3252 = vmatpush1.bf16.msra.mxu0 0
    %3253 = vmatprep.subr.bf16.mxu0 0
    %3254 = vmatpush1.bf16.msra.mxu0 %v2621
    %3255 = vmatprep.subr.bf16.mxu0 0
    %3256 = vmatpush2.bf16.msra.mxu0 0
    %3257 = vmatprep.subr.bf16.mxu0 0
    %3258 = vmatpush2.bf16.msra.mxu0 0
    %3259 = vmatprep.subr.bf16.mxu0 0
    %3260 = vmatpush2.bf16.msra.mxu0 0
    %3261 = vmatprep.subr.bf16.mxu0 0
    %3262 = vmatpush2.bf16.msra.mxu0 0
    %3263 = vmatprep.subr.bf16.mxu0 0
    %3264 = vmatpush2.bf16.msra.mxu0 0
    %3265 = vmatprep.subr.bf16.mxu0 0
    %3266 = vmatpush2.bf16.msra.mxu0 0
    %3267 = vmatprep.subr.bf16.mxu0 0
    %3268 = vmatpush2.bf16.msra.mxu0 0
    %3269 = vmatprep.subr.bf16.mxu0 0
    %3270 = vmatpush2.bf16.msra.mxu0 0
    %3271 = vmatprep.mubr.bf16.mxu0 0
    %3272 = vmatmul.mubr.bf16.gmra.mxu0 %v3237
    %v3273 = vpop.f32.mrf.mxu0
    %v3274 = vadd.f32 0.0, %v3273
    %v3275 = vpop.f32.mrf.mxu0
    %v3276 = vpop.f32.mrf.mxu0
    %v3277 = vpop.f32.mrf.mxu0
    %3278 = vdwg.mxu0
    %v3279 = vpack.c.bf16 %v3274, %v3274
    %s3280 = scalar_lea.vmem %s12, 160
    %v3281 = vld [vmem:[%s3280] sm:$0xf]
    %v3282 = vld [vmem:[%s3280 + $0x4] sm:$0xf]
    %v3283 = vld [vmem:[%s3280 + $0x8] sm:$0xf]
    %v3284 = vld [vmem:[%s3280 + $0xc] sm:$0xf]
    %v3285 = vld [vmem:[%s3280 + $0x10] sm:$0xf]
    %v3286 = vld [vmem:[%s3280 + $0x14] sm:$0xf]
    %v3287 = vld [vmem:[%s3280 + $0x18] sm:$0xf]
    %v3288 = vld [vmem:[%s3280 + $0x1c] sm:$0xf]
    %v3297 = vunpack.c.l.b16 %v3281
    %v3298 = vunpack.c.l.b16 %v3282
    %v3299 = vunpack.c.l.b16 %v3283
    %v3300 = vunpack.c.l.b16 %v3284
    %v3301 = vunpack.c.l.b16 %v3285
    %v3302 = vunpack.c.l.b16 %v3286
    %v3303 = vunpack.c.l.b16 %v3287
    %v3304 = vunpack.c.l.b16 %v3288
    %v3305 = vpack.c.b16 %v3298, %v3297
    %v3306 = vpack.c.b16 %v3300, %v3299
    %v3307 = vpack.c.b16 %v3302, %v3301
    %v3308 = vpack.c.b16 %v3304, %v3303
    %v3314 = vsel %vm1883, %v3279, 0
    %3316 = vmatprep.subr.bf16.mxu0 0
    %3317 = vmatpush1.bf16.msra.mxu0 0
    %3318 = vmatprep.subr.bf16.mxu0 0
    %3319 = vmatpush1.bf16.msra.mxu0 0
    %3320 = vmatprep.subr.bf16.mxu0 0
    %3321 = vmatpush1.bf16.msra.mxu0 0
    %3322 = vmatprep.subr.bf16.mxu0 0
    %3323 = vmatpush1.bf16.msra.mxu0 0
    %3324 = vmatprep.subr.bf16.mxu0 0
    %3325 = vmatpush1.bf16.msra.mxu0 %v3308
    %3326 = vmatprep.subr.bf16.mxu0 0
    %3327 = vmatpush1.bf16.msra.mxu0 %v3307
    %3328 = vmatprep.subr.bf16.mxu0 0
    %3329 = vmatpush1.bf16.msra.mxu0 %v3306
    %3330 = vmatprep.subr.bf16.mxu0 0
    %3331 = vmatpush1.bf16.msra.mxu0 %v3305
    %3332 = vmatprep.subr.bf16.mxu0 0
    %3333 = vmatpush2.bf16.msra.mxu0 0
    %3334 = vmatprep.subr.bf16.mxu0 0
    %3335 = vmatpush2.bf16.msra.mxu0 0
    %3336 = vmatprep.subr.bf16.mxu0 0
    %3337 = vmatpush2.bf16.msra.mxu0 0
    %3338 = vmatprep.subr.bf16.mxu0 0
    %3339 = vmatpush2.bf16.msra.mxu0 0
    %3340 = vmatprep.subr.bf16.mxu0 0
    %3341 = vmatpush2.bf16.msra.mxu0 0
    %3342 = vmatprep.subr.bf16.mxu0 0
    %3343 = vmatpush2.bf16.msra.mxu0 0
    %3344 = vmatprep.subr.bf16.mxu0 0
    %3345 = vmatpush2.bf16.msra.mxu0 0
    %3346 = vmatprep.subr.bf16.mxu0 0
    %3347 = vmatpush2.bf16.msra.mxu0 0
    %3348 = vmatprep.mubr.bf16.mxu0 0
    %3349 = vmatmul.mubr.bf16.gmra.mxu0 %v3314
    %v3350 = vpop.f32.mrf.mxu0
    %v3351 = vadd.f32 0.0, %v3350
    %v3352 = vpop.f32.mrf.mxu0
    %v3353 = vpop.f32.mrf.mxu0
    %v3354 = vpop.f32.mrf.mxu0
    %3355 = vdwg.mxu0
    %v3356 = vadd.f32 %v3233, %v3351
    %s3357 = scalar_lea.vmem %s11, 12
    %v3358 = vld [vmem:[%s3357] sm:$0x3]
    %v3360 = vsel %vm2623, %v3358, 0
    %3362 = vmatprep.subr.bf16.mxu0 0
    %3363 = vmatpush1.bf16.msra.mxu0 0
    %3364 = vmatprep.subr.bf16.mxu0 0
    %3365 = vmatpush1.bf16.msra.mxu0 0
    %3366 = vmatprep.subr.bf16.mxu0 0
    %3367 = vmatpush1.bf16.msra.mxu0 0
    %3368 = vmatprep.subr.bf16.mxu0 0
    %3369 = vmatpush1.bf16.msra.mxu0 0
    %3370 = vmatprep.subr.bf16.mxu0 0
    %3371 = vmatpush1.bf16.msra.mxu0 0
    %3372 = vmatprep.subr.bf16.mxu0 0
    %3373 = vmatpush1.bf16.msra.mxu0 0
    %3374 = vmatprep.subr.bf16.mxu0 0
    %3375 = vmatpush1.bf16.msra.mxu0 0
    %3376 = vmatprep.subr.bf16.mxu0 0
    %3377 = vmatpush1.bf16.msra.mxu0 %v2621
    %3378 = vmatprep.subr.bf16.mxu0 0
    %3379 = vmatpush2.bf16.msra.mxu0 0
    %3380 = vmatprep.subr.bf16.mxu0 0
    %3381 = vmatpush2.bf16.msra.mxu0 0
    %3382 = vmatprep.subr.bf16.mxu0 0
    %3383 = vmatpush2.bf16.msra.mxu0 0
    %3384 = vmatprep.subr.bf16.mxu0 0
    %3385 = vmatpush2.bf16.msra.mxu0 0
    %3386 = vmatprep.subr.bf16.mxu0 0
    %3387 = vmatpush2.bf16.msra.mxu0 0
    %3388 = vmatprep.subr.bf16.mxu0 0
    %3389 = vmatpush2.bf16.msra.mxu0 0
    %3390 = vmatprep.subr.bf16.mxu0 0
    %3391 = vmatpush2.bf16.msra.mxu0 0
    %3392 = vmatprep.subr.bf16.mxu0 0
    %3393 = vmatpush2.bf16.msra.mxu0 0
    %3394 = vmatprep.mubr.bf16.mxu0 0
    %3395 = vmatmul.mubr.bf16.gmra.mxu0 %v3360
    %v3396 = vpop.f32.mrf.mxu0
    %v3397 = vadd.f32 0.0, %v3396
    %v3398 = vpop.f32.mrf.mxu0
    %v3399 = vpop.f32.mrf.mxu0
    %v3400 = vpop.f32.mrf.mxu0
    %3401 = vdwg.mxu0
    %v3402 = vpack.c.bf16 %v3397, %v3397
    %s3403 = scalar_lea.vmem %s12, 192
    %v3404 = vld [vmem:[%s3403] sm:$0xf]
    %v3405 = vld [vmem:[%s3403 + $0x4] sm:$0xf]
    %v3406 = vld [vmem:[%s3403 + $0x8] sm:$0xf]
    %v3407 = vld [vmem:[%s3403 + $0xc] sm:$0xf]
    %v3408 = vld [vmem:[%s3403 + $0x10] sm:$0xf]
    %v3409 = vld [vmem:[%s3403 + $0x14] sm:$0xf]
    %v3410 = vld [vmem:[%s3403 + $0x18] sm:$0xf]
    %v3411 = vld [vmem:[%s3403 + $0x1c] sm:$0xf]
    %v3420 = vunpack.c.l.b16 %v3404
    %v3421 = vunpack.c.l.b16 %v3405
    %v3422 = vunpack.c.l.b16 %v3406
    %v3423 = vunpack.c.l.b16 %v3407
    %v3424 = vunpack.c.l.b16 %v3408
    %v3425 = vunpack.c.l.b16 %v3409
    %v3426 = vunpack.c.l.b16 %v3410
    %v3427 = vunpack.c.l.b16 %v3411
    %v3428 = vpack.c.b16 %v3421, %v3420
    %v3429 = vpack.c.b16 %v3423, %v3422
    %v3430 = vpack.c.b16 %v3425, %v3424
    %v3431 = vpack.c.b16 %v3427, %v3426
    %v3437 = vsel %vm1883, %v3402, 0
    %3439 = vmatprep.subr.bf16.mxu0 0
    %3440 = vmatpush1.bf16.msra.mxu0 0
    %3441 = vmatprep.subr.bf16.mxu0 0
    %3442 = vmatpush1.bf16.msra.mxu0 0
    %3443 = vmatprep.subr.bf16.mxu0 0
    %3444 = vmatpush1.bf16.msra.mxu0 0
    %3445 = vmatprep.subr.bf16.mxu0 0
    %3446 = vmatpush1.bf16.msra.mxu0 0
    %3447 = vmatprep.subr.bf16.mxu0 0
    %3448 = vmatpush1.bf16.msra.mxu0 %v3431
    %3449 = vmatprep.subr.bf16.mxu0 0
    %3450 = vmatpush1.bf16.msra.mxu0 %v3430
    %3451 = vmatprep.subr.bf16.mxu0 0
    %3452 = vmatpush1.bf16.msra.mxu0 %v3429
    %3453 = vmatprep.subr.bf16.mxu0 0
    %3454 = vmatpush1.bf16.msra.mxu0 %v3428
    %3455 = vmatprep.subr.bf16.mxu0 0
    %3456 = vmatpush2.bf16.msra.mxu0 0
    %3457 = vmatprep.subr.bf16.mxu0 0
    %3458 = vmatpush2.bf16.msra.mxu0 0
    %3459 = vmatprep.subr.bf16.mxu0 0
    %3460 = vmatpush2.bf16.msra.mxu0 0
    %3461 = vmatprep.subr.bf16.mxu0 0
    %3462 = vmatpush2.bf16.msra.mxu0 0
    %3463 = vmatprep.subr.bf16.mxu0 0
    %3464 = vmatpush2.bf16.msra.mxu0 0
    %3465 = vmatprep.subr.bf16.mxu0 0
    %3466 = vmatpush2.bf16.msra.mxu0 0
    %3467 = vmatprep.subr.bf16.mxu0 0
    %3468 = vmatpush2.bf16.msra.mxu0 0
    %3469 = vmatprep.subr.bf16.mxu0 0
    %3470 = vmatpush2.bf16.msra.mxu0 0
    %3471 = vmatprep.mubr.bf16.mxu0 0
    %3472 = vmatmul.mubr.bf16.gmra.mxu0 %v3437
    %v3473 = vpop.f32.mrf.mxu0
    %v3474 = vadd.f32 0.0, %v3473
    %v3475 = vpop.f32.mrf.mxu0
    %v3476 = vpop.f32.mrf.mxu0
    %v3477 = vpop.f32.mrf.mxu0
    %3478 = vdwg.mxu0
    %v3479 = vadd.f32 %v3356, %v3474
    %s3480 = scalar_lea.vmem %s11, 14
    %v3481 = vld [vmem:[%s3480] sm:$0x3]
    %v3483 = vsel %vm2623, %v3481, 0
    %3485 = vmatprep.subr.bf16.mxu0 0
    %3486 = vmatpush1.bf16.msra.mxu0 0
    %3487 = vmatprep.subr.bf16.mxu0 0
    %3488 = vmatpush1.bf16.msra.mxu0 0
    %3489 = vmatprep.subr.bf16.mxu0 0
    %3490 = vmatpush1.bf16.msra.mxu0 0
    %3491 = vmatprep.subr.bf16.mxu0 0
    %3492 = vmatpush1.bf16.msra.mxu0 0
    %3493 = vmatprep.subr.bf16.mxu0 0
    %3494 = vmatpush1.bf16.msra.mxu0 0
    %3495 = vmatprep.subr.bf16.mxu0 0
    %3496 = vmatpush1.bf16.msra.mxu0 0
    %3497 = vmatprep.subr.bf16.mxu0 0
    %3498 = vmatpush1.bf16.msra.mxu0 0
    %3499 = vmatprep.subr.bf16.mxu0 0
    %3500 = vmatpush1.bf16.msra.mxu0 %v2621
    %3501 = vmatprep.subr.bf16.mxu0 0
    %3502 = vmatpush2.bf16.msra.mxu0 0
    %3503 = vmatprep.subr.bf16.mxu0 0
    %3504 = vmatpush2.bf16.msra.mxu0 0
    %3505 = vmatprep.subr.bf16.mxu0 0
    %3506 = vmatpush2.bf16.msra.mxu0 0
    %3507 = vmatprep.subr.bf16.mxu0 0
    %3508 = vmatpush2.bf16.msra.mxu0 0
    %3509 = vmatprep.subr.bf16.mxu0 0
    %3510 = vmatpush2.bf16.msra.mxu0 0
    %3511 = vmatprep.subr.bf16.mxu0 0
    %3512 = vmatpush2.bf16.msra.mxu0 0
    %3513 = vmatprep.subr.bf16.mxu0 0
    %3514 = vmatpush2.bf16.msra.mxu0 0
    %3515 = vmatprep.subr.bf16.mxu0 0
    %3516 = vmatpush2.bf16.msra.mxu0 0
    %3517 = vmatprep.mubr.bf16.mxu0 0
    %3518 = vmatmul.mubr.bf16.gmra.mxu0 %v3483
    %v3519 = vpop.f32.mrf.mxu0
    %v3520 = vadd.f32 0.0, %v3519
    %v3521 = vpop.f32.mrf.mxu0
    %v3522 = vpop.f32.mrf.mxu0
    %v3523 = vpop.f32.mrf.mxu0
    %3524 = vdwg.mxu0
    %v3525 = vpack.c.bf16 %v3520, %v3520
    %s3526 = scalar_lea.vmem %s12, 224
    %v3527 = vld [vmem:[%s3526] sm:$0xf]
    %v3528 = vld [vmem:[%s3526 + $0x4] sm:$0xf]
    %v3529 = vld [vmem:[%s3526 + $0x8] sm:$0xf]
    %v3530 = vld [vmem:[%s3526 + $0xc] sm:$0xf]
    %v3531 = vld [vmem:[%s3526 + $0x10] sm:$0xf]
    %v3532 = vld [vmem:[%s3526 + $0x14] sm:$0xf]
    %v3533 = vld [vmem:[%s3526 + $0x18] sm:$0xf]
    %v3534 = vld [vmem:[%s3526 + $0x1c] sm:$0xf]
    %v3543 = vunpack.c.l.b16 %v3527
    %v3544 = vunpack.c.l.b16 %v3528
    %v3545 = vunpack.c.l.b16 %v3529
    %v3546 = vunpack.c.l.b16 %v3530
    %v3547 = vunpack.c.l.b16 %v3531
    %v3548 = vunpack.c.l.b16 %v3532
    %v3549 = vunpack.c.l.b16 %v3533
    %v3550 = vunpack.c.l.b16 %v3534
    %v3551 = vpack.c.b16 %v3544, %v3543
    %v3552 = vpack.c.b16 %v3546, %v3545
    %v3553 = vpack.c.b16 %v3548, %v3547
    %v3554 = vpack.c.b16 %v3550, %v3549
    %v3560 = vsel %vm1883, %v3525, 0
    %3562 = vmatprep.subr.bf16.mxu0 0
    %3563 = vmatpush1.bf16.msra.mxu0 0
    %3564 = vmatprep.subr.bf16.mxu0 0
    %3565 = vmatpush1.bf16.msra.mxu0 0
    %3566 = vmatprep.subr.bf16.mxu0 0
    %3567 = vmatpush1.bf16.msra.mxu0 0
    %3568 = vmatprep.subr.bf16.mxu0 0
    %3569 = vmatpush1.bf16.msra.mxu0 0
    %3570 = vmatprep.subr.bf16.mxu0 0
    %3571 = vmatpush1.bf16.msra.mxu0 %v3554
    %3572 = vmatprep.subr.bf16.mxu0 0
    %3573 = vmatpush1.bf16.msra.mxu0 %v3553
    %3574 = vmatprep.subr.bf16.mxu0 0
    %3575 = vmatpush1.bf16.msra.mxu0 %v3552
    %3576 = vmatprep.subr.bf16.mxu0 0
    %3577 = vmatpush1.bf16.msra.mxu0 %v3551
    %3578 = vmatprep.subr.bf16.mxu0 0
    %3579 = vmatpush2.bf16.msra.mxu0 0
    %3580 = vmatprep.subr.bf16.mxu0 0
    %3581 = vmatpush2.bf16.msra.mxu0 0
    %3582 = vmatprep.subr.bf16.mxu0 0
    %3583 = vmatpush2.bf16.msra.mxu0 0
    %3584 = vmatprep.subr.bf16.mxu0 0
    %3585 = vmatpush2.bf16.msra.mxu0 0
    %3586 = vmatprep.subr.bf16.mxu0 0
    %3587 = vmatpush2.bf16.msra.mxu0 0
    %3588 = vmatprep.subr.bf16.mxu0 0
    %3589 = vmatpush2.bf16.msra.mxu0 0
    %3590 = vmatprep.subr.bf16.mxu0 0
    %3591 = vmatpush2.bf16.msra.mxu0 0
    %3592 = vmatprep.subr.bf16.mxu0 0
    %3593 = vmatpush2.bf16.msra.mxu0 0
    %3594 = vmatprep.mubr.bf16.mxu0 0
    %3595 = vmatmul.mubr.bf16.gmra.mxu0 %v3560
    %v3596 = vpop.f32.mrf.mxu0
    %v3597 = vadd.f32 0.0, %v3596
    %v3598 = vpop.f32.mrf.mxu0
    %v3599 = vpop.f32.mrf.mxu0
    %v3600 = vpop.f32.mrf.mxu0
    %3601 = vdwg.mxu0
    %v3602 = vadd.f32 %v3479, %v3597
    %s3603 = scalar_lea.vmem %s11, 16
    %v3604 = vld [vmem:[%s3603] sm:$0x3]
    %v3606 = vsel %vm2623, %v3604, 0
    %3608 = vmatprep.subr.bf16.mxu0 0
    %3609 = vmatpush1.bf16.msra.mxu0 0
    %3610 = vmatprep.subr.bf16.mxu0 0
    %3611 = vmatpush1.bf16.msra.mxu0 0
    %3612 = vmatprep.subr.bf16.mxu0 0
    %3613 = vmatpush1.bf16.msra.mxu0 0
    %3614 = vmatprep.subr.bf16.mxu0 0
    %3615 = vmatpush1.bf16.msra.mxu0 0
    %3616 = vmatprep.subr.bf16.mxu0 0
    %3617 = vmatpush1.bf16.msra.mxu0 0
    %3618 = vmatprep.subr.bf16.mxu0 0
    %3619 = vmatpush1.bf16.msra.mxu0 0
    %3620 = vmatprep.subr.bf16.mxu0 0
    %3621 = vmatpush1.bf16.msra.mxu0 0
    %3622 = vmatprep.subr.bf16.mxu0 0
    %3623 = vmatpush1.bf16.msra.mxu0 %v2621
    %3624 = vmatprep.subr.bf16.mxu0 0
    %3625 = vmatpush2.bf16.msra.mxu0 0
    %3626 = vmatprep.subr.bf16.mxu0 0
    %3627 = vmatpush2.bf16.msra.mxu0 0
    %3628 = vmatprep.subr.bf16.mxu0 0
    %3629 = vmatpush2.bf16.msra.mxu0 0
    %3630 = vmatprep.subr.bf16.mxu0 0
    %3631 = vmatpush2.bf16.msra.mxu0 0
    %3632 = vmatprep.subr.bf16.mxu0 0
    %3633 = vmatpush2.bf16.msra.mxu0 0
    %3634 = vmatprep.subr.bf16.mxu0 0
    %3635 = vmatpush2.bf16.msra.mxu0 0
    %3636 = vmatprep.subr.bf16.mxu0 0
    %3637 = vmatpush2.bf16.msra.mxu0 0
    %3638 = vmatprep.subr.bf16.mxu0 0
    %3639 = vmatpush2.bf16.msra.mxu0 0
    %3640 = vmatprep.mubr.bf16.mxu0 0
    %3641 = vmatmul.mubr.bf16.gmra.mxu0 %v3606
    %v3642 = vpop.f32.mrf.mxu0
    %v3643 = vadd.f32 0.0, %v3642
    %v3644 = vpop.f32.mrf.mxu0
    %v3645 = vpop.f32.mrf.mxu0
    %v3646 = vpop.f32.mrf.mxu0
    %3647 = vdwg.mxu0
    %v3648 = vpack.c.bf16 %v3643, %v3643
    %s3649 = scalar_lea.vmem %s12, 256
    %v3650 = vld [vmem:[%s3649] sm:$0xf]
    %v3651 = vld [vmem:[%s3649 + $0x4] sm:$0xf]
    %v3652 = vld [vmem:[%s3649 + $0x8] sm:$0xf]
    %v3653 = vld [vmem:[%s3649 + $0xc] sm:$0xf]
    %v3654 = vld [vmem:[%s3649 + $0x10] sm:$0xf]
    %v3655 = vld [vmem:[%s3649 + $0x14] sm:$0xf]
    %v3656 = vld [vmem:[%s3649 + $0x18] sm:$0xf]
    %v3657 = vld [vmem:[%s3649 + $0x1c] sm:$0xf]
    %v3666 = vunpack.c.l.b16 %v3650
    %v3667 = vunpack.c.l.b16 %v3651
    %v3668 = vunpack.c.l.b16 %v3652
    %v3669 = vunpack.c.l.b16 %v3653
    %v3670 = vunpack.c.l.b16 %v3654
    %v3671 = vunpack.c.l.b16 %v3655
    %v3672 = vunpack.c.l.b16 %v3656
    %v3673 = vunpack.c.l.b16 %v3657
    %v3674 = vpack.c.b16 %v3667, %v3666
    %v3675 = vpack.c.b16 %v3669, %v3668
    %v3676 = vpack.c.b16 %v3671, %v3670
    %v3677 = vpack.c.b16 %v3673, %v3672
    %v3683 = vsel %vm1883, %v3648, 0
    %3685 = vmatprep.subr.bf16.mxu0 0
    %3686 = vmatpush1.bf16.msra.mxu0 0
    %3687 = vmatprep.subr.bf16.mxu0 0
    %3688 = vmatpush1.bf16.msra.mxu0 0
    %3689 = vmatprep.subr.bf16.mxu0 0
    %3690 = vmatpush1.bf16.msra.mxu0 0
    %3691 = vmatprep.subr.bf16.mxu0 0
    %3692 = vmatpush1.bf16.msra.mxu0 0
    %3693 = vmatprep.subr.bf16.mxu0 0
    %3694 = vmatpush1.bf16.msra.mxu0 %v3677
    %3695 = vmatprep.subr.bf16.mxu0 0
    %3696 = vmatpush1.bf16.msra.mxu0 %v3676
    %3697 = vmatprep.subr.bf16.mxu0 0
    %3698 = vmatpush1.bf16.msra.mxu0 %v3675
    %3699 = vmatprep.subr.bf16.mxu0 0
    %3700 = vmatpush1.bf16.msra.mxu0 %v3674
    %3701 = vmatprep.subr.bf16.mxu0 0
    %3702 = vmatpush2.bf16.msra.mxu0 0
    %3703 = vmatprep.subr.bf16.mxu0 0
    %3704 = vmatpush2.bf16.msra.mxu0 0
    %3705 = vmatprep.subr.bf16.mxu0 0
    %3706 = vmatpush2.bf16.msra.mxu0 0
    %3707 = vmatprep.subr.bf16.mxu0 0
    %3708 = vmatpush2.bf16.msra.mxu0 0
    %3709 = vmatprep.subr.bf16.mxu0 0
    %3710 = vmatpush2.bf16.msra.mxu0 0
    %3711 = vmatprep.subr.bf16.mxu0 0
    %3712 = vmatpush2.bf16.msra.mxu0 0
    %3713 = vmatprep.subr.bf16.mxu0 0
    %3714 = vmatpush2.bf16.msra.mxu0 0
    %3715 = vmatprep.subr.bf16.mxu0 0
    %3716 = vmatpush2.bf16.msra.mxu0 0
    %3717 = vmatprep.mubr.bf16.mxu0 0
    %3718 = vmatmul.mubr.bf16.gmra.mxu0 %v3683
    %v3719 = vpop.f32.mrf.mxu0
    %v3720 = vadd.f32 0.0, %v3719
    %v3721 = vpop.f32.mrf.mxu0
    %v3722 = vpop.f32.mrf.mxu0
    %v3723 = vpop.f32.mrf.mxu0
    %3724 = vdwg.mxu0
    %v3725 = vadd.f32 %v3602, %v3720
    %v3726 = vld [vmem:[%s13] sm:$0x1]
    %v3728 = vlaneseq
    %v3729 = vshrl.u32 %v3728, 7
    %v3730 = vsub.s32 0, %v3729
    %v3731 = vrot.slane %v3726, %v3730
    %v3733 = vadd.f32 %v3725, %v3731
    %vm3734 = vcmp.gt.f32.partialorder %v3733, 0.0
    %v3735 = vmul.f32 %v3733, 0.2
    %v3736 = vsel %vm3734, %v3733, %v3735
    %v3737 = vld [vmem:[%s14] sm:$0x1]
    %v3739 = vlaneseq
    %v3740 = vshrl.u32 %v3739, 7
    %v3741 = vsub.s32 0, %v3740
    %v3742 = vrot.slane %v3737, %v3741
    %v3744 = vmul.f32 %v3736, %v3742
    %v3745 = vld [vmem:[%s15] sm:$0x1]
    %v3747 = vlaneseq
    %v3748 = vshrl.u32 %v3747, 7
    %v3749 = vsub.s32 0, %v3748
    %v3750 = vrot.slane %v3745, %v3749
    %v3752 = vadd.f32 %v3744, %v3750
    %v3753 = vpack.c.bf16 %v3752, %v3752
    %v3754 = vld [vmem:[%s16] sm:$0x1]
    %vm3755 = vcmask 31744
    %v3757 = vsel %vm3755, %v3754, 0
    %vm3759 = vcmask 1041408
    %v3761 = vsel %vm3759, %v3753, 0
    %3763 = vmatprep.subr.bf16.mxu0 0
    %3764 = vmatpush1.bf16.msra.mxu0 0
    %3765 = vmatprep.subr.bf16.mxu0 0
    %3766 = vmatpush1.bf16.msra.mxu0 0
    %3767 = vmatprep.subr.bf16.mxu0 0
    %3768 = vmatpush1.bf16.msra.mxu0 0
    %3769 = vmatprep.subr.bf16.mxu0 0
    %3770 = vmatpush1.bf16.msra.mxu0 0
    %3771 = vmatprep.subr.bf16.mxu0 0
    %3772 = vmatpush1.bf16.msra.mxu0 0
    %3773 = vmatprep.subr.bf16.mxu0 0
    %3774 = vmatpush1.bf16.msra.mxu0 0
    %3775 = vmatprep.subr.bf16.mxu0 0
    %3776 = vmatpush1.bf16.msra.mxu0 0
    %3777 = vmatprep.subr.bf16.mxu0 0
    %3778 = vmatpush1.bf16.msra.mxu0 %v3761
    %3779 = vmatprep.subr.bf16.mxu0 0
    %3780 = vmatpush2.bf16.msra.mxu0 0
    %3781 = vmatprep.subr.bf16.mxu0 0
    %3782 = vmatpush2.bf16.msra.mxu0 0
    %3783 = vmatprep.subr.bf16.mxu0 0
    %3784 = vmatpush2.bf16.msra.mxu0 0
    %3785 = vmatprep.subr.bf16.mxu0 0
    %3786 = vmatpush2.bf16.msra.mxu0 0
    %3787 = vmatprep.subr.bf16.mxu0 0
    %3788 = vmatpush2.bf16.msra.mxu0 0
    %3789 = vmatprep.subr.bf16.mxu0 0
    %3790 = vmatpush2.bf16.msra.mxu0 0
    %3791 = vmatprep.subr.bf16.mxu0 0
    %3792 = vmatpush2.bf16.msra.mxu0 0
    %3793 = vmatprep.subr.bf16.mxu0 0
    %3794 = vmatpush2.bf16.msra.mxu0 0
    %3795 = vmatprep.mubr.bf16.mxu0 0
    %3796 = vmatmul.mubr.bf16.gmra.mxu0 %v3757
    %v3797 = vpop.f32.mrf.mxu0
    %v3798 = vadd.f32 0.0, %v3797
    %v3799 = vpop.f32.mrf.mxu0
    %v3800 = vpop.f32.mrf.mxu0
    %v3801 = vpop.f32.mrf.mxu0
    %3802 = vdwg.mxu0
    %v3803 = vpack.c.bf16 %v3798, %v3798
    %v3804 = vld [vmem:[%s17] sm:$0xff]
    %v3805 = vld [vmem:[%s17 + $0x8] sm:$0xff]
    %v3806 = vld [vmem:[%s17 + $0x10] sm:$0xff]
    %v3807 = vld [vmem:[%s17 + $0x18] sm:$0xff]
    %v3808 = vld [vmem:[%s17 + $0x20] sm:$0xff]
    %v3809 = vld [vmem:[%s17 + $0x28] sm:$0xff]
    %v3810 = vld [vmem:[%s17 + $0x30] sm:$0xff]
    %v3811 = vld [vmem:[%s17 + $0x38] sm:$0xff]
    %v3812 = vld [vmem:[%s17 + $0x40] sm:$0xff]
    %v3813 = vld [vmem:[%s17 + $0x48] sm:$0xff]
    %v3814 = vld [vmem:[%s17 + $0x50] sm:$0xff]
    %v3815 = vld [vmem:[%s17 + $0x58] sm:$0xff]
    %v3816 = vld [vmem:[%s17 + $0x60] sm:$0xff]
    %v3817 = vld [vmem:[%s17 + $0x68] sm:$0xff]
    %v3818 = vld [vmem:[%s17 + $0x70] sm:$0xff]
    %v3819 = vld [vmem:[%s17 + $0x78] sm:$0xff]
    %s3820 = scalar_lea.vmem %s16, 1
    %v3821 = vld [vmem:[%s3820] sm:$0x1]
    %v3823 = vsel %vm3755, %v3821, 0
    %3825 = vmatprep.subr.bf16.mxu0 0
    %3826 = vmatpush1.bf16.msra.mxu0 0
    %3827 = vmatprep.subr.bf16.mxu0 0
    %3828 = vmatpush1.bf16.msra.mxu0 0
    %3829 = vmatprep.subr.bf16.mxu0 0
    %3830 = vmatpush1.bf16.msra.mxu0 0
    %3831 = vmatprep.subr.bf16.mxu0 0
    %3832 = vmatpush1.bf16.msra.mxu0 0
    %3833 = vmatprep.subr.bf16.mxu0 0
    %3834 = vmatpush1.bf16.msra.mxu0 0
    %3835 = vmatprep.subr.bf16.mxu0 0
    %3836 = vmatpush1.bf16.msra.mxu0 0
    %3837 = vmatprep.subr.bf16.mxu0 0
    %3838 = vmatpush1.bf16.msra.mxu0 0
    %3839 = vmatprep.subr.bf16.mxu0 0
    %3840 = vmatpush1.bf16.msra.mxu0 %v3761
    %3841 = vmatprep.subr.bf16.mxu0 0
    %3842 = vmatpush2.bf16.msra.mxu0 0
    %3843 = vmatprep.subr.bf16.mxu0 0
    %3844 = vmatpush2.bf16.msra.mxu0 0
    %3845 = vmatprep.subr.bf16.mxu0 0
    %3846 = vmatpush2.bf16.msra.mxu0 0
    %3847 = vmatprep.subr.bf16.mxu0 0
    %3848 = vmatpush2.bf16.msra.mxu0 0
    %3849 = vmatprep.subr.bf16.mxu0 0
    %3850 = vmatpush2.bf16.msra.mxu0 0
    %3851 = vmatprep.subr.bf16.mxu0 0
    %3852 = vmatpush2.bf16.msra.mxu0 0
    %3853 = vmatprep.subr.bf16.mxu0 0
    %3854 = vmatpush2.bf16.msra.mxu0 0
    %3855 = vmatprep.subr.bf16.mxu0 0
    %3856 = vmatpush2.bf16.msra.mxu0 0
    %3857 = vmatprep.mubr.bf16.mxu0 0
    %3858 = vmatmul.mubr.bf16.gmra.mxu0 %v3823
    %v3859 = vpop.f32.mrf.mxu0
    %v3860 = vadd.f32 0.0, %v3859
    %v3861 = vpop.f32.mrf.mxu0
    %v3862 = vpop.f32.mrf.mxu0
    %v3863 = vpop.f32.mrf.mxu0
    %3864 = vdwg.mxu0
    %v3865 = vpack.c.bf16 %v3860, %v3860
    %s3866 = scalar_lea.vmem %s17, 128
    %v3867 = vld [vmem:[%s3866] sm:$0xff]
    %v3868 = vld [vmem:[%s3866 + $0x8] sm:$0xff]
    %v3869 = vld [vmem:[%s3866 + $0x10] sm:$0xff]
    %v3870 = vld [vmem:[%s3866 + $0x18] sm:$0xff]
    %v3871 = vld [vmem:[%s3866 + $0x20] sm:$0xff]
    %v3872 = vld [vmem:[%s3866 + $0x28] sm:$0xff]
    %v3873 = vld [vmem:[%s3866 + $0x30] sm:$0xff]
    %v3874 = vld [vmem:[%s3866 + $0x38] sm:$0xff]
    %v3875 = vld [vmem:[%s3866 + $0x40] sm:$0xff]
    %v3876 = vld [vmem:[%s3866 + $0x48] sm:$0xff]
    %v3877 = vld [vmem:[%s3866 + $0x50] sm:$0xff]
    %v3878 = vld [vmem:[%s3866 + $0x58] sm:$0xff]
    %v3879 = vld [vmem:[%s3866 + $0x60] sm:$0xff]
    %v3880 = vld [vmem:[%s3866 + $0x68] sm:$0xff]
    %v3881 = vld [vmem:[%s3866 + $0x70] sm:$0xff]
    %v3882 = vld [vmem:[%s3866 + $0x78] sm:$0xff]
    %v3899 = vunpack.c.l.b16 %v3867
    %v3900 = vunpack.c.h.b16 %v3867
    %v3901 = vunpack.c.l.b16 %v3868
    %v3902 = vunpack.c.h.b16 %v3868
    %v3903 = vunpack.c.l.b16 %v3869
    %v3904 = vunpack.c.h.b16 %v3869
    %v3905 = vunpack.c.l.b16 %v3870
    %v3906 = vunpack.c.h.b16 %v3870
    %v3907 = vunpack.c.l.b16 %v3871
    %v3908 = vunpack.c.h.b16 %v3871
    %v3909 = vunpack.c.l.b16 %v3872
    %v3910 = vunpack.c.h.b16 %v3872
    %v3911 = vunpack.c.l.b16 %v3873
    %v3912 = vunpack.c.h.b16 %v3873
    %v3913 = vunpack.c.l.b16 %v3874
    %v3914 = vunpack.c.h.b16 %v3874
    %v3915 = vunpack.c.l.b16 %v3875
    %v3916 = vunpack.c.h.b16 %v3875
    %v3917 = vunpack.c.l.b16 %v3876
    %v3918 = vunpack.c.h.b16 %v3876
    %v3919 = vunpack.c.l.b16 %v3877
    %v3920 = vunpack.c.h.b16 %v3877
    %v3921 = vunpack.c.l.b16 %v3878
    %v3922 = vunpack.c.h.b16 %v3878
    %v3923 = vunpack.c.l.b16 %v3879
    %v3924 = vunpack.c.h.b16 %v3879
    %v3925 = vunpack.c.l.b16 %v3880
    %v3926 = vunpack.c.h.b16 %v3880
    %v3927 = vunpack.c.l.b16 %v3881
    %v3928 = vunpack.c.h.b16 %v3881
    %v3929 = vunpack.c.l.b16 %v3882
    %v3930 = vunpack.c.h.b16 %v3882
    %v3931 = vpack.c.b16 %v3901, %v3899
    %v3932 = vpack.c.b16 %v3902, %v3900
    %v3933 = vpack.c.b16 %v3905, %v3903
    %v3934 = vpack.c.b16 %v3906, %v3904
    %v3935 = vpack.c.b16 %v3909, %v3907
    %v3936 = vpack.c.b16 %v3910, %v3908
    %v3937 = vpack.c.b16 %v3913, %v3911
    %v3938 = vpack.c.b16 %v3914, %v3912
    %v3939 = vpack.c.b16 %v3917, %v3915
    %v3940 = vpack.c.b16 %v3918, %v3916
    %v3941 = vpack.c.b16 %v3921, %v3919
    %v3942 = vpack.c.b16 %v3922, %v3920
    %v3943 = vpack.c.b16 %v3925, %v3923
    %v3944 = vpack.c.b16 %v3926, %v3924
    %v3945 = vpack.c.b16 %v3929, %v3927
    %v3946 = vpack.c.b16 %v3930, %v3928
    %3963 = vmatprep.subr.bf16.mxu0 %v3946
    %3964 = vmatpush1.bf16.msra.mxu0 %v3945
    %3965 = vmatprep.subr.bf16.mxu0 %v3944
    %3966 = vmatpush1.bf16.msra.mxu0 %v3943
    %3967 = vmatprep.subr.bf16.mxu0 %v3942
    %3968 = vmatpush1.bf16.msra.mxu0 %v3941
    %3969 = vmatprep.subr.bf16.mxu0 %v3940
    %3970 = vmatpush1.bf16.msra.mxu0 %v3939
    %3971 = vmatprep.subr.bf16.mxu0 %v3938
    %3972 = vmatpush1.bf16.msra.mxu0 %v3937
    %3973 = vmatprep.subr.bf16.mxu0 %v3936
    %3974 = vmatpush1.bf16.msra.mxu0 %v3935
    %3975 = vmatprep.subr.bf16.mxu0 %v3934
    %3976 = vmatpush1.bf16.msra.mxu0 %v3933
    %3977 = vmatprep.subr.bf16.mxu0 %v3932
    %3978 = vmatpush1.bf16.msra.mxu0 %v3931
    %3979 = vmatprep.subr.bf16.mxu0 0
    %3980 = vmatpush2.bf16.msra.mxu0 0
    %3981 = vmatprep.subr.bf16.mxu0 0
    %3982 = vmatpush2.bf16.msra.mxu0 0
    %3983 = vmatprep.subr.bf16.mxu0 0
    %3984 = vmatpush2.bf16.msra.mxu0 0
    %3985 = vmatprep.subr.bf16.mxu0 0
    %3986 = vmatpush2.bf16.msra.mxu0 0
    %3987 = vmatprep.subr.bf16.mxu0 0
    %3988 = vmatpush2.bf16.msra.mxu0 0
    %3989 = vmatprep.subr.bf16.mxu0 0
    %3990 = vmatpush2.bf16.msra.mxu0 0
    %3991 = vmatprep.subr.bf16.mxu0 0
    %3992 = vmatpush2.bf16.msra.mxu0 0
    %3993 = vmatprep.subr.bf16.mxu0 0
    %3994 = vmatpush2.bf16.msra.mxu0 0
    %3995 = vmatprep.mubr.bf16.mxu0 0
    %3996 = vmatmul.mubr.bf16.gmra.mxu0 %v3865
    %v3997 = vpop.f32.mrf.mxu0
    %v3998 = vadd.f32 0.0, %v3997
    %v3999 = vpop.f32.mrf.mxu0
    %v4000 = vadd.f32 0.0, %v3999
    %v4001 = vpop.f32.mrf.mxu0
    %v4002 = vpop.f32.mrf.mxu0
    %4003 = vdwg.mxu0
    %v4020 = vunpack.c.l.b16 %v3804
    %v4021 = vunpack.c.h.b16 %v3804
    %v4022 = vunpack.c.l.b16 %v3805
    %v4023 = vunpack.c.h.b16 %v3805
    %v4024 = vunpack.c.l.b16 %v3806
    %v4025 = vunpack.c.h.b16 %v3806
    %v4026 = vunpack.c.l.b16 %v3807
    %v4027 = vunpack.c.h.b16 %v3807
    %v4028 = vunpack.c.l.b16 %v3808
    %v4029 = vunpack.c.h.b16 %v3808
    %v4030 = vunpack.c.l.b16 %v3809
    %v4031 = vunpack.c.h.b16 %v3809
    %v4032 = vunpack.c.l.b16 %v3810
    %v4033 = vunpack.c.h.b16 %v3810
    %v4034 = vunpack.c.l.b16 %v3811
    %v4035 = vunpack.c.h.b16 %v3811
    %v4036 = vunpack.c.l.b16 %v3812
    %v4037 = vunpack.c.h.b16 %v3812
    %v4038 = vunpack.c.l.b16 %v3813
    %v4039 = vunpack.c.h.b16 %v3813
    %v4040 = vunpack.c.l.b16 %v3814
    %v4041 = vunpack.c.h.b16 %v3814
    %v4042 = vunpack.c.l.b16 %v3815
    %v4043 = vunpack.c.h.b16 %v3815
    %v4044 = vunpack.c.l.b16 %v3816
    %v4045 = vunpack.c.h.b16 %v3816
    %v4046 = vunpack.c.l.b16 %v3817
    %v4047 = vunpack.c.h.b16 %v3817
    %v4048 = vunpack.c.l.b16 %v3818
    %v4049 = vunpack.c.h.b16 %v3818
    %v4050 = vunpack.c.l.b16 %v3819
    %v4051 = vunpack.c.h.b16 %v3819
    %v4052 = vpack.c.b16 %v4022, %v4020
    %v4053 = vpack.c.b16 %v4023, %v4021
    %v4054 = vpack.c.b16 %v4026, %v4024
    %v4055 = vpack.c.b16 %v4027, %v4025
    %v4056 = vpack.c.b16 %v4030, %v4028
    %v4057 = vpack.c.b16 %v4031, %v4029
    %v4058 = vpack.c.b16 %v4034, %v4032
    %v4059 = vpack.c.b16 %v4035, %v4033
    %v4060 = vpack.c.b16 %v4038, %v4036
    %v4061 = vpack.c.b16 %v4039, %v4037
    %v4062 = vpack.c.b16 %v4042, %v4040
    %v4063 = vpack.c.b16 %v4043, %v4041
    %v4064 = vpack.c.b16 %v4046, %v4044
    %v4065 = vpack.c.b16 %v4047, %v4045
    %v4066 = vpack.c.b16 %v4050, %v4048
    %v4067 = vpack.c.b16 %v4051, %v4049
    %4084 = vmatprep.subr.bf16.mxu0 %v4067
    %4085 = vmatpush1.bf16.msra.mxu0 %v4066
    %4086 = vmatprep.subr.bf16.mxu0 %v4065
    %4087 = vmatpush1.bf16.msra.mxu0 %v4064
    %4088 = vmatprep.subr.bf16.mxu0 %v4063
    %4089 = vmatpush1.bf16.msra.mxu0 %v4062
    %4090 = vmatprep.subr.bf16.mxu0 %v4061
    %4091 = vmatpush1.bf16.msra.mxu0 %v4060
    %4092 = vmatprep.subr.bf16.mxu0 %v4059
    %4093 = vmatpush1.bf16.msra.mxu0 %v4058
    %4094 = vmatprep.subr.bf16.mxu0 %v4057
    %4095 = vmatpush1.bf16.msra.mxu0 %v4056
    %4096 = vmatprep.subr.bf16.mxu0 %v4055
    %4097 = vmatpush1.bf16.msra.mxu0 %v4054
    %4098 = vmatprep.subr.bf16.mxu0 %v4053
    %4099 = vmatpush1.bf16.msra.mxu0 %v4052
    %4100 = vmatprep.subr.bf16.mxu0 0
    %4101 = vmatpush2.bf16.msra.mxu0 0
    %4102 = vmatprep.subr.bf16.mxu0 0
    %4103 = vmatpush2.bf16.msra.mxu0 0
    %4104 = vmatprep.subr.bf16.mxu0 0
    %4105 = vmatpush2.bf16.msra.mxu0 0
    %4106 = vmatprep.subr.bf16.mxu0 0
    %4107 = vmatpush2.bf16.msra.mxu0 0
    %4108 = vmatprep.subr.bf16.mxu0 0
    %4109 = vmatpush2.bf16.msra.mxu0 0
    %4110 = vmatprep.subr.bf16.mxu0 0
    %4111 = vmatpush2.bf16.msra.mxu0 0
    %4112 = vmatprep.subr.bf16.mxu0 0
    %4113 = vmatpush2.bf16.msra.mxu0 0
    %4114 = vmatprep.subr.bf16.mxu0 0
    %4115 = vmatpush2.bf16.msra.mxu0 0
    %4116 = vmatprep.mubr.bf16.mxu0 0
    %4117 = vmatmul.mubr.bf16.gmra.mxu0 %v3803
    %v4118 = vpop.f32.mrf.mxu0
    %v4119 = vadd.f32 %v3998, %v4118
    %v4120 = vpop.f32.mrf.mxu0
    %v4121 = vadd.f32 %v4000, %v4120
    %v4122 = vpop.f32.mrf.mxu0
    %v4123 = vpop.f32.mrf.mxu0
    %4124 = vdwg.mxu0
    %s4125 = scalar_lea.vmem %s16, 2
    %v4126 = vld [vmem:[%s4125] sm:$0x1]
    %v4128 = vsel %vm3755, %v4126, 0
    %4130 = vmatprep.subr.bf16.mxu0 0
    %4131 = vmatpush1.bf16.msra.mxu0 0
    %4132 = vmatprep.subr.bf16.mxu0 0
    %4133 = vmatpush1.bf16.msra.mxu0 0
    %4134 = vmatprep.subr.bf16.mxu0 0
    %4135 = vmatpush1.bf16.msra.mxu0 0
    %4136 = vmatprep.subr.bf16.mxu0 0
    %4137 = vmatpush1.bf16.msra.mxu0 0
    %4138 = vmatprep.subr.bf16.mxu0 0
    %4139 = vmatpush1.bf16.msra.mxu0 0
    %4140 = vmatprep.subr.bf16.mxu0 0
    %4141 = vmatpush1.bf16.msra.mxu0 0
    %4142 = vmatprep.subr.bf16.mxu0 0
    %4143 = vmatpush1.bf16.msra.mxu0 0
    %4144 = vmatprep.subr.bf16.mxu0 0
    %4145 = vmatpush1.bf16.msra.mxu0 %v3761
    %4146 = vmatprep.subr.bf16.mxu0 0
    %4147 = vmatpush2.bf16.msra.mxu0 0
    %4148 = vmatprep.subr.bf16.mxu0 0
    %4149 = vmatpush2.bf16.msra.mxu0 0
    %4150 = vmatprep.subr.bf16.mxu0 0
    %4151 = vmatpush2.bf16.msra.mxu0 0
    %4152 = vmatprep.subr.bf16.mxu0 0
    %4153 = vmatpush2.bf16.msra.mxu0 0
    %4154 = vmatprep.subr.bf16.mxu0 0
    %4155 = vmatpush2.bf16.msra.mxu0 0
    %4156 = vmatprep.subr.bf16.mxu0 0
    %4157 = vmatpush2.bf16.msra.mxu0 0
    %4158 = vmatprep.subr.bf16.mxu0 0
    %4159 = vmatpush2.bf16.msra.mxu0 0
    %4160 = vmatprep.subr.bf16.mxu0 0
    %4161 = vmatpush2.bf16.msra.mxu0 0
    %4162 = vmatprep.mubr.bf16.mxu0 0
    %4163 = vmatmul.mubr.bf16.gmra.mxu0 %v4128
    %v4164 = vpop.f32.mrf.mxu0
    %v4165 = vadd.f32 0.0, %v4164
    %v4166 = vpop.f32.mrf.mxu0
    %v4167 = vpop.f32.mrf.mxu0
    %v4168 = vpop.f32.mrf.mxu0
    %4169 = vdwg.mxu0
    %v4170 = vpack.c.bf16 %v4165, %v4165
    %s4171 = scalar_lea.vmem %s17, 256
    %v4172 = vld [vmem:[%s4171] sm:$0xff]
    %v4173 = vld [vmem:[%s4171 + $0x8] sm:$0xff]
    %v4174 = vld [vmem:[%s4171 + $0x10] sm:$0xff]
    %v4175 = vld [vmem:[%s4171 + $0x18] sm:$0xff]
    %v4176 = vld [vmem:[%s4171 + $0x20] sm:$0xff]
    %v4177 = vld [vmem:[%s4171 + $0x28] sm:$0xff]
    %v4178 = vld [vmem:[%s4171 + $0x30] sm:$0xff]
    %v4179 = vld [vmem:[%s4171 + $0x38] sm:$0xff]
    %v4180 = vld [vmem:[%s4171 + $0x40] sm:$0xff]
    %v4181 = vld [vmem:[%s4171 + $0x48] sm:$0xff]
    %v4182 = vld [vmem:[%s4171 + $0x50] sm:$0xff]
    %v4183 = vld [vmem:[%s4171 + $0x58] sm:$0xff]
    %v4184 = vld [vmem:[%s4171 + $0x60] sm:$0xff]
    %v4185 = vld [vmem:[%s4171 + $0x68] sm:$0xff]
    %v4186 = vld [vmem:[%s4171 + $0x70] sm:$0xff]
    %v4187 = vld [vmem:[%s4171 + $0x78] sm:$0xff]
    %v4204 = vunpack.c.l.b16 %v4172
    %v4205 = vunpack.c.h.b16 %v4172
    %v4206 = vunpack.c.l.b16 %v4173
    %v4207 = vunpack.c.h.b16 %v4173
    %v4208 = vunpack.c.l.b16 %v4174
    %v4209 = vunpack.c.h.b16 %v4174
    %v4210 = vunpack.c.l.b16 %v4175
    %v4211 = vunpack.c.h.b16 %v4175
    %v4212 = vunpack.c.l.b16 %v4176
    %v4213 = vunpack.c.h.b16 %v4176
    %v4214 = vunpack.c.l.b16 %v4177
    %v4215 = vunpack.c.h.b16 %v4177
    %v4216 = vunpack.c.l.b16 %v4178
    %v4217 = vunpack.c.h.b16 %v4178
    %v4218 = vunpack.c.l.b16 %v4179
    %v4219 = vunpack.c.h.b16 %v4179
    %v4220 = vunpack.c.l.b16 %v4180
    %v4221 = vunpack.c.h.b16 %v4180
    %v4222 = vunpack.c.l.b16 %v4181
    %v4223 = vunpack.c.h.b16 %v4181
    %v4224 = vunpack.c.l.b16 %v4182
    %v4225 = vunpack.c.h.b16 %v4182
    %v4226 = vunpack.c.l.b16 %v4183
    %v4227 = vunpack.c.h.b16 %v4183
    %v4228 = vunpack.c.l.b16 %v4184
    %v4229 = vunpack.c.h.b16 %v4184
    %v4230 = vunpack.c.l.b16 %v4185
    %v4231 = vunpack.c.h.b16 %v4185
    %v4232 = vunpack.c.l.b16 %v4186
    %v4233 = vunpack.c.h.b16 %v4186
    %v4234 = vunpack.c.l.b16 %v4187
    %v4235 = vunpack.c.h.b16 %v4187
    %v4236 = vpack.c.b16 %v4206, %v4204
    %v4237 = vpack.c.b16 %v4207, %v4205
    %v4238 = vpack.c.b16 %v4210, %v4208
    %v4239 = vpack.c.b16 %v4211, %v4209
    %v4240 = vpack.c.b16 %v4214, %v4212
    %v4241 = vpack.c.b16 %v4215, %v4213
    %v4242 = vpack.c.b16 %v4218, %v4216
    %v4243 = vpack.c.b16 %v4219, %v4217
    %v4244 = vpack.c.b16 %v4222, %v4220
    %v4245 = vpack.c.b16 %v4223, %v4221
    %v4246 = vpack.c.b16 %v4226, %v4224
    %v4247 = vpack.c.b16 %v4227, %v4225
    %v4248 = vpack.c.b16 %v4230, %v4228
    %v4249 = vpack.c.b16 %v4231, %v4229
    %v4250 = vpack.c.b16 %v4234, %v4232
    %v4251 = vpack.c.b16 %v4235, %v4233
    %4268 = vmatprep.subr.bf16.mxu0 %v4251
    %4269 = vmatpush1.bf16.msra.mxu0 %v4250
    %4270 = vmatprep.subr.bf16.mxu0 %v4249
    %4271 = vmatpush1.bf16.msra.mxu0 %v4248
    %4272 = vmatprep.subr.bf16.mxu0 %v4247
    %4273 = vmatpush1.bf16.msra.mxu0 %v4246
    %4274 = vmatprep.subr.bf16.mxu0 %v4245
    %4275 = vmatpush1.bf16.msra.mxu0 %v4244
    %4276 = vmatprep.subr.bf16.mxu0 %v4243
    %4277 = vmatpush1.bf16.msra.mxu0 %v4242
    %4278 = vmatprep.subr.bf16.mxu0 %v4241
    %4279 = vmatpush1.bf16.msra.mxu0 %v4240
    %4280 = vmatprep.subr.bf16.mxu0 %v4239
    %4281 = vmatpush1.bf16.msra.mxu0 %v4238
    %4282 = vmatprep.subr.bf16.mxu0 %v4237
    %4283 = vmatpush1.bf16.msra.mxu0 %v4236
    %4284 = vmatprep.subr.bf16.mxu0 0
    %4285 = vmatpush2.bf16.msra.mxu0 0
    %4286 = vmatprep.subr.bf16.mxu0 0
    %4287 = vmatpush2.bf16.msra.mxu0 0
    %4288 = vmatprep.subr.bf16.mxu0 0
    %4289 = vmatpush2.bf16.msra.mxu0 0
    %4290 = vmatprep.subr.bf16.mxu0 0
    %4291 = vmatpush2.bf16.msra.mxu0 0
    %4292 = vmatprep.subr.bf16.mxu0 0
    %4293 = vmatpush2.bf16.msra.mxu0 0
    %4294 = vmatprep.subr.bf16.mxu0 0
    %4295 = vmatpush2.bf16.msra.mxu0 0
    %4296 = vmatprep.subr.bf16.mxu0 0
    %4297 = vmatpush2.bf16.msra.mxu0 0
    %4298 = vmatprep.subr.bf16.mxu0 0
    %4299 = vmatpush2.bf16.msra.mxu0 0
    %4300 = vmatprep.mubr.bf16.mxu0 0
    %4301 = vmatmul.mubr.bf16.gmra.mxu0 %v4170
    %v4302 = vpop.f32.mrf.mxu0
    %v4303 = vadd.f32 0.0, %v4302
    %v4304 = vpop.f32.mrf.mxu0
    %v4305 = vadd.f32 0.0, %v4304
    %v4306 = vpop.f32.mrf.mxu0
    %v4307 = vpop.f32.mrf.mxu0
    %4308 = vdwg.mxu0
    %v4309 = vadd.f32 %v4119, %v4303
    %v4310 = vadd.f32 %v4121, %v4305
    %s4311 = scalar_lea.vmem %s16, 3
    %v4312 = vld [vmem:[%s4311] sm:$0x1]
    %v4314 = vsel %vm3755, %v4312, 0
    %4316 = vmatprep.subr.bf16.mxu0 0
    %4317 = vmatpush1.bf16.msra.mxu0 0
    %4318 = vmatprep.subr.bf16.mxu0 0
    %4319 = vmatpush1.bf16.msra.mxu0 0
    %4320 = vmatprep.subr.bf16.mxu0 0
    %4321 = vmatpush1.bf16.msra.mxu0 0
    %4322 = vmatprep.subr.bf16.mxu0 0
    %4323 = vmatpush1.bf16.msra.mxu0 0
    %4324 = vmatprep.subr.bf16.mxu0 0
    %4325 = vmatpush1.bf16.msra.mxu0 0
    %4326 = vmatprep.subr.bf16.mxu0 0
    %4327 = vmatpush1.bf16.msra.mxu0 0
    %4328 = vmatprep.subr.bf16.mxu0 0
    %4329 = vmatpush1.bf16.msra.mxu0 0
    %4330 = vmatprep.subr.bf16.mxu0 0
    %4331 = vmatpush1.bf16.msra.mxu0 %v3761
    %4332 = vmatprep.subr.bf16.mxu0 0
    %4333 = vmatpush2.bf16.msra.mxu0 0
    %4334 = vmatprep.subr.bf16.mxu0 0
    %4335 = vmatpush2.bf16.msra.mxu0 0
    %4336 = vmatprep.subr.bf16.mxu0 0
    %4337 = vmatpush2.bf16.msra.mxu0 0
    %4338 = vmatprep.subr.bf16.mxu0 0
    %4339 = vmatpush2.bf16.msra.mxu0 0
    %4340 = vmatprep.subr.bf16.mxu0 0
    %4341 = vmatpush2.bf16.msra.mxu0 0
    %4342 = vmatprep.subr.bf16.mxu0 0
    %4343 = vmatpush2.bf16.msra.mxu0 0
    %4344 = vmatprep.subr.bf16.mxu0 0
    %4345 = vmatpush2.bf16.msra.mxu0 0
    %4346 = vmatprep.subr.bf16.mxu0 0
    %4347 = vmatpush2.bf16.msra.mxu0 0
    %4348 = vmatprep.mubr.bf16.mxu0 0
    %4349 = vmatmul.mubr.bf16.gmra.mxu0 %v4314
    %v4350 = vpop.f32.mrf.mxu0
    %v4351 = vadd.f32 0.0, %v4350
    %v4352 = vpop.f32.mrf.mxu0
    %v4353 = vpop.f32.mrf.mxu0
    %v4354 = vpop.f32.mrf.mxu0
    %4355 = vdwg.mxu0
    %v4356 = vpack.c.bf16 %v4351, %v4351
    %s4357 = scalar_lea.vmem %s17, 384
    %v4358 = vld [vmem:[%s4357] sm:$0xff]
    %v4359 = vld [vmem:[%s4357 + $0x8] sm:$0xff]
    %v4360 = vld [vmem:[%s4357 + $0x10] sm:$0xff]
    %v4361 = vld [vmem:[%s4357 + $0x18] sm:$0xff]
    %v4362 = vld [vmem:[%s4357 + $0x20] sm:$0xff]
    %v4363 = vld [vmem:[%s4357 + $0x28] sm:$0xff]
    %v4364 = vld [vmem:[%s4357 + $0x30] sm:$0xff]
    %v4365 = vld [vmem:[%s4357 + $0x38] sm:$0xff]
    %v4366 = vld [vmem:[%s4357 + $0x40] sm:$0xff]
    %v4367 = vld [vmem:[%s4357 + $0x48] sm:$0xff]
    %v4368 = vld [vmem:[%s4357 + $0x50] sm:$0xff]
    %v4369 = vld [vmem:[%s4357 + $0x58] sm:$0xff]
    %v4370 = vld [vmem:[%s4357 + $0x60] sm:$0xff]
    %v4371 = vld [vmem:[%s4357 + $0x68] sm:$0xff]
    %v4372 = vld [vmem:[%s4357 + $0x70] sm:$0xff]
    %v4373 = vld [vmem:[%s4357 + $0x78] sm:$0xff]
    %v4390 = vunpack.c.l.b16 %v4358
    %v4391 = vunpack.c.h.b16 %v4358
    %v4392 = vunpack.c.l.b16 %v4359
    %v4393 = vunpack.c.h.b16 %v4359
    %v4394 = vunpack.c.l.b16 %v4360
    %v4395 = vunpack.c.h.b16 %v4360
    %v4396 = vunpack.c.l.b16 %v4361
    %v4397 = vunpack.c.h.b16 %v4361
    %v4398 = vunpack.c.l.b16 %v4362
    %v4399 = vunpack.c.h.b16 %v4362
    %v4400 = vunpack.c.l.b16 %v4363
    %v4401 = vunpack.c.h.b16 %v4363
    %v4402 = vunpack.c.l.b16 %v4364
    %v4403 = vunpack.c.h.b16 %v4364
    %v4404 = vunpack.c.l.b16 %v4365
    %v4405 = vunpack.c.h.b16 %v4365
    %v4406 = vunpack.c.l.b16 %v4366
    %v4407 = vunpack.c.h.b16 %v4366
    %v4408 = vunpack.c.l.b16 %v4367
    %v4409 = vunpack.c.h.b16 %v4367
    %v4410 = vunpack.c.l.b16 %v4368
    %v4411 = vunpack.c.h.b16 %v4368
    %v4412 = vunpack.c.l.b16 %v4369
    %v4413 = vunpack.c.h.b16 %v4369
    %v4414 = vunpack.c.l.b16 %v4370
    %v4415 = vunpack.c.h.b16 %v4370
    %v4416 = vunpack.c.l.b16 %v4371
    %v4417 = vunpack.c.h.b16 %v4371
    %v4418 = vunpack.c.l.b16 %v4372
    %v4419 = vunpack.c.h.b16 %v4372
    %v4420 = vunpack.c.l.b16 %v4373
    %v4421 = vunpack.c.h.b16 %v4373
    %v4422 = vpack.c.b16 %v4392, %v4390
    %v4423 = vpack.c.b16 %v4393, %v4391
    %v4424 = vpack.c.b16 %v4396, %v4394
    %v4425 = vpack.c.b16 %v4397, %v4395
    %v4426 = vpack.c.b16 %v4400, %v4398
    %v4427 = vpack.c.b16 %v4401, %v4399
    %v4428 = vpack.c.b16 %v4404, %v4402
    %v4429 = vpack.c.b16 %v4405, %v4403
    %v4430 = vpack.c.b16 %v4408, %v4406
    %v4431 = vpack.c.b16 %v4409, %v4407
    %v4432 = vpack.c.b16 %v4412, %v4410
    %v4433 = vpack.c.b16 %v4413, %v4411
    %v4434 = vpack.c.b16 %v4416, %v4414
    %v4435 = vpack.c.b16 %v4417, %v4415
    %v4436 = vpack.c.b16 %v4420, %v4418
    %v4437 = vpack.c.b16 %v4421, %v4419
    %4454 = vmatprep.subr.bf16.mxu0 %v4437
    %4455 = vmatpush1.bf16.msra.mxu0 %v4436
    %4456 = vmatprep.subr.bf16.mxu0 %v4435
    %4457 = vmatpush1.bf16.msra.mxu0 %v4434
    %4458 = vmatprep.subr.bf16.mxu0 %v4433
    %4459 = vmatpush1.bf16.msra.mxu0 %v4432
    %4460 = vmatprep.subr.bf16.mxu0 %v4431
    %4461 = vmatpush1.bf16.msra.mxu0 %v4430
    %4462 = vmatprep.subr.bf16.mxu0 %v4429
    %4463 = vmatpush1.bf16.msra.mxu0 %v4428
    %4464 = vmatprep.subr.bf16.mxu0 %v4427
    %4465 = vmatpush1.bf16.msra.mxu0 %v4426
    %4466 = vmatprep.subr.bf16.mxu0 %v4425
    %4467 = vmatpush1.bf16.msra.mxu0 %v4424
    %4468 = vmatprep.subr.bf16.mxu0 %v4423
    %4469 = vmatpush1.bf16.msra.mxu0 %v4422
    %4470 = vmatprep.subr.bf16.mxu0 0
    %4471 = vmatpush2.bf16.msra.mxu0 0
    %4472 = vmatprep.subr.bf16.mxu0 0
    %4473 = vmatpush2.bf16.msra.mxu0 0
    %4474 = vmatprep.subr.bf16.mxu0 0
    %4475 = vmatpush2.bf16.msra.mxu0 0
    %4476 = vmatprep.subr.bf16.mxu0 0
    %4477 = vmatpush2.bf16.msra.mxu0 0
    %4478 = vmatprep.subr.bf16.mxu0 0
    %4479 = vmatpush2.bf16.msra.mxu0 0
    %4480 = vmatprep.subr.bf16.mxu0 0
    %4481 = vmatpush2.bf16.msra.mxu0 0
    %4482 = vmatprep.subr.bf16.mxu0 0
    %4483 = vmatpush2.bf16.msra.mxu0 0
    %4484 = vmatprep.subr.bf16.mxu0 0
    %4485 = vmatpush2.bf16.msra.mxu0 0
    %4486 = vmatprep.mubr.bf16.mxu0 0
    %4487 = vmatmul.mubr.bf16.gmra.mxu0 %v4356
    %v4488 = vpop.f32.mrf.mxu0
    %v4489 = vadd.f32 0.0, %v4488
    %v4490 = vpop.f32.mrf.mxu0
    %v4491 = vadd.f32 0.0, %v4490
    %v4492 = vpop.f32.mrf.mxu0
    %v4493 = vpop.f32.mrf.mxu0
    %4494 = vdwg.mxu0
    %v4495 = vadd.f32 %v4309, %v4489
    %v4496 = vadd.f32 %v4310, %v4491
    %s4497 = scalar_lea.vmem %s16, 4
    %v4498 = vld [vmem:[%s4497] sm:$0x1]
    %v4500 = vsel %vm3755, %v4498, 0
    %4502 = vmatprep.subr.bf16.mxu0 0
    %4503 = vmatpush1.bf16.msra.mxu0 0
    %4504 = vmatprep.subr.bf16.mxu0 0
    %4505 = vmatpush1.bf16.msra.mxu0 0
    %4506 = vmatprep.subr.bf16.mxu0 0
    %4507 = vmatpush1.bf16.msra.mxu0 0
    %4508 = vmatprep.subr.bf16.mxu0 0
    %4509 = vmatpush1.bf16.msra.mxu0 0
    %4510 = vmatprep.subr.bf16.mxu0 0
    %4511 = vmatpush1.bf16.msra.mxu0 0
    %4512 = vmatprep.subr.bf16.mxu0 0
    %4513 = vmatpush1.bf16.msra.mxu0 0
    %4514 = vmatprep.subr.bf16.mxu0 0
    %4515 = vmatpush1.bf16.msra.mxu0 0
    %4516 = vmatprep.subr.bf16.mxu0 0
    %4517 = vmatpush1.bf16.msra.mxu0 %v3761
    %4518 = vmatprep.subr.bf16.mxu0 0
    %4519 = vmatpush2.bf16.msra.mxu0 0
    %4520 = vmatprep.subr.bf16.mxu0 0
    %4521 = vmatpush2.bf16.msra.mxu0 0
    %4522 = vmatprep.subr.bf16.mxu0 0
    %4523 = vmatpush2.bf16.msra.mxu0 0
    %4524 = vmatprep.subr.bf16.mxu0 0
    %4525 = vmatpush2.bf16.msra.mxu0 0
    %4526 = vmatprep.subr.bf16.mxu0 0
    %4527 = vmatpush2.bf16.msra.mxu0 0
    %4528 = vmatprep.subr.bf16.mxu0 0
    %4529 = vmatpush2.bf16.msra.mxu0 0
    %4530 = vmatprep.subr.bf16.mxu0 0
    %4531 = vmatpush2.bf16.msra.mxu0 0
    %4532 = vmatprep.subr.bf16.mxu0 0
    %4533 = vmatpush2.bf16.msra.mxu0 0
    %4534 = vmatprep.mubr.bf16.mxu0 0
    %4535 = vmatmul.mubr.bf16.gmra.mxu0 %v4500
    %v4536 = vpop.f32.mrf.mxu0
    %v4537 = vadd.f32 0.0, %v4536
    %v4538 = vpop.f32.mrf.mxu0
    %v4539 = vpop.f32.mrf.mxu0
    %v4540 = vpop.f32.mrf.mxu0
    %4541 = vdwg.mxu0
    %v4542 = vpack.c.bf16 %v4537, %v4537
    %s4543 = scalar_lea.vmem %s17, 512
    %v4544 = vld [vmem:[%s4543] sm:$0xff]
    %v4545 = vld [vmem:[%s4543 + $0x8] sm:$0xff]
    %v4546 = vld [vmem:[%s4543 + $0x10] sm:$0xff]
    %v4547 = vld [vmem:[%s4543 + $0x18] sm:$0xff]
    %v4548 = vld [vmem:[%s4543 + $0x20] sm:$0xff]
    %v4549 = vld [vmem:[%s4543 + $0x28] sm:$0xff]
    %v4550 = vld [vmem:[%s4543 + $0x30] sm:$0xff]
    %v4551 = vld [vmem:[%s4543 + $0x38] sm:$0xff]
    %v4552 = vld [vmem:[%s4543 + $0x40] sm:$0xff]
    %v4553 = vld [vmem:[%s4543 + $0x48] sm:$0xff]
    %v4554 = vld [vmem:[%s4543 + $0x50] sm:$0xff]
    %v4555 = vld [vmem:[%s4543 + $0x58] sm:$0xff]
    %v4556 = vld [vmem:[%s4543 + $0x60] sm:$0xff]
    %v4557 = vld [vmem:[%s4543 + $0x68] sm:$0xff]
    %v4558 = vld [vmem:[%s4543 + $0x70] sm:$0xff]
    %v4559 = vld [vmem:[%s4543 + $0x78] sm:$0xff]
    %v4576 = vunpack.c.l.b16 %v4544
    %v4577 = vunpack.c.h.b16 %v4544
    %v4578 = vunpack.c.l.b16 %v4545
    %v4579 = vunpack.c.h.b16 %v4545
    %v4580 = vunpack.c.l.b16 %v4546
    %v4581 = vunpack.c.h.b16 %v4546
    %v4582 = vunpack.c.l.b16 %v4547
    %v4583 = vunpack.c.h.b16 %v4547
    %v4584 = vunpack.c.l.b16 %v4548
    %v4585 = vunpack.c.h.b16 %v4548
    %v4586 = vunpack.c.l.b16 %v4549
    %v4587 = vunpack.c.h.b16 %v4549
    %v4588 = vunpack.c.l.b16 %v4550
    %v4589 = vunpack.c.h.b16 %v4550
    %v4590 = vunpack.c.l.b16 %v4551
    %v4591 = vunpack.c.h.b16 %v4551
    %v4592 = vunpack.c.l.b16 %v4552
    %v4593 = vunpack.c.h.b16 %v4552
    %v4594 = vunpack.c.l.b16 %v4553
    %v4595 = vunpack.c.h.b16 %v4553
    %v4596 = vunpack.c.l.b16 %v4554
    %v4597 = vunpack.c.h.b16 %v4554
    %v4598 = vunpack.c.l.b16 %v4555
    %v4599 = vunpack.c.h.b16 %v4555
    %v4600 = vunpack.c.l.b16 %v4556
    %v4601 = vunpack.c.h.b16 %v4556
    %v4602 = vunpack.c.l.b16 %v4557
    %v4603 = vunpack.c.h.b16 %v4557
    %v4604 = vunpack.c.l.b16 %v4558
    %v4605 = vunpack.c.h.b16 %v4558
    %v4606 = vunpack.c.l.b16 %v4559
    %v4607 = vunpack.c.h.b16 %v4559
    %v4608 = vpack.c.b16 %v4578, %v4576
    %v4609 = vpack.c.b16 %v4579, %v4577
    %v4610 = vpack.c.b16 %v4582, %v4580
    %v4611 = vpack.c.b16 %v4583, %v4581
    %v4612 = vpack.c.b16 %v4586, %v4584
    %v4613 = vpack.c.b16 %v4587, %v4585
    %v4614 = vpack.c.b16 %v4590, %v4588
    %v4615 = vpack.c.b16 %v4591, %v4589
    %v4616 = vpack.c.b16 %v4594, %v4592
    %v4617 = vpack.c.b16 %v4595, %v4593
    %v4618 = vpack.c.b16 %v4598, %v4596
    %v4619 = vpack.c.b16 %v4599, %v4597
    %v4620 = vpack.c.b16 %v4602, %v4600
    %v4621 = vpack.c.b16 %v4603, %v4601
    %v4622 = vpack.c.b16 %v4606, %v4604
    %v4623 = vpack.c.b16 %v4607, %v4605
    %4640 = vmatprep.subr.bf16.mxu0 %v4623
    %4641 = vmatpush1.bf16.msra.mxu0 %v4622
    %4642 = vmatprep.subr.bf16.mxu0 %v4621
    %4643 = vmatpush1.bf16.msra.mxu0 %v4620
    %4644 = vmatprep.subr.bf16.mxu0 %v4619
    %4645 = vmatpush1.bf16.msra.mxu0 %v4618
    %4646 = vmatprep.subr.bf16.mxu0 %v4617
    %4647 = vmatpush1.bf16.msra.mxu0 %v4616
    %4648 = vmatprep.subr.bf16.mxu0 %v4615
    %4649 = vmatpush1.bf16.msra.mxu0 %v4614
    %4650 = vmatprep.subr.bf16.mxu0 %v4613
    %4651 = vmatpush1.bf16.msra.mxu0 %v4612
    %4652 = vmatprep.subr.bf16.mxu0 %v4611
    %4653 = vmatpush1.bf16.msra.mxu0 %v4610
    %4654 = vmatprep.subr.bf16.mxu0 %v4609
    %4655 = vmatpush1.bf16.msra.mxu0 %v4608
    %4656 = vmatprep.subr.bf16.mxu0 0
    %4657 = vmatpush2.bf16.msra.mxu0 0
    %4658 = vmatprep.subr.bf16.mxu0 0
    %4659 = vmatpush2.bf16.msra.mxu0 0
    %4660 = vmatprep.subr.bf16.mxu0 0
    %4661 = vmatpush2.bf16.msra.mxu0 0
    %4662 = vmatprep.subr.bf16.mxu0 0
    %4663 = vmatpush2.bf16.msra.mxu0 0
    %4664 = vmatprep.subr.bf16.mxu0 0
    %4665 = vmatpush2.bf16.msra.mxu0 0
    %4666 = vmatprep.subr.bf16.mxu0 0
    %4667 = vmatpush2.bf16.msra.mxu0 0
    %4668 = vmatprep.subr.bf16.mxu0 0
    %4669 = vmatpush2.bf16.msra.mxu0 0
    %4670 = vmatprep.subr.bf16.mxu0 0
    %4671 = vmatpush2.bf16.msra.mxu0 0
    %4672 = vmatprep.mubr.bf16.mxu0 0
    %4673 = vmatmul.mubr.bf16.gmra.mxu0 %v4542
    %v4674 = vpop.f32.mrf.mxu0
    %v4675 = vadd.f32 0.0, %v4674
    %v4676 = vpop.f32.mrf.mxu0
    %v4677 = vadd.f32 0.0, %v4676
    %v4678 = vpop.f32.mrf.mxu0
    %v4679 = vpop.f32.mrf.mxu0
    %4680 = vdwg.mxu0
    %v4681 = vadd.f32 %v4495, %v4675
    %v4682 = vadd.f32 %v4496, %v4677
    %s4683 = scalar_lea.vmem %s16, 5
    %v4684 = vld [vmem:[%s4683] sm:$0x1]
    %v4686 = vsel %vm3755, %v4684, 0
    %4688 = vmatprep.subr.bf16.mxu0 0
    %4689 = vmatpush1.bf16.msra.mxu0 0
    %4690 = vmatprep.subr.bf16.mxu0 0
    %4691 = vmatpush1.bf16.msra.mxu0 0
    %4692 = vmatprep.subr.bf16.mxu0 0
    %4693 = vmatpush1.bf16.msra.mxu0 0
    %4694 = vmatprep.subr.bf16.mxu0 0
    %4695 = vmatpush1.bf16.msra.mxu0 0
    %4696 = vmatprep.subr.bf16.mxu0 0
    %4697 = vmatpush1.bf16.msra.mxu0 0
    %4698 = vmatprep.subr.bf16.mxu0 0
    %4699 = vmatpush1.bf16.msra.mxu0 0
    %4700 = vmatprep.subr.bf16.mxu0 0
    %4701 = vmatpush1.bf16.msra.mxu0 0
    %4702 = vmatprep.subr.bf16.mxu0 0
    %4703 = vmatpush1.bf16.msra.mxu0 %v3761
    %4704 = vmatprep.subr.bf16.mxu0 0
    %4705 = vmatpush2.bf16.msra.mxu0 0
    %4706 = vmatprep.subr.bf16.mxu0 0
    %4707 = vmatpush2.bf16.msra.mxu0 0
    %4708 = vmatprep.subr.bf16.mxu0 0
    %4709 = vmatpush2.bf16.msra.mxu0 0
    %4710 = vmatprep.subr.bf16.mxu0 0
    %4711 = vmatpush2.bf16.msra.mxu0 0
    %4712 = vmatprep.subr.bf16.mxu0 0
    %4713 = vmatpush2.bf16.msra.mxu0 0
    %4714 = vmatprep.subr.bf16.mxu0 0
    %4715 = vmatpush2.bf16.msra.mxu0 0
    %4716 = vmatprep.subr.bf16.mxu0 0
    %4717 = vmatpush2.bf16.msra.mxu0 0
    %4718 = vmatprep.subr.bf16.mxu0 0
    %4719 = vmatpush2.bf16.msra.mxu0 0
    %4720 = vmatprep.mubr.bf16.mxu0 0
    %4721 = vmatmul.mubr.bf16.gmra.mxu0 %v4686
    %v4722 = vpop.f32.mrf.mxu0
    %v4723 = vadd.f32 0.0, %v4722
    %v4724 = vpop.f32.mrf.mxu0
    %v4725 = vpop.f32.mrf.mxu0
    %v4726 = vpop.f32.mrf.mxu0
    %4727 = vdwg.mxu0
    %v4728 = vpack.c.bf16 %v4723, %v4723
    %s4729 = scalar_lea.vmem %s17, 640
    %v4730 = vld [vmem:[%s4729] sm:$0xff]
    %v4731 = vld [vmem:[%s4729 + $0x8] sm:$0xff]
    %v4732 = vld [vmem:[%s4729 + $0x10] sm:$0xff]
    %v4733 = vld [vmem:[%s4729 + $0x18] sm:$0xff]
    %v4734 = vld [vmem:[%s4729 + $0x20] sm:$0xff]
    %v4735 = vld [vmem:[%s4729 + $0x28] sm:$0xff]
    %v4736 = vld [vmem:[%s4729 + $0x30] sm:$0xff]
    %v4737 = vld [vmem:[%s4729 + $0x38] sm:$0xff]
    %v4738 = vld [vmem:[%s4729 + $0x40] sm:$0xff]
    %v4739 = vld [vmem:[%s4729 + $0x48] sm:$0xff]
    %v4740 = vld [vmem:[%s4729 + $0x50] sm:$0xff]
    %v4741 = vld [vmem:[%s4729 + $0x58] sm:$0xff]
    %v4742 = vld [vmem:[%s4729 + $0x60] sm:$0xff]
    %v4743 = vld [vmem:[%s4729 + $0x68] sm:$0xff]
    %v4744 = vld [vmem:[%s4729 + $0x70] sm:$0xff]
    %v4745 = vld [vmem:[%s4729 + $0x78] sm:$0xff]
    %v4762 = vunpack.c.l.b16 %v4730
    %v4763 = vunpack.c.h.b16 %v4730
    %v4764 = vunpack.c.l.b16 %v4731
    %v4765 = vunpack.c.h.b16 %v4731
    %v4766 = vunpack.c.l.b16 %v4732
    %v4767 = vunpack.c.h.b16 %v4732
    %v4768 = vunpack.c.l.b16 %v4733
    %v4769 = vunpack.c.h.b16 %v4733
    %v4770 = vunpack.c.l.b16 %v4734
    %v4771 = vunpack.c.h.b16 %v4734
    %v4772 = vunpack.c.l.b16 %v4735
    %v4773 = vunpack.c.h.b16 %v4735
    %v4774 = vunpack.c.l.b16 %v4736
    %v4775 = vunpack.c.h.b16 %v4736
    %v4776 = vunpack.c.l.b16 %v4737
    %v4777 = vunpack.c.h.b16 %v4737
    %v4778 = vunpack.c.l.b16 %v4738
    %v4779 = vunpack.c.h.b16 %v4738
    %v4780 = vunpack.c.l.b16 %v4739
    %v4781 = vunpack.c.h.b16 %v4739
    %v4782 = vunpack.c.l.b16 %v4740
    %v4783 = vunpack.c.h.b16 %v4740
    %v4784 = vunpack.c.l.b16 %v4741
    %v4785 = vunpack.c.h.b16 %v4741
    %v4786 = vunpack.c.l.b16 %v4742
    %v4787 = vunpack.c.h.b16 %v4742
    %v4788 = vunpack.c.l.b16 %v4743
    %v4789 = vunpack.c.h.b16 %v4743
    %v4790 = vunpack.c.l.b16 %v4744
    %v4791 = vunpack.c.h.b16 %v4744
    %v4792 = vunpack.c.l.b16 %v4745
    %v4793 = vunpack.c.h.b16 %v4745
    %v4794 = vpack.c.b16 %v4764, %v4762
    %v4795 = vpack.c.b16 %v4765, %v4763
    %v4796 = vpack.c.b16 %v4768, %v4766
    %v4797 = vpack.c.b16 %v4769, %v4767
    %v4798 = vpack.c.b16 %v4772, %v4770
    %v4799 = vpack.c.b16 %v4773, %v4771
    %v4800 = vpack.c.b16 %v4776, %v4774
    %v4801 = vpack.c.b16 %v4777, %v4775
    %v4802 = vpack.c.b16 %v4780, %v4778
    %v4803 = vpack.c.b16 %v4781, %v4779
    %v4804 = vpack.c.b16 %v4784, %v4782
    %v4805 = vpack.c.b16 %v4785, %v4783
    %v4806 = vpack.c.b16 %v4788, %v4786
    %v4807 = vpack.c.b16 %v4789, %v4787
    %v4808 = vpack.c.b16 %v4792, %v4790
    %v4809 = vpack.c.b16 %v4793, %v4791
    %4826 = vmatprep.subr.bf16.mxu0 %v4809
    %4827 = vmatpush1.bf16.msra.mxu0 %v4808
    %4828 = vmatprep.subr.bf16.mxu0 %v4807
    %4829 = vmatpush1.bf16.msra.mxu0 %v4806
    %4830 = vmatprep.subr.bf16.mxu0 %v4805
    %4831 = vmatpush1.bf16.msra.mxu0 %v4804
    %4832 = vmatprep.subr.bf16.mxu0 %v4803
    %4833 = vmatpush1.bf16.msra.mxu0 %v4802
    %4834 = vmatprep.subr.bf16.mxu0 %v4801
    %4835 = vmatpush1.bf16.msra.mxu0 %v4800
    %4836 = vmatprep.subr.bf16.mxu0 %v4799
    %4837 = vmatpush1.bf16.msra.mxu0 %v4798
    %4838 = vmatprep.subr.bf16.mxu0 %v4797
    %4839 = vmatpush1.bf16.msra.mxu0 %v4796
    %4840 = vmatprep.subr.bf16.mxu0 %v4795
    %4841 = vmatpush1.bf16.msra.mxu0 %v4794
    %4842 = vmatprep.subr.bf16.mxu0 0
    %4843 = vmatpush2.bf16.msra.mxu0 0
    %4844 = vmatprep.subr.bf16.mxu0 0
    %4845 = vmatpush2.bf16.msra.mxu0 0
    %4846 = vmatprep.subr.bf16.mxu0 0
    %4847 = vmatpush2.bf16.msra.mxu0 0
    %4848 = vmatprep.subr.bf16.mxu0 0
    %4849 = vmatpush2.bf16.msra.mxu0 0
    %4850 = vmatprep.subr.bf16.mxu0 0
    %4851 = vmatpush2.bf16.msra.mxu0 0
    %4852 = vmatprep.subr.bf16.mxu0 0
    %4853 = vmatpush2.bf16.msra.mxu0 0
    %4854 = vmatprep.subr.bf16.mxu0 0
    %4855 = vmatpush2.bf16.msra.mxu0 0
    %4856 = vmatprep.subr.bf16.mxu0 0
    %4857 = vmatpush2.bf16.msra.mxu0 0
    %4858 = vmatprep.mubr.bf16.mxu0 0
    %4859 = vmatmul.mubr.bf16.gmra.mxu0 %v4728
    %v4860 = vpop.f32.mrf.mxu0
    %v4861 = vadd.f32 0.0, %v4860
    %v4862 = vpop.f32.mrf.mxu0
    %v4863 = vadd.f32 0.0, %v4862
    %v4864 = vpop.f32.mrf.mxu0
    %v4865 = vpop.f32.mrf.mxu0
    %4866 = vdwg.mxu0
    %v4867 = vadd.f32 %v4681, %v4861
    %v4868 = vadd.f32 %v4682, %v4863
    %s4869 = scalar_lea.vmem %s16, 6
    %v4870 = vld [vmem:[%s4869] sm:$0x1]
    %v4872 = vsel %vm3755, %v4870, 0
    %4874 = vmatprep.subr.bf16.mxu0 0
    %4875 = vmatpush1.bf16.msra.mxu0 0
    %4876 = vmatprep.subr.bf16.mxu0 0
    %4877 = vmatpush1.bf16.msra.mxu0 0
    %4878 = vmatprep.subr.bf16.mxu0 0
    %4879 = vmatpush1.bf16.msra.mxu0 0
    %4880 = vmatprep.subr.bf16.mxu0 0
    %4881 = vmatpush1.bf16.msra.mxu0 0
    %4882 = vmatprep.subr.bf16.mxu0 0
    %4883 = vmatpush1.bf16.msra.mxu0 0
    %4884 = vmatprep.subr.bf16.mxu0 0
    %4885 = vmatpush1.bf16.msra.mxu0 0
    %4886 = vmatprep.subr.bf16.mxu0 0
    %4887 = vmatpush1.bf16.msra.mxu0 0
    %4888 = vmatprep.subr.bf16.mxu0 0
    %4889 = vmatpush1.bf16.msra.mxu0 %v3761
    %4890 = vmatprep.subr.bf16.mxu0 0
    %4891 = vmatpush2.bf16.msra.mxu0 0
    %4892 = vmatprep.subr.bf16.mxu0 0
    %4893 = vmatpush2.bf16.msra.mxu0 0
    %4894 = vmatprep.subr.bf16.mxu0 0
    %4895 = vmatpush2.bf16.msra.mxu0 0
    %4896 = vmatprep.subr.bf16.mxu0 0
    %4897 = vmatpush2.bf16.msra.mxu0 0
    %4898 = vmatprep.subr.bf16.mxu0 0
    %4899 = vmatpush2.bf16.msra.mxu0 0
    %4900 = vmatprep.subr.bf16.mxu0 0
    %4901 = vmatpush2.bf16.msra.mxu0 0
    %4902 = vmatprep.subr.bf16.mxu0 0
    %4903 = vmatpush2.bf16.msra.mxu0 0
    %4904 = vmatprep.subr.bf16.mxu0 0
    %4905 = vmatpush2.bf16.msra.mxu0 0
    %4906 = vmatprep.mubr.bf16.mxu0 0
    %4907 = vmatmul.mubr.bf16.gmra.mxu0 %v4872
    %v4908 = vpop.f32.mrf.mxu0
    %v4909 = vadd.f32 0.0, %v4908
    %v4910 = vpop.f32.mrf.mxu0
    %v4911 = vpop.f32.mrf.mxu0
    %v4912 = vpop.f32.mrf.mxu0
    %4913 = vdwg.mxu0
    %v4914 = vpack.c.bf16 %v4909, %v4909
    %s4915 = scalar_lea.vmem %s17, 768
    %v4916 = vld [vmem:[%s4915] sm:$0xff]
    %v4917 = vld [vmem:[%s4915 + $0x8] sm:$0xff]
    %v4918 = vld [vmem:[%s4915 + $0x10] sm:$0xff]
    %v4919 = vld [vmem:[%s4915 + $0x18] sm:$0xff]
    %v4920 = vld [vmem:[%s4915 + $0x20] sm:$0xff]
    %v4921 = vld [vmem:[%s4915 + $0x28] sm:$0xff]
    %v4922 = vld [vmem:[%s4915 + $0x30] sm:$0xff]
    %v4923 = vld [vmem:[%s4915 + $0x38] sm:$0xff]
    %v4924 = vld [vmem:[%s4915 + $0x40] sm:$0xff]
    %v4925 = vld [vmem:[%s4915 + $0x48] sm:$0xff]
    %v4926 = vld [vmem:[%s4915 + $0x50] sm:$0xff]
    %v4927 = vld [vmem:[%s4915 + $0x58] sm:$0xff]
    %v4928 = vld [vmem:[%s4915 + $0x60] sm:$0xff]
    %v4929 = vld [vmem:[%s4915 + $0x68] sm:$0xff]
    %v4930 = vld [vmem:[%s4915 + $0x70] sm:$0xff]
    %v4931 = vld [vmem:[%s4915 + $0x78] sm:$0xff]
    %v4948 = vunpack.c.l.b16 %v4916
    %v4949 = vunpack.c.h.b16 %v4916
    %v4950 = vunpack.c.l.b16 %v4917
    %v4951 = vunpack.c.h.b16 %v4917
    %v4952 = vunpack.c.l.b16 %v4918
    %v4953 = vunpack.c.h.b16 %v4918
    %v4954 = vunpack.c.l.b16 %v4919
    %v4955 = vunpack.c.h.b16 %v4919
    %v4956 = vunpack.c.l.b16 %v4920
    %v4957 = vunpack.c.h.b16 %v4920
    %v4958 = vunpack.c.l.b16 %v4921
    %v4959 = vunpack.c.h.b16 %v4921
    %v4960 = vunpack.c.l.b16 %v4922
    %v4961 = vunpack.c.h.b16 %v4922
    %v4962 = vunpack.c.l.b16 %v4923
    %v4963 = vunpack.c.h.b16 %v4923
    %v4964 = vunpack.c.l.b16 %v4924
    %v4965 = vunpack.c.h.b16 %v4924
    %v4966 = vunpack.c.l.b16 %v4925
    %v4967 = vunpack.c.h.b16 %v4925
    %v4968 = vunpack.c.l.b16 %v4926
    %v4969 = vunpack.c.h.b16 %v4926
    %v4970 = vunpack.c.l.b16 %v4927
    %v4971 = vunpack.c.h.b16 %v4927
    %v4972 = vunpack.c.l.b16 %v4928
    %v4973 = vunpack.c.h.b16 %v4928
    %v4974 = vunpack.c.l.b16 %v4929
    %v4975 = vunpack.c.h.b16 %v4929
    %v4976 = vunpack.c.l.b16 %v4930
    %v4977 = vunpack.c.h.b16 %v4930
    %v4978 = vunpack.c.l.b16 %v4931
    %v4979 = vunpack.c.h.b16 %v4931
    %v4980 = vpack.c.b16 %v4950, %v4948
    %v4981 = vpack.c.b16 %v4951, %v4949
    %v4982 = vpack.c.b16 %v4954, %v4952
    %v4983 = vpack.c.b16 %v4955, %v4953
    %v4984 = vpack.c.b16 %v4958, %v4956
    %v4985 = vpack.c.b16 %v4959, %v4957
    %v4986 = vpack.c.b16 %v4962, %v4960
    %v4987 = vpack.c.b16 %v4963, %v4961
    %v4988 = vpack.c.b16 %v4966, %v4964
    %v4989 = vpack.c.b16 %v4967, %v4965
    %v4990 = vpack.c.b16 %v4970, %v4968
    %v4991 = vpack.c.b16 %v4971, %v4969
    %v4992 = vpack.c.b16 %v4974, %v4972
    %v4993 = vpack.c.b16 %v4975, %v4973
    %v4994 = vpack.c.b16 %v4978, %v4976
    %v4995 = vpack.c.b16 %v4979, %v4977
    %5012 = vmatprep.subr.bf16.mxu0 %v4995
    %5013 = vmatpush1.bf16.msra.mxu0 %v4994
    %5014 = vmatprep.subr.bf16.mxu0 %v4993
    %5015 = vmatpush1.bf16.msra.mxu0 %v4992
    %5016 = vmatprep.subr.bf16.mxu0 %v4991
    %5017 = vmatpush1.bf16.msra.mxu0 %v4990
    %5018 = vmatprep.subr.bf16.mxu0 %v4989
    %5019 = vmatpush1.bf16.msra.mxu0 %v4988
    %5020 = vmatprep.subr.bf16.mxu0 %v4987
    %5021 = vmatpush1.bf16.msra.mxu0 %v4986
    %5022 = vmatprep.subr.bf16.mxu0 %v4985
    %5023 = vmatpush1.bf16.msra.mxu0 %v4984
    %5024 = vmatprep.subr.bf16.mxu0 %v4983
    %5025 = vmatpush1.bf16.msra.mxu0 %v4982
    %5026 = vmatprep.subr.bf16.mxu0 %v4981
    %5027 = vmatpush1.bf16.msra.mxu0 %v4980
    %5028 = vmatprep.subr.bf16.mxu0 0
    %5029 = vmatpush2.bf16.msra.mxu0 0
    %5030 = vmatprep.subr.bf16.mxu0 0
    %5031 = vmatpush2.bf16.msra.mxu0 0
    %5032 = vmatprep.subr.bf16.mxu0 0
    %5033 = vmatpush2.bf16.msra.mxu0 0
    %5034 = vmatprep.subr.bf16.mxu0 0
    %5035 = vmatpush2.bf16.msra.mxu0 0
    %5036 = vmatprep.subr.bf16.mxu0 0
    %5037 = vmatpush2.bf16.msra.mxu0 0
    %5038 = vmatprep.subr.bf16.mxu0 0
    %5039 = vmatpush2.bf16.msra.mxu0 0
    %5040 = vmatprep.subr.bf16.mxu0 0
    %5041 = vmatpush2.bf16.msra.mxu0 0
    %5042 = vmatprep.subr.bf16.mxu0 0
    %5043 = vmatpush2.bf16.msra.mxu0 0
    %5044 = vmatprep.mubr.bf16.mxu0 0
    %5045 = vmatmul.mubr.bf16.gmra.mxu0 %v4914
    %v5046 = vpop.f32.mrf.mxu0
    %v5047 = vadd.f32 0.0, %v5046
    %v5048 = vpop.f32.mrf.mxu0
    %v5049 = vadd.f32 0.0, %v5048
    %v5050 = vpop.f32.mrf.mxu0
    %v5051 = vpop.f32.mrf.mxu0
    %5052 = vdwg.mxu0
    %v5053 = vadd.f32 %v4867, %v5047
    %v5054 = vadd.f32 %v4868, %v5049
    %s5055 = scalar_lea.vmem %s16, 7
    %v5056 = vld [vmem:[%s5055] sm:$0x1]
    %v5058 = vsel %vm3755, %v5056, 0
    %5060 = vmatprep.subr.bf16.mxu0 0
    %5061 = vmatpush1.bf16.msra.mxu0 0
    %5062 = vmatprep.subr.bf16.mxu0 0
    %5063 = vmatpush1.bf16.msra.mxu0 0
    %5064 = vmatprep.subr.bf16.mxu0 0
    %5065 = vmatpush1.bf16.msra.mxu0 0
    %5066 = vmatprep.subr.bf16.mxu0 0
    %5067 = vmatpush1.bf16.msra.mxu0 0
    %5068 = vmatprep.subr.bf16.mxu0 0
    %5069 = vmatpush1.bf16.msra.mxu0 0
    %5070 = vmatprep.subr.bf16.mxu0 0
    %5071 = vmatpush1.bf16.msra.mxu0 0
    %5072 = vmatprep.subr.bf16.mxu0 0
    %5073 = vmatpush1.bf16.msra.mxu0 0
    %5074 = vmatprep.subr.bf16.mxu0 0
    %5075 = vmatpush1.bf16.msra.mxu0 %v3761
    %5076 = vmatprep.subr.bf16.mxu0 0
    %5077 = vmatpush2.bf16.msra.mxu0 0
    %5078 = vmatprep.subr.bf16.mxu0 0
    %5079 = vmatpush2.bf16.msra.mxu0 0
    %5080 = vmatprep.subr.bf16.mxu0 0
    %5081 = vmatpush2.bf16.msra.mxu0 0
    %5082 = vmatprep.subr.bf16.mxu0 0
    %5083 = vmatpush2.bf16.msra.mxu0 0
    %5084 = vmatprep.subr.bf16.mxu0 0
    %5085 = vmatpush2.bf16.msra.mxu0 0
    %5086 = vmatprep.subr.bf16.mxu0 0
    %5087 = vmatpush2.bf16.msra.mxu0 0
    %5088 = vmatprep.subr.bf16.mxu0 0
    %5089 = vmatpush2.bf16.msra.mxu0 0
    %5090 = vmatprep.subr.bf16.mxu0 0
    %5091 = vmatpush2.bf16.msra.mxu0 0
    %5092 = vmatprep.mubr.bf16.mxu0 0
    %5093 = vmatmul.mubr.bf16.gmra.mxu0 %v5058
    %v5094 = vpop.f32.mrf.mxu0
    %v5095 = vadd.f32 0.0, %v5094
    %v5096 = vpop.f32.mrf.mxu0
    %v5097 = vpop.f32.mrf.mxu0
    %v5098 = vpop.f32.mrf.mxu0
    %5099 = vdwg.mxu0
    %v5100 = vpack.c.bf16 %v5095, %v5095
    %s5101 = scalar_lea.vmem %s17, 896
    %v5102 = vld [vmem:[%s5101] sm:$0xff]
    %v5103 = vld [vmem:[%s5101 + $0x8] sm:$0xff]
    %v5104 = vld [vmem:[%s5101 + $0x10] sm:$0xff]
    %v5105 = vld [vmem:[%s5101 + $0x18] sm:$0xff]
    %v5106 = vld [vmem:[%s5101 + $0x20] sm:$0xff]
    %v5107 = vld [vmem:[%s5101 + $0x28] sm:$0xff]
    %v5108 = vld [vmem:[%s5101 + $0x30] sm:$0xff]
    %v5109 = vld [vmem:[%s5101 + $0x38] sm:$0xff]
    %v5110 = vld [vmem:[%s5101 + $0x40] sm:$0xff]
    %v5111 = vld [vmem:[%s5101 + $0x48] sm:$0xff]
    %v5112 = vld [vmem:[%s5101 + $0x50] sm:$0xff]
    %v5113 = vld [vmem:[%s5101 + $0x58] sm:$0xff]
    %v5114 = vld [vmem:[%s5101 + $0x60] sm:$0xff]
    %v5115 = vld [vmem:[%s5101 + $0x68] sm:$0xff]
    %v5116 = vld [vmem:[%s5101 + $0x70] sm:$0xff]
    %v5117 = vld [vmem:[%s5101 + $0x78] sm:$0xff]
    %v5134 = vunpack.c.l.b16 %v5102
    %v5135 = vunpack.c.h.b16 %v5102
    %v5136 = vunpack.c.l.b16 %v5103
    %v5137 = vunpack.c.h.b16 %v5103
    %v5138 = vunpack.c.l.b16 %v5104
    %v5139 = vunpack.c.h.b16 %v5104
    %v5140 = vunpack.c.l.b16 %v5105
    %v5141 = vunpack.c.h.b16 %v5105
    %v5142 = vunpack.c.l.b16 %v5106
    %v5143 = vunpack.c.h.b16 %v5106
    %v5144 = vunpack.c.l.b16 %v5107
    %v5145 = vunpack.c.h.b16 %v5107
    %v5146 = vunpack.c.l.b16 %v5108
    %v5147 = vunpack.c.h.b16 %v5108
    %v5148 = vunpack.c.l.b16 %v5109
    %v5149 = vunpack.c.h.b16 %v5109
    %v5150 = vunpack.c.l.b16 %v5110
    %v5151 = vunpack.c.h.b16 %v5110
    %v5152 = vunpack.c.l.b16 %v5111
    %v5153 = vunpack.c.h.b16 %v5111
    %v5154 = vunpack.c.l.b16 %v5112
    %v5155 = vunpack.c.h.b16 %v5112
    %v5156 = vunpack.c.l.b16 %v5113
    %v5157 = vunpack.c.h.b16 %v5113
    %v5158 = vunpack.c.l.b16 %v5114
    %v5159 = vunpack.c.h.b16 %v5114
    %v5160 = vunpack.c.l.b16 %v5115
    %v5161 = vunpack.c.h.b16 %v5115
    %v5162 = vunpack.c.l.b16 %v5116
    %v5163 = vunpack.c.h.b16 %v5116
    %v5164 = vunpack.c.l.b16 %v5117
    %v5165 = vunpack.c.h.b16 %v5117
    %v5166 = vpack.c.b16 %v5136, %v5134
    %v5167 = vpack.c.b16 %v5137, %v5135
    %v5168 = vpack.c.b16 %v5140, %v5138
    %v5169 = vpack.c.b16 %v5141, %v5139
    %v5170 = vpack.c.b16 %v5144, %v5142
    %v5171 = vpack.c.b16 %v5145, %v5143
    %v5172 = vpack.c.b16 %v5148, %v5146
    %v5173 = vpack.c.b16 %v5149, %v5147
    %v5174 = vpack.c.b16 %v5152, %v5150
    %v5175 = vpack.c.b16 %v5153, %v5151
    %v5176 = vpack.c.b16 %v5156, %v5154
    %v5177 = vpack.c.b16 %v5157, %v5155
    %v5178 = vpack.c.b16 %v5160, %v5158
    %v5179 = vpack.c.b16 %v5161, %v5159
    %v5180 = vpack.c.b16 %v5164, %v5162
    %v5181 = vpack.c.b16 %v5165, %v5163
    %5198 = vmatprep.subr.bf16.mxu0 %v5181
    %5199 = vmatpush1.bf16.msra.mxu0 %v5180
    %5200 = vmatprep.subr.bf16.mxu0 %v5179
    %5201 = vmatpush1.bf16.msra.mxu0 %v5178
    %5202 = vmatprep.subr.bf16.mxu0 %v5177
    %5203 = vmatpush1.bf16.msra.mxu0 %v5176
    %5204 = vmatprep.subr.bf16.mxu0 %v5175
    %5205 = vmatpush1.bf16.msra.mxu0 %v5174
    %5206 = vmatprep.subr.bf16.mxu0 %v5173
    %5207 = vmatpush1.bf16.msra.mxu0 %v5172
    %5208 = vmatprep.subr.bf16.mxu0 %v5171
    %5209 = vmatpush1.bf16.msra.mxu0 %v5170
    %5210 = vmatprep.subr.bf16.mxu0 %v5169
    %5211 = vmatpush1.bf16.msra.mxu0 %v5168
    %5212 = vmatprep.subr.bf16.mxu0 %v5167
    %5213 = vmatpush1.bf16.msra.mxu0 %v5166
    %5214 = vmatprep.subr.bf16.mxu0 0
    %5215 = vmatpush2.bf16.msra.mxu0 0
    %5216 = vmatprep.subr.bf16.mxu0 0
    %5217 = vmatpush2.bf16.msra.mxu0 0
    %5218 = vmatprep.subr.bf16.mxu0 0
    %5219 = vmatpush2.bf16.msra.mxu0 0
    %5220 = vmatprep.subr.bf16.mxu0 0
    %5221 = vmatpush2.bf16.msra.mxu0 0
    %5222 = vmatprep.subr.bf16.mxu0 0
    %5223 = vmatpush2.bf16.msra.mxu0 0
    %5224 = vmatprep.subr.bf16.mxu0 0
    %5225 = vmatpush2.bf16.msra.mxu0 0
    %5226 = vmatprep.subr.bf16.mxu0 0
    %5227 = vmatpush2.bf16.msra.mxu0 0
    %5228 = vmatprep.subr.bf16.mxu0 0
    %5229 = vmatpush2.bf16.msra.mxu0 0
    %5230 = vmatprep.mubr.bf16.mxu0 0
    %5231 = vmatmul.mubr.bf16.gmra.mxu0 %v5100
    %v5232 = vpop.f32.mrf.mxu0
    %v5233 = vadd.f32 0.0, %v5232
    %v5234 = vpop.f32.mrf.mxu0
    %v5235 = vadd.f32 0.0, %v5234
    %v5236 = vpop.f32.mrf.mxu0
    %v5237 = vpop.f32.mrf.mxu0
    %5238 = vdwg.mxu0
    %v5239 = vadd.f32 %v5053, %v5233
    %v5240 = vadd.f32 %v5054, %v5235
    %s5241 = scalar_lea.vmem %s16, 8
    %v5242 = vld [vmem:[%s5241] sm:$0x1]
    %v5244 = vsel %vm3755, %v5242, 0
    %5246 = vmatprep.subr.bf16.mxu0 0
    %5247 = vmatpush1.bf16.msra.mxu0 0
    %5248 = vmatprep.subr.bf16.mxu0 0
    %5249 = vmatpush1.bf16.msra.mxu0 0
    %5250 = vmatprep.subr.bf16.mxu0 0
    %5251 = vmatpush1.bf16.msra.mxu0 0
    %5252 = vmatprep.subr.bf16.mxu0 0
    %5253 = vmatpush1.bf16.msra.mxu0 0
    %5254 = vmatprep.subr.bf16.mxu0 0
    %5255 = vmatpush1.bf16.msra.mxu0 0
    %5256 = vmatprep.subr.bf16.mxu0 0
    %5257 = vmatpush1.bf16.msra.mxu0 0
    %5258 = vmatprep.subr.bf16.mxu0 0
    %5259 = vmatpush1.bf16.msra.mxu0 0
    %5260 = vmatprep.subr.bf16.mxu0 0
    %5261 = vmatpush1.bf16.msra.mxu0 %v3761
    %5262 = vmatprep.subr.bf16.mxu0 0
    %5263 = vmatpush2.bf16.msra.mxu0 0
    %5264 = vmatprep.subr.bf16.mxu0 0
    %5265 = vmatpush2.bf16.msra.mxu0 0
    %5266 = vmatprep.subr.bf16.mxu0 0
    %5267 = vmatpush2.bf16.msra.mxu0 0
    %5268 = vmatprep.subr.bf16.mxu0 0
    %5269 = vmatpush2.bf16.msra.mxu0 0
    %5270 = vmatprep.subr.bf16.mxu0 0
    %5271 = vmatpush2.bf16.msra.mxu0 0
    %5272 = vmatprep.subr.bf16.mxu0 0
    %5273 = vmatpush2.bf16.msra.mxu0 0
    %5274 = vmatprep.subr.bf16.mxu0 0
    %5275 = vmatpush2.bf16.msra.mxu0 0
    %5276 = vmatprep.subr.bf16.mxu0 0
    %5277 = vmatpush2.bf16.msra.mxu0 0
    %5278 = vmatprep.mubr.bf16.mxu0 0
    %5279 = vmatmul.mubr.bf16.gmra.mxu0 %v5244
    %v5280 = vpop.f32.mrf.mxu0
    %v5281 = vadd.f32 0.0, %v5280
    %v5282 = vpop.f32.mrf.mxu0
    %v5283 = vpop.f32.mrf.mxu0
    %v5284 = vpop.f32.mrf.mxu0
    %5285 = vdwg.mxu0
    %v5286 = vpack.c.bf16 %v5281, %v5281
    %s5287 = scalar_lea.vmem %s17, 1024
    %v5288 = vld [vmem:[%s5287] sm:$0xff]
    %v5289 = vld [vmem:[%s5287 + $0x8] sm:$0xff]
    %v5290 = vld [vmem:[%s5287 + $0x10] sm:$0xff]
    %v5291 = vld [vmem:[%s5287 + $0x18] sm:$0xff]
    %v5292 = vld [vmem:[%s5287 + $0x20] sm:$0xff]
    %v5293 = vld [vmem:[%s5287 + $0x28] sm:$0xff]
    %v5294 = vld [vmem:[%s5287 + $0x30] sm:$0xff]
    %v5295 = vld [vmem:[%s5287 + $0x38] sm:$0xff]
    %v5296 = vld [vmem:[%s5287 + $0x40] sm:$0xff]
    %v5297 = vld [vmem:[%s5287 + $0x48] sm:$0xff]
    %v5298 = vld [vmem:[%s5287 + $0x50] sm:$0xff]
    %v5299 = vld [vmem:[%s5287 + $0x58] sm:$0xff]
    %v5300 = vld [vmem:[%s5287 + $0x60] sm:$0xff]
    %v5301 = vld [vmem:[%s5287 + $0x68] sm:$0xff]
    %v5302 = vld [vmem:[%s5287 + $0x70] sm:$0xff]
    %v5303 = vld [vmem:[%s5287 + $0x78] sm:$0xff]
    %v5320 = vunpack.c.l.b16 %v5288
    %v5321 = vunpack.c.h.b16 %v5288
    %v5322 = vunpack.c.l.b16 %v5289
    %v5323 = vunpack.c.h.b16 %v5289
    %v5324 = vunpack.c.l.b16 %v5290
    %v5325 = vunpack.c.h.b16 %v5290
    %v5326 = vunpack.c.l.b16 %v5291
    %v5327 = vunpack.c.h.b16 %v5291
    %v5328 = vunpack.c.l.b16 %v5292
    %v5329 = vunpack.c.h.b16 %v5292
    %v5330 = vunpack.c.l.b16 %v5293
    %v5331 = vunpack.c.h.b16 %v5293
    %v5332 = vunpack.c.l.b16 %v5294
    %v5333 = vunpack.c.h.b16 %v5294
    %v5334 = vunpack.c.l.b16 %v5295
    %v5335 = vunpack.c.h.b16 %v5295
    %v5336 = vunpack.c.l.b16 %v5296
    %v5337 = vunpack.c.h.b16 %v5296
    %v5338 = vunpack.c.l.b16 %v5297
    %v5339 = vunpack.c.h.b16 %v5297
    %v5340 = vunpack.c.l.b16 %v5298
    %v5341 = vunpack.c.h.b16 %v5298
    %v5342 = vunpack.c.l.b16 %v5299
    %v5343 = vunpack.c.h.b16 %v5299
    %v5344 = vunpack.c.l.b16 %v5300
    %v5345 = vunpack.c.h.b16 %v5300
    %v5346 = vunpack.c.l.b16 %v5301
    %v5347 = vunpack.c.h.b16 %v5301
    %v5348 = vunpack.c.l.b16 %v5302
    %v5349 = vunpack.c.h.b16 %v5302
    %v5350 = vunpack.c.l.b16 %v5303
    %v5351 = vunpack.c.h.b16 %v5303
    %v5352 = vpack.c.b16 %v5322, %v5320
    %v5353 = vpack.c.b16 %v5323, %v5321
    %v5354 = vpack.c.b16 %v5326, %v5324
    %v5355 = vpack.c.b16 %v5327, %v5325
    %v5356 = vpack.c.b16 %v5330, %v5328
    %v5357 = vpack.c.b16 %v5331, %v5329
    %v5358 = vpack.c.b16 %v5334, %v5332
    %v5359 = vpack.c.b16 %v5335, %v5333
    %v5360 = vpack.c.b16 %v5338, %v5336
    %v5361 = vpack.c.b16 %v5339, %v5337
    %v5362 = vpack.c.b16 %v5342, %v5340
    %v5363 = vpack.c.b16 %v5343, %v5341
    %v5364 = vpack.c.b16 %v5346, %v5344
    %v5365 = vpack.c.b16 %v5347, %v5345
    %v5366 = vpack.c.b16 %v5350, %v5348
    %v5367 = vpack.c.b16 %v5351, %v5349
    %5384 = vmatprep.subr.bf16.mxu0 %v5367
    %5385 = vmatpush1.bf16.msra.mxu0 %v5366
    %5386 = vmatprep.subr.bf16.mxu0 %v5365
    %5387 = vmatpush1.bf16.msra.mxu0 %v5364
    %5388 = vmatprep.subr.bf16.mxu0 %v5363
    %5389 = vmatpush1.bf16.msra.mxu0 %v5362
    %5390 = vmatprep.subr.bf16.mxu0 %v5361
    %5391 = vmatpush1.bf16.msra.mxu0 %v5360
    %5392 = vmatprep.subr.bf16.mxu0 %v5359
    %5393 = vmatpush1.bf16.msra.mxu0 %v5358
    %5394 = vmatprep.subr.bf16.mxu0 %v5357
    %5395 = vmatpush1.bf16.msra.mxu0 %v5356
    %5396 = vmatprep.subr.bf16.mxu0 %v5355
    %5397 = vmatpush1.bf16.msra.mxu0 %v5354
    %5398 = vmatprep.subr.bf16.mxu0 %v5353
    %5399 = vmatpush1.bf16.msra.mxu0 %v5352
    %5400 = vmatprep.subr.bf16.mxu0 0
    %5401 = vmatpush2.bf16.msra.mxu0 0
    %5402 = vmatprep.subr.bf16.mxu0 0
    %5403 = vmatpush2.bf16.msra.mxu0 0
    %5404 = vmatprep.subr.bf16.mxu0 0
    %5405 = vmatpush2.bf16.msra.mxu0 0
    %5406 = vmatprep.subr.bf16.mxu0 0
    %5407 = vmatpush2.bf16.msra.mxu0 0
    %5408 = vmatprep.subr.bf16.mxu0 0
    %5409 = vmatpush2.bf16.msra.mxu0 0
    %5410 = vmatprep.subr.bf16.mxu0 0
    %5411 = vmatpush2.bf16.msra.mxu0 0
    %5412 = vmatprep.subr.bf16.mxu0 0
    %5413 = vmatpush2.bf16.msra.mxu0 0
    %5414 = vmatprep.subr.bf16.mxu0 0
    %5415 = vmatpush2.bf16.msra.mxu0 0
    %5416 = vmatprep.mubr.bf16.mxu0 0
    %5417 = vmatmul.mubr.bf16.gmra.mxu0 %v5286
    %v5418 = vpop.f32.mrf.mxu0
    %v5419 = vadd.f32 0.0, %v5418
    %v5420 = vpop.f32.mrf.mxu0
    %v5421 = vadd.f32 0.0, %v5420
    %v5422 = vpop.f32.mrf.mxu0
    %v5423 = vpop.f32.mrf.mxu0
    %5424 = vdwg.mxu0
    %v5425 = vadd.f32 %v5239, %v5419
    %v5426 = vadd.f32 %v5240, %v5421
    %v5427 = vld [vmem:[%s18] sm:$0x3]
    %v5429 = vlaneseq
    %v5430 = vshrl.u32 %v5429, 7
    %v5431 = vsub.s32 0, %v5430
    %v5432 = vrot.slane %v5427, %v5431
    %v5433 = vlaneseq
    %v5434 = vshrl.u32 %v5433, 7
    %v5435 = vsub.s32 1, %v5434
    %v5436 = vrot.slane %v5427, %v5435
    %v5439 = vadd.f32 %v5425, %v5432
    %v5440 = vadd.f32 %v5426, %v5436
    %vm5441 = vcmp.gt.f32.partialorder %v5439, 0.0
    %vm5442 = vcmp.gt.f32.partialorder %v5440, 0.0
    %v5443 = vmul.f32 %v5439, 0.2
    %v5444 = vmul.f32 %v5440, 0.2
    %v5445 = vsel %vm5441, %v5439, %v5443
    %v5446 = vsel %vm5442, %v5440, %v5444
    %v5447 = vld [vmem:[%s19] sm:$0x3]
    %v5449 = vlaneseq
    %v5450 = vshrl.u32 %v5449, 7
    %v5451 = vsub.s32 0, %v5450
    %v5452 = vrot.slane %v5447, %v5451
    %v5453 = vlaneseq
    %v5454 = vshrl.u32 %v5453, 7
    %v5455 = vsub.s32 1, %v5454
    %v5456 = vrot.slane %v5447, %v5455
    %v5459 = vmul.f32 %v5445, %v5452
    %v5460 = vmul.f32 %v5446, %v5456
    %v5461 = vld [vmem:[%s20] sm:$0x3]
    %v5463 = vlaneseq
    %v5464 = vshrl.u32 %v5463, 7
    %v5465 = vsub.s32 0, %v5464
    %v5466 = vrot.slane %v5461, %v5465
    %v5467 = vlaneseq
    %v5468 = vshrl.u32 %v5467, 7
    %v5469 = vsub.s32 1, %v5468
    %v5470 = vrot.slane %v5461, %v5469
    %v5473 = vadd.f32 %v5459, %v5466
    %v5474 = vadd.f32 %v5460, %v5470
    %v5475 = vld [vmem:[%s21] sm:$0x3]
    %v5477 = vlaneseq
    %v5478 = vshrl.u32 %v5477, 7
    %v5479 = vsub.s32 0, %v5478
    %v5480 = vrot.slane %v5475, %v5479
    %v5481 = vlaneseq
    %v5482 = vshrl.u32 %v5481, 7
    %v5483 = vsub.s32 1, %v5482
    %v5484 = vrot.slane %v5475, %v5483
    %v5487 = vmul.f32 %v5473, %v5480
    %v5488 = vmul.f32 %v5474, %v5484
    %v5489 = vadd.f32 %v5487, 0.0
    %v5490 = vadd.f32 %v5488, 0.0
    %v5491 = vld [vmem:[%s23] sm:$0xff]
    %v5492 = vld [vmem:[%s23 + $0x8] sm:$0xff]
    %v5493 = vld [vmem:[%s23 + $0x10] sm:$0xff]
    %v5494 = vld [vmem:[%s23 + $0x18] sm:$0xff]
    %v5495 = vld [vmem:[%s23 + $0x20] sm:$0xff]
    %v5496 = vld [vmem:[%s23 + $0x28] sm:$0xff]
    %v5497 = vld [vmem:[%s23 + $0x30] sm:$0xff]
    %v5498 = vld [vmem:[%s23 + $0x38] sm:$0xff]
    %v5499 = vld [vmem:[%s23 + $0x40] sm:$0xff]
    %v5500 = vld [vmem:[%s23 + $0x48] sm:$0xff]
    %v5501 = vld [vmem:[%s23 + $0x50] sm:$0xff]
    %v5502 = vld [vmem:[%s23 + $0x58] sm:$0xff]
    %v5503 = vld [vmem:[%s23 + $0x60] sm:$0xff]
    %v5504 = vld [vmem:[%s23 + $0x68] sm:$0xff]
    %v5505 = vld [vmem:[%s23 + $0x70] sm:$0xff]
    %v5506 = vld [vmem:[%s23 + $0x78] sm:$0xff]
    %v5507 = vld [vmem:[%s23 + $0x80] sm:$0xff]
    %v5508 = vld [vmem:[%s23 + $0x88] sm:$0xff]
    %v5509 = vld [vmem:[%s23 + $0x90] sm:$0xff]
    %v5510 = vld [vmem:[%s23 + $0x98] sm:$0xff]
    %v5511 = vld [vmem:[%s23 + $0xa0] sm:$0xff]
    %v5512 = vld [vmem:[%s23 + $0xa8] sm:$0xff]
    %v5513 = vld [vmem:[%s23 + $0xb0] sm:$0xff]
    %v5514 = vld [vmem:[%s23 + $0xb8] sm:$0xff]
    %v5515 = vld [vmem:[%s23 + $0xc0] sm:$0xff]
    %v5516 = vld [vmem:[%s23 + $0xc8] sm:$0xff]
    %v5517 = vld [vmem:[%s23 + $0xd0] sm:$0xff]
    %v5518 = vld [vmem:[%s23 + $0xd8] sm:$0xff]
    %v5519 = vld [vmem:[%s23 + $0xe0] sm:$0xff]
    %v5520 = vld [vmem:[%s23 + $0xe8] sm:$0xff]
    %v5521 = vld [vmem:[%s23 + $0xf0] sm:$0xff]
    %v5522 = vld [vmem:[%s23 + $0xf8] sm:$0xff]
    %v5523 = vld [vmem:[#allocation2] sm:$0x1]
    %5525 = vset.pattern.permute.xlu0 0
    %5526 = vperm.xlu0 %5525, %v5523
    %v5527 = vpop.permute.xlu0 %5526
    %v5529 = vlaneseq
    %v5530 = vshrl.u32 %v5529, 7
    %v5531 = vsub.s32 0, %v5530
    %v5532 = vrot.slane %v5527, %v5531
    %5533 = vmatprep.subr.mxu0 0.0
    %5534 = vmatpush1.msra.mxu0 %v5506
    %5535 = vmatprep.subr.mxu0 0.0
    %5536 = vmatpush1.msra.mxu0 %v5505
    %5537 = vmatprep.subr.mxu0 0.0
    %5538 = vmatpush1.msra.mxu0 %v5504
    %5539 = vmatprep.subr.mxu0 0.0
    %5540 = vmatpush1.msra.mxu0 %v5503
    %5541 = vmatprep.subr.mxu0 0.0
    %5542 = vmatpush1.msra.mxu0 %v5502
    %5543 = vmatprep.subr.mxu0 0.0
    %5544 = vmatpush1.msra.mxu0 %v5501
    %5545 = vmatprep.subr.mxu0 0.0
    %5546 = vmatpush1.msra.mxu0 %v5500
    %5547 = vmatprep.subr.mxu0 0.0
    %5548 = vmatpush1.msra.mxu0 %v5499
    %5549 = vmatprep.subr.mxu0 0.0
    %5550 = vmatpush1.msra.mxu0 %v5498
    %5551 = vmatprep.subr.mxu0 0.0
    %5552 = vmatpush1.msra.mxu0 %v5497
    %5553 = vmatprep.subr.mxu0 0.0
    %5554 = vmatpush1.msra.mxu0 %v5496
    %5555 = vmatprep.subr.mxu0 0.0
    %5556 = vmatpush1.msra.mxu0 %v5495
    %5557 = vmatprep.subr.mxu0 0.0
    %5558 = vmatpush1.msra.mxu0 %v5494
    %5559 = vmatprep.subr.mxu0 0.0
    %5560 = vmatpush1.msra.mxu0 %v5493
    %5561 = vmatprep.subr.mxu0 0.0
    %5562 = vmatpush1.msra.mxu0 %v5492
    %5563 = vmatprep.subr.mxu0 0.0
    %5564 = vmatpush1.msra.mxu0 %v5491
    %5565 = vmatprep.subr.mxu0 0.0
    %5566 = vmatpush2.msra.mxu0 %v5522
    %5567 = vmatprep.subr.mxu0 0.0
    %5568 = vmatpush2.msra.mxu0 %v5521
    %5569 = vmatprep.subr.mxu0 0.0
    %5570 = vmatpush2.msra.mxu0 %v5520
    %5571 = vmatprep.subr.mxu0 0.0
    %5572 = vmatpush2.msra.mxu0 %v5519
    %5573 = vmatprep.subr.mxu0 0.0
    %5574 = vmatpush2.msra.mxu0 %v5518
    %5575 = vmatprep.subr.mxu0 0.0
    %5576 = vmatpush2.msra.mxu0 %v5517
    %5577 = vmatprep.subr.mxu0 0.0
    %5578 = vmatpush2.msra.mxu0 %v5516
    %5579 = vmatprep.subr.mxu0 0.0
    %5580 = vmatpush2.msra.mxu0 %v5515
    %5581 = vmatprep.subr.mxu0 0.0
    %5582 = vmatpush2.msra.mxu0 %v5514
    %5583 = vmatprep.subr.mxu0 0.0
    %5584 = vmatpush2.msra.mxu0 %v5513
    %5585 = vmatprep.subr.mxu0 0.0
    %5586 = vmatpush2.msra.mxu0 %v5512
    %5587 = vmatprep.subr.mxu0 0.0
    %5588 = vmatpush2.msra.mxu0 %v5511
    %5589 = vmatprep.subr.mxu0 0.0
    %5590 = vmatpush2.msra.mxu0 %v5510
    %5591 = vmatprep.subr.mxu0 0.0
    %5592 = vmatpush2.msra.mxu0 %v5509
    %5593 = vmatprep.subr.mxu0 0.0
    %5594 = vmatpush2.msra.mxu0 %v5508
    %5595 = vmatprep.subr.mxu0 0.0
    %5596 = vmatpush2.msra.mxu0 %v5507
    %5597 = vmatprep.mubr.f32.mxu0 %v5490
    %5598 = vmatmul.mubr.f32.gmra.mxu0 %v5489
    %v5599 = vpop.f32.mrf.mxu0
    %v5600 = vadd.f32 %v5532, %v5599
    %v5601 = vpop.f32.mrf.mxu0
    %5602 = vdwg.mxu0
    %v5603 = vxor.u32 %v5600, 2147483648
    %v5604 = vmul.f32 %v5603, 1.442695
    %v5605 = vpow.pop %v5604
    %v5606 = vadd.f32 %v5605, 1.0
    %v5607 = vrcp.pop %v5606
    %v5608 = vmul.f32 1.0, %v5607
    %vm5609 = vcmask 8192
    %5610 = vst.msk [vmem:[#allocation3] sm:$0x1] %vm5609, %v5608
    // Predicated region
    $region98: #{discriminator_forward.1} parent=1 // pred_check
      _
    $region99: #{discriminator_forward.1} parent=1 // pred_check_branch
      %5612 = sbr.rel (0) target = $region101
    $region100: #{discriminator_forward.1} parent=1 // pred_region
      %s5614 = ssub.s32 16, 16
      %5615 = vsyncadd [#allocation4], %s5614
      %s5617 = sshll.u32 [#allocation3], 4
      %s5618 = int_to_ptr.vmem [resolvable:$true] %s5617
      %5620 = dma.vmem_to_hbm [thread:$0]  %s5618, 16, %s24, [#allocation4]
    $region101: #{discriminator_forward.1} parent=1 // pred_fallthru
      _
    // Predicated region
    $region102: #{discriminator_forward.1} parent=1 // pred_check
      _
    $region103: #{discriminator_forward.1} parent=1 // pred_check_branch
      %5622 = sbr.rel (0) target = $region105
    $region104: #{discriminator_forward.1} parent=1 // pred_region
      %5623 = dma.done [#allocation4], 16
    $region105: #{discriminator_forward.1} parent=1 // pred_fallthru
      _
    %5624 = vsyncpa [#allocation4], 1

</llo_original>
